<compile_context>
chip_gen: v6e
topology: v6e:2x2x1
jax: 0.10.0
libtpu: 0.0.40
codegen_flags: <defaults>
</compile_context>

<pallas_src>
import numpy as np
import jax
import jax.numpy as jnp
from jax.experimental import pallas as pl
from jax.experimental.pallas import tpu as pltpu


def _round_up(x, m):
    return (x + m - 1) // m * m


def _make_fused_kernel(TH, Wp, WIN, M1, M2):
    """Fused (conv3x3+ReLU) x 2 kernel for one batch element x one row tile."""

    def kernel(x_ref, w1_ref, b1_ref, w2_ref, b2_ref, mask_ref, o_ref, y1_ref):
        # x_ref   : (1, FH, Kin)     flattened, zero-padded input image (bf16)
        # w1_ref  : (9, Kin, Kc1)    conv1 taps, index = dy*3 + dx      (bf16)
        # b1_ref  : (1, Kc1)         conv1 bias                         (f32)
        # w2_ref  : (9, Kc1, Kc2)    conv2 taps                         (bf16)
        # b2_ref  : (1, Kc2)         conv2 bias                         (f32)
        # mask_ref: (1, M1, 1)       0/1 validity of the conv1 buffer   (f32)
        # o_ref   : (1, 1, M2, Kc2)  flattened output row tile          (f32)
        # y1_ref  : (M1 + 8, Kc1)    VMEM scratch: conv2's zero-padded input (bf16)
        t = pl.program_id(1)
        Kc1 = y1_ref.shape[-1]
        Kc2 = o_ref.shape[-1]

        # ---- conv1 + bias + ReLU into VMEM scratch --------------------------
        # One aligned dynamic load of this tile's input window; the 9 taps are
        # contiguous static sublane-offset slices of it (im2col-free, no
        # strided 3-D slices or per-tap reshapes).
        base = pl.multiple_of(t * (TH * Wp), 8)
        win = x_ref[0, pl.ds(base, WIN), :]

        acc1 = jnp.zeros((M1, Kc1), jnp.float32)
        for k in range(9):
            dy, dx = divmod(k, 3)
            off = dy * Wp + dx
            acc1 = acc1 + jnp.dot(win[off:off + M1, :], w1_ref[k],
                                  preferred_element_type=jnp.float32)
        y1 = jnp.maximum(acc1 + b1_ref[...], 0.0)          # f32 epilogue
        # Zero wrap-around columns / out-of-image halo rows so the scratch is
        # exactly conv2's zero-padded input tile.
        y1 = y1 * mask_ref[0]
        y1_ref[pl.ds(0, M1), :] = y1.astype(y1_ref.dtype)
        y1_ref[pl.ds(M1, 8), :] = jnp.zeros((8, Kc1), y1_ref.dtype)

        # ---- conv2 + bias + ReLU straight from VMEM (no HBM round trip) -----
        y1_all = y1_ref[...]
        acc2 = jnp.zeros((M2, Kc2), jnp.float32)
        for k in range(9):
            dy, dx = divmod(k, 3)
            off = dy * Wp + dx
            acc2 = acc2 + jnp.dot(y1_all[off:off + M2, :], w2_ref[k],
                                  preferred_element_type=jnp.float32)
        out = jnp.maximum(acc2 + b2_ref[...], 0.0)
        o_ref[0, 0, :, :] = out.astype(o_ref.dtype)

    return kernel


def double_conv(x_nchw, params, *, row_tile=8, compute_dtype=jnp.bfloat16):
    """Equivalent of DoubleConv.forward: (N, Cin, H, W) -> (N, Cout, H, W)."""
    w1, b1, w2, b2 = params
    N, Cin, H, W = x_nchw.shape
    C1 = w1.shape[-1]
    C2 = w2.shape[-1]

    # Lane-dense channel padding (multiple of 128).
    Kin = _round_up(Cin, 128)
    Kc1 = _round_up(C1, 128)
    Kc2 = _round_up(C2, 128)

    TH = row_tile if H % row_tile == 0 else H   # output rows per grid step
    T = H // TH
    Wp = _round_up(W + 3, 8)                    # flattened row pitch (>= W+3)
    M1 = (TH + 2) * Wp                          # conv1 rows per tile (+ halo)
    M2 = TH * Wp                                # output rows per tile
    WIN = (TH + 4) * Wp + 8                     # input rows loaded per tile
    FH = (H + 5) * Wp                           # flattened padded image length

    # ---- wrapper-side layout prep: ONE pad, NCHW -> flattened padded NHWC ---
    x = jnp.transpose(x_nchw, (0, 2, 3, 1)).astype(compute_dtype)      # NHWC
    # rows: 2 zeros above, 3 below; cols: 2 left, Wp-W-2 right; channels->Kin.
    x = jnp.pad(x, ((0, 0), (2, 3), (2, Wp - W - 2), (0, Kin - Cin)))
    x = x.reshape(N, FH, Kin)

    # Weights in (tap, Cin, Cout) layout, zero padded, bf16; biases f32.
    w1_k = jnp.pad(w1.reshape(9, Cin, C1),
                   ((0, 0), (0, Kin - Cin), (0, Kc1 - C1))).astype(compute_dtype)
    w2_k = jnp.pad(w2.reshape(9, C1, C2),
                   ((0, 0), (0, Kc1 - C1), (0, Kc2 - C2))).astype(compute_dtype)
    b1_k = jnp.pad(b1, (0, Kc1 - C1)).reshape(1, Kc1).astype(jnp.float32)
    b2_k = jnp.pad(b2, (0, Kc2 - C2)).reshape(1, Kc2).astype(jnp.float32)

    # Validity mask of the conv1 tile buffer. Flat index g = u*Wp + v maps to
    # conv1 row (t*TH - 1 + u) and col (v - 1). Columns outside [1, W] are
    # flat wrap-around garbage; row u==0 (u==TH+1) is conv2's zero padding and
    # must be zeroed only for the top (bottom) tile of the image.
    u = np.arange(M1) // Wp
    v = np.arange(M1) % Wp
    col_ok = (v >= 1) & (v <= W)
    mask = np.empty((T, M1, 1), np.float32)
    for ti in range(T):
        ok = col_ok.copy()
        if ti == 0:
            ok &= u != 0
        if ti == T - 1:
            ok &= u != TH + 1
        mask[ti, :, 0] = ok.astype(np.float32)
    mask = jnp.asarray(mask)

    kernel = _make_fused_kernel(TH, Wp, WIN, M1, M2)

    flops = 2 * 9 * N * T * (M1 * Kin * Kc1 + M2 * Kc1 * Kc2)
    bytes_accessed = (2 * (N * FH * Kin + 9 * Kin * Kc1 + 9 * Kc1 * Kc2)
                      + 4 * N * T * M2 * Kc2)

    out_flat = pl.pallas_call(
        kernel,
        out_shape=jax.ShapeDtypeStruct((N, T, M2, Kc2), jnp.float32),
        grid_spec=pltpu.PrefetchScalarGridSpec(
            num_scalar_prefetch=0,
            grid=(N, T),
            in_specs=[
                pl.BlockSpec((1, FH, Kin), lambda n, t: (n, 0, 0)),     # image (resident over t)
                pl.BlockSpec((9, Kin, Kc1), lambda n, t: (0, 0, 0)),    # conv1 weights
                pl.BlockSpec((1, Kc1), lambda n, t: (0, 0)),            # conv1 bias
                pl.BlockSpec((9, Kc1, Kc2), lambda n, t: (0, 0, 0)),    # conv2 weights
                pl.BlockSpec((1, Kc2), lambda n, t: (0, 0)),            # conv2 bias
                pl.BlockSpec((1, M1, 1), lambda n, t: (t, 0, 0)),       # per-tile mask
            ],
            out_specs=pl.BlockSpec((1, 1, M2, Kc2), lambda n, t: (n, t, 0, 0)),
            scratch_shapes=[pltpu.VMEM((M1 + 8, Kc1), compute_dtype)],
        ),
        compiler_params=pltpu.CompilerParams(
            dimension_semantics=("parallel", "parallel"),
            vmem_limit_bytes=32 * 1024 * 1024,
        ),
        cost_estimate=pl.CostEstimate(flops=flops, transcendentals=0,
                                      bytes_accessed=bytes_accessed),
    )(x, w1_k, b1_k, w2_k, b2_k, mask)

    # Drop wrap-around columns and padded channels, restore NCHW.
    y = out_flat.reshape(N, T, TH, Wp, Kc2)[:, :, :, :W, :C2]
    y = y.reshape(N, H, W, C2)
    return jnp.transpose(y, (0, 3, 1, 2))


def init_params(key, in_channels, out_channels, dtype=jnp.float32):
    """Deterministic synthetic init (fan-in scaled normals); shapes match nn.Conv2d."""
    k1, k2, k3, k4 = jax.random.split(key, 4)
    fan1 = in_channels * 9
    fan2 = out_channels * 9
    # Stored directly in HWIO layout used by the kernel: (3, 3, Cin, Cout).
    w1 = jax.random.normal(k1, (3, 3, in_channels, out_channels), dtype) / jnp.sqrt(fan1)
    b1 = jax.random.normal(k2, (out_channels,), dtype) * 0.01
    w2 = jax.random.normal(k3, (3, 3, out_channels, out_channels), dtype) / jnp.sqrt(fan2)
    b2 = jax.random.normal(k4, (out_channels,), dtype) * 0.01
    return (w1, b1, w2, b2)


def double_conv_reference(x_nchw, params):
    """Pure-JAX reference (lax.conv) for correctness checking."""
    w1, b1, w2, b2 = params

    def conv(x, w, b):
        y = jax.lax.conv_general_dilated(
            x, w, window_strides=(1, 1), padding="SAME",
            dimension_numbers=("NCHW", "HWIO", "NCHW"),
        )
        return jnp.maximum(y + b.reshape(1, -1, 1, 1), 0.0)

    return conv(conv(x_nchw, w1, b1), w2, b2)


if __name__ == "__main__":
    key = jax.random.PRNGKey(0)
    kx, kp = jax.random.split(key)

    N, Cin, Cout, H, W = 2, 4, 8, 16, 16
    x = jax.random.normal(kx, (N, Cin, H, W), jnp.float32)
    params = init_params(kp, Cin, Cout)

    out = jax.block_until_ready(jax.jit(double_conv)(x, params))
    ref = jax.block_until_ready(double_conv_reference(x, params))

    assert out.shape == (N, Cout, H, W)
    err = float(jnp.max(jnp.abs(out - ref)))
    # bf16 matmul inputs with f32 accumulation: tolerance loosened vs pure f32.
    assert err < 5e-2, f"max abs error {err}"

    print("KERNEL_OK")
</pallas_src>

<mosaic_0001>
module attributes {stable_mosaic.version = 11 : i64} {
  func.func @kernel(%arg0: i32, %arg1: i32, %arg2: memref<1x504x128xbf16, #tpu.memory_space<vmem>>, %arg3: memref<9x128x128xbf16, #tpu.memory_space<vmem>>, %arg4: memref<1x128xf32, #tpu.memory_space<vmem>>, %arg5: memref<9x128x128xbf16, #tpu.memory_space<vmem>>, %arg6: memref<1x128xf32, #tpu.memory_space<vmem>>, %arg7: memref<1x240x1xf32, #tpu.memory_space<vmem>>, %arg8: memref<1x1x192x128xf32, #tpu.memory_space<vmem>>, %arg9: memref<248x128xbf16, #tpu.memory_space<vmem>>) attributes {dimension_semantics = [#tpu.dimension_semantics<parallel>, #tpu.dimension_semantics<parallel>], iteration_bounds = array<i64: 2, 2>, scalar_prefetch = 0 : i64, scratch_operands = 1 : i64, tpu.core_type = #tpu.core_type<tc>, window_params = [{transform_indices = @transform_0, window_bounds = array<i64: 1, 504, 128>}, {pipeline_mode = #tpu.pipeline_mode<synchronous>, transform_indices = @transform_1, window_bounds = array<i64: 9, 128, 128>}, {pipeline_mode = #tpu.pipeline_mode<synchronous>, transform_indices = @transform_2, window_bounds = array<i64: 1, 128>}, {pipeline_mode = #tpu.pipeline_mode<synchronous>, transform_indices = @transform_3, window_bounds = array<i64: 9, 128, 128>}, {pipeline_mode = #tpu.pipeline_mode<synchronous>, transform_indices = @transform_4, window_bounds = array<i64: 1, 128>}, {transform_indices = @transform_5, window_bounds = array<i64: 1, 240, 1>}, {transform_indices = @transform_6, window_bounds = array<i64: 1, 1, 192, 128>}]} {
    %c192_i32 = arith.constant 192 : i32
    %0 = arith.muli %arg1, %c192_i32 : i32
    %1 = tpu.assume_multiple %0, 8 : i32
    %c0 = arith.constant 0 : index
    %2 = arith.index_cast %1 : i32 to index
    %c0_0 = arith.constant 0 : index
    %3 = vector.load %arg2[%c0, %2, %c0_0] : memref<1x504x128xbf16, #tpu.memory_space<vmem>>, vector<1x296x128xbf16>
    %4 = vector.shape_cast %3 : vector<1x296x128xbf16> to vector<296x128xbf16>
    %cst = arith.constant 0.000000e+00 : f32
    %5 = vector.broadcast %cst : f32 to vector<240x128xf32>
    %6 = vector.extract_strided_slice %4 {offsets = [0, 0], sizes = [240, 128], strides = [1, 1]} : vector<296x128xbf16> to vector<240x128xbf16>
    %c0_1 = arith.constant 0 : index
    %c0_2 = arith.constant 0 : index
    %c0_3 = arith.constant 0 : index
    %7 = vector.load %arg3[%c0_1, %c0_2, %c0_3] : memref<9x128x128xbf16, #tpu.memory_space<vmem>>, vector<1x128x128xbf16>
    %8 = vector.shape_cast %7 : vector<1x128x128xbf16> to vector<128x128xbf16>
    %cst_4 = arith.constant dense<0.000000e+00> : vector<240x128xf32>
    %9 = tpu.matmul %6, %8, %cst_4 {dimension_numbers = #tpu.dot_dimension_numbers<[1], [0], [0], [1], [0, 0, 1, 1], [], []>} : vector<240x128xbf16>, vector<128x128xbf16>, vector<240x128xf32> -> vector<240x128xf32>
    %10 = arith.addf %5, %9 : vector<240x128xf32>
    %11 = vector.extract_strided_slice %4 {offsets = [1, 0], sizes = [240, 128], strides = [1, 1]} : vector<296x128xbf16> to vector<240x128xbf16>
    %c1 = arith.constant 1 : index
    %c0_5 = arith.constant 0 : index
    %c0_6 = arith.constant 0 : index
    %12 = vector.load %arg3[%c1, %c0_5, %c0_6] : memref<9x128x128xbf16, #tpu.memory_space<vmem>>, vector<1x128x128xbf16>
    %13 = vector.shape_cast %12 : vector<1x128x128xbf16> to vector<128x128xbf16>
    %cst_7 = arith.constant dense<0.000000e+00> : vector<240x128xf32>
    %14 = tpu.matmul %11, %13, %cst_7 {dimension_numbers = #tpu.dot_dimension_numbers<[1], [0], [0], [1], [0, 0, 1, 1], [], []>} : vector<240x128xbf16>, vector<128x128xbf16>, vector<240x128xf32> -> vector<240x128xf32>
    %15 = arith.addf %10, %14 : vector<240x128xf32>
    %16 = vector.extract_strided_slice %4 {offsets = [2, 0], sizes = [240, 128], strides = [1, 1]} : vector<296x128xbf16> to vector<240x128xbf16>
    %c2 = arith.constant 2 : index
    %c0_8 = arith.constant 0 : index
    %c0_9 = arith.constant 0 : index
    %17 = vector.load %arg3[%c2, %c0_8, %c0_9] : memref<9x128x128xbf16, #tpu.memory_space<vmem>>, vector<1x128x128xbf16>
    %18 = vector.shape_cast %17 : vector<1x128x128xbf16> to vector<128x128xbf16>
    %cst_10 = arith.constant dense<0.000000e+00> : vector<240x128xf32>
    %19 = tpu.matmul %16, %18, %cst_10 {dimension_numbers = #tpu.dot_dimension_numbers<[1], [0], [0], [1], [0, 0, 1, 1], [], []>} : vector<240x128xbf16>, vector<128x128xbf16>, vector<240x128xf32> -> vector<240x128xf32>
    %20 = arith.addf %15, %19 : vector<240x128xf32>
    %21 = vector.extract_strided_slice %4 {offsets = [24, 0], sizes = [240, 128], strides = [1, 1]} : vector<296x128xbf16> to vector<240x128xbf16>
    %c3 = arith.constant 3 : index
    %c0_11 = arith.constant 0 : index
    %c0_12 = arith.constant 0 : index
    %22 = vector.load %arg3[%c3, %c0_11, %c0_12] : memref<9x128x128xbf16, #tpu.memory_space<vmem>>, vector<1x128x128xbf16>
    %23 = vector.shape_cast %22 : vector<1x128x128xbf16> to vector<128x128xbf16>
    %cst_13 = arith.constant dense<0.000000e+00> : vector<240x128xf32>
    %24 = tpu.matmul %21, %23, %cst_13 {dimension_numbers = #tpu.dot_dimension_numbers<[1], [0], [0], [1], [0, 0, 1, 1], [], []>} : vector<240x128xbf16>, vector<128x128xbf16>, vector<240x128xf32> -> vector<240x128xf32>
    %25 = arith.addf %20, %24 : vector<240x128xf32>
    %26 = vector.extract_strided_slice %4 {offsets = [25, 0], sizes = [240, 128], strides = [1, 1]} : vector<296x128xbf16> to vector<240x128xbf16>
    %c4 = arith.constant 4 : index
    %c0_14 = arith.constant 0 : index
    %c0_15 = arith.constant 0 : index
    %27 = vector.load %arg3[%c4, %c0_14, %c0_15] : memref<9x128x128xbf16, #tpu.memory_space<vmem>>, vector<1x128x128xbf16>
    %28 = vector.shape_cast %27 : vector<1x128x128xbf16> to vector<128x128xbf16>
    %cst_16 = arith.constant dense<0.000000e+00> : vector<240x128xf32>
    %29 = tpu.matmul %26, %28, %cst_16 {dimension_numbers = #tpu.dot_dimension_numbers<[1], [0], [0], [1], [0, 0, 1, 1], [], []>} : vector<240x128xbf16>, vector<128x128xbf16>, vector<240x128xf32> -> vector<240x128xf32>
    %30 = arith.addf %25, %29 : vector<240x128xf32>
    %31 = vector.extract_strided_slice %4 {offsets = [26, 0], sizes = [240, 128], strides = [1, 1]} : vector<296x128xbf16> to vector<240x128xbf16>
    %c5 = arith.constant 5 : index
    %c0_17 = arith.constant 0 : index
    %c0_18 = arith.constant 0 : index
    %32 = vector.load %arg3[%c5, %c0_17, %c0_18] : memref<9x128x128xbf16, #tpu.memory_space<vmem>>, vector<1x128x128xbf16>
    %33 = vector.shape_cast %32 : vector<1x128x128xbf16> to vector<128x128xbf16>
    %cst_19 = arith.constant dense<0.000000e+00> : vector<240x128xf32>
    %34 = tpu.matmul %31, %33, %cst_19 {dimension_numbers = #tpu.dot_dimension_numbers<[1], [0], [0], [1], [0, 0, 1, 1], [], []>} : vector<240x128xbf16>, vector<128x128xbf16>, vector<240x128xf32> -> vector<240x128xf32>
    %35 = arith.addf %30, %34 : vector<240x128xf32>
    %36 = vector.extract_strided_slice %4 {offsets = [48, 0], sizes = [240, 128], strides = [1, 1]} : vector<296x128xbf16> to vector<240x128xbf16>
    %c6 = arith.constant 6 : index
    %c0_20 = arith.constant 0 : index
    %c0_21 = arith.constant 0 : index
    %37 = vector.load %arg3[%c6, %c0_20, %c0_21] : memref<9x128x128xbf16, #tpu.memory_space<vmem>>, vector<1x128x128xbf16>
    %38 = vector.shape_cast %37 : vector<1x128x128xbf16> to vector<128x128xbf16>
    %cst_22 = arith.constant dense<0.000000e+00> : vector<240x128xf32>
    %39 = tpu.matmul %36, %38, %cst_22 {dimension_numbers = #tpu.dot_dimension_numbers<[1], [0], [0], [1], [0, 0, 1, 1], [], []>} : vector<240x128xbf16>, vector<128x128xbf16>, vector<240x128xf32> -> vector<240x128xf32>
    %40 = arith.addf %35, %39 : vector<240x128xf32>
    %41 = vector.extract_strided_slice %4 {offsets = [49, 0], sizes = [240, 128], strides = [1, 1]} : vector<296x128xbf16> to vector<240x128xbf16>
    %c7 = arith.constant 7 : index
    %c0_23 = arith.constant 0 : index
    %c0_24 = arith.constant 0 : index
    %42 = vector.load %arg3[%c7, %c0_23, %c0_24] : memref<9x128x128xbf16, #tpu.memory_space<vmem>>, vector<1x128x128xbf16>
    %43 = vector.shape_cast %42 : vector<1x128x128xbf16> to vector<128x128xbf16>
    %cst_25 = arith.constant dense<0.000000e+00> : vector<240x128xf32>
    %44 = tpu.matmul %41, %43, %cst_25 {dimension_numbers = #tpu.dot_dimension_numbers<[1], [0], [0], [1], [0, 0, 1, 1], [], []>} : vector<240x128xbf16>, vector<128x128xbf16>, vector<240x128xf32> -> vector<240x128xf32>
    %45 = arith.addf %40, %44 : vector<240x128xf32>
    %46 = vector.extract_strided_slice %4 {offsets = [50, 0], sizes = [240, 128], strides = [1, 1]} : vector<296x128xbf16> to vector<240x128xbf16>
    %c8 = arith.constant 8 : index
    %c0_26 = arith.constant 0 : index
    %c0_27 = arith.constant 0 : index
    %47 = vector.load %arg3[%c8, %c0_26, %c0_27] : memref<9x128x128xbf16, #tpu.memory_space<vmem>>, vector<1x128x128xbf16>
    %48 = vector.shape_cast %47 : vector<1x128x128xbf16> to vector<128x128xbf16>
    %cst_28 = arith.constant dense<0.000000e+00> : vector<240x128xf32>
    %49 = tpu.matmul %46, %48, %cst_28 {dimension_numbers = #tpu.dot_dimension_numbers<[1], [0], [0], [1], [0, 0, 1, 1], [], []>} : vector<240x128xbf16>, vector<128x128xbf16>, vector<240x128xf32> -> vector<240x128xf32>
    %50 = arith.addf %45, %49 : vector<240x128xf32>
    %c0_29 = arith.constant 0 : index
    %c0_30 = arith.constant 0 : index
    %51 = vector.load %arg4[%c0_29, %c0_30] : memref<1x128xf32, #tpu.memory_space<vmem>>, vector<1x128xf32>
    %52 = vector.broadcast %51 : vector<1x128xf32> to vector<240x128xf32>
    %53 = arith.addf %50, %52 : vector<240x128xf32>
    %cst_31 = arith.constant 0.000000e+00 : f32
    %54 = vector.broadcast %cst_31 : f32 to vector<240x128xf32>
    %55 = arith.maximumf %53, %54 : vector<240x128xf32>
    %c0_32 = arith.constant 0 : index
    %c0_33 = arith.constant 0 : index
    %c0_34 = arith.constant 0 : index
    %56 = vector.load %arg7[%c0_32, %c0_33, %c0_34] : memref<1x240x1xf32, #tpu.memory_space<vmem>>, vector<1x240x1xf32>
    %57 = vector.shape_cast %56 : vector<1x240x1xf32> to vector<240x1xf32>
    %58 = vector.broadcast %57 : vector<240x1xf32> to vector<240x128xf32>
    %59 = arith.mulf %55, %58 : vector<240x128xf32>
    %60 = arith.truncf %59 : vector<240x128xf32> to vector<240x128xbf16>
    %c0_35 = arith.constant 0 : index
    %c0_36 = arith.constant 0 : index
    %61 = vector.load %arg9[%c0_35, %c0_36] : memref<248x128xbf16, #tpu.memory_space<vmem>>, vector<240x128xbf16>
    tpu.vector_store %arg9[%c0_35, %c0_36], %60 {strides = array<i32>} : memref<248x128xbf16, #tpu.memory_space<vmem>>, vector<240x128xbf16>,
    %cst_37 = arith.constant 0.000000e+00 : bf16
    %62 = vector.broadcast %cst_37 : bf16 to vector<8x128xbf16>
    %c240 = arith.constant 240 : index
    %c0_38 = arith.constant 0 : index
    %63 = vector.load %arg9[%c240, %c0_38] : memref<248x128xbf16, #tpu.memory_space<vmem>>, vector<8x128xbf16>
    tpu.vector_store %arg9[%c240, %c0_38], %62 {strides = array<i32>} : memref<248x128xbf16, #tpu.memory_space<vmem>>, vector<8x128xbf16>,
    %c0_39 = arith.constant 0 : index
    %c0_40 = arith.constant 0 : index
    %64 = vector.load %arg9[%c0_39, %c0_40] : memref<248x128xbf16, #tpu.memory_space<vmem>>, vector<248x128xbf16>
    %cst_41 = arith.constant 0.000000e+00 : f32
    %65 = vector.broadcast %cst_41 : f32 to vector<192x128xf32>
    %66 = vector.extract_strided_slice %64 {offsets = [0, 0], sizes = [192, 128], strides = [1, 1]} : vector<248x128xbf16> to vector<192x128xbf16>
    %c0_42 = arith.constant 0 : index
    %c0_43 = arith.constant 0 : index
    %c0_44 = arith.constant 0 : index
    %67 = vector.load %arg5[%c0_42, %c0_43, %c0_44] : memref<9x128x128xbf16, #tpu.memory_space<vmem>>, vector<1x128x128xbf16>
    %68 = vector.shape_cast %67 : vector<1x128x128xbf16> to vector<128x128xbf16>
    %cst_45 = arith.constant dense<0.000000e+00> : vector<192x128xf32>
    %69 = tpu.matmul %66, %68, %cst_45 {dimension_numbers = #tpu.dot_dimension_numbers<[1], [0], [0], [1], [0, 0, 1, 1], [], []>} : vector<192x128xbf16>, vector<128x128xbf16>, vector<192x128xf32> -> vector<192x128xf32>
    %70 = arith.addf %65, %69 : vector<192x128xf32>
    %71 = vector.extract_strided_slice %64 {offsets = [1, 0], sizes = [192, 128], strides = [1, 1]} : vector<248x128xbf16> to vector<192x128xbf16>
    %c1_46 = arith.constant 1 : index
    %c0_47 = arith.constant 0 : index
    %c0_48 = arith.constant 0 : index
    %72 = vector.load %arg5[%c1_46, %c0_47, %c0_48] : memref<9x128x128xbf16, #tpu.memory_space<vmem>>, vector<1x128x128xbf16>
    %73 = vector.shape_cast %72 : vector<1x128x128xbf16> to vector<128x128xbf16>
    %cst_49 = arith.constant dense<0.000000e+00> : vector<192x128xf32>
    %74 = tpu.matmul %71, %73, %cst_49 {dimension_numbers = #tpu.dot_dimension_numbers<[1], [0], [0], [1], [0, 0, 1, 1], [], []>} : vector<192x128xbf16>, vector<128x128xbf16>, vector<192x128xf32> -> vector<192x128xf32>
    %75 = arith.addf %70, %74 : vector<192x128xf32>
    %76 = vector.extract_strided_slice %64 {offsets = [2, 0], sizes = [192, 128], strides = [1, 1]} : vector<248x128xbf16> to vector<192x128xbf16>
    %c2_50 = arith.constant 2 : index
    %c0_51 = arith.constant 0 : index
    %c0_52 = arith.constant 0 : index
    %77 = vector.load %arg5[%c2_50, %c0_51, %c0_52] : memref<9x128x128xbf16, #tpu.memory_space<vmem>>, vector<1x128x128xbf16>
    %78 = vector.shape_cast %77 : vector<1x128x128xbf16> to vector<128x128xbf16>
    %cst_53 = arith.constant dense<0.000000e+00> : vector<192x128xf32>
    %79 = tpu.matmul %76, %78, %cst_53 {dimension_numbers = #tpu.dot_dimension_numbers<[1], [0], [0], [1], [0, 0, 1, 1], [], []>} : vector<192x128xbf16>, vector<128x128xbf16>, vector<192x128xf32> -> vector<192x128xf32>
    %80 = arith.addf %75, %79 : vector<192x128xf32>
    %81 = vector.extract_strided_slice %64 {offsets = [24, 0], sizes = [192, 128], strides = [1, 1]} : vector<248x128xbf16> to vector<192x128xbf16>
    %c3_54 = arith.constant 3 : index
    %c0_55 = arith.constant 0 : index
    %c0_56 = arith.constant 0 : index
    %82 = vector.load %arg5[%c3_54, %c0_55, %c0_56] : memref<9x128x128xbf16, #tpu.memory_space<vmem>>, vector<1x128x128xbf16>
    %83 = vector.shape_cast %82 : vector<1x128x128xbf16> to vector<128x128xbf16>
    %cst_57 = arith.constant dense<0.000000e+00> : vector<192x128xf32>
    %84 = tpu.matmul %81, %83, %cst_57 {dimension_numbers = #tpu.dot_dimension_numbers<[1], [0], [0], [1], [0, 0, 1, 1], [], []>} : vector<192x128xbf16>, vector<128x128xbf16>, vector<192x128xf32> -> vector<192x128xf32>
    %85 = arith.addf %80, %84 : vector<192x128xf32>
    %86 = vector.extract_strided_slice %64 {offsets = [25, 0], sizes = [192, 128], strides = [1, 1]} : vector<248x128xbf16> to vector<192x128xbf16>
    %c4_58 = arith.constant 4 : index
    %c0_59 = arith.constant 0 : index
    %c0_60 = arith.constant 0 : index
    %87 = vector.load %arg5[%c4_58, %c0_59, %c0_60] : memref<9x128x128xbf16, #tpu.memory_space<vmem>>, vector<1x128x128xbf16>
    %88 = vector.shape_cast %87 : vector<1x128x128xbf16> to vector<128x128xbf16>
    %cst_61 = arith.constant dense<0.000000e+00> : vector<192x128xf32>
    %89 = tpu.matmul %86, %88, %cst_61 {dimension_numbers = #tpu.dot_dimension_numbers<[1], [0], [0], [1], [0, 0, 1, 1], [], []>} : vector<192x128xbf16>, vector<128x128xbf16>, vector<192x128xf32> -> vector<192x128xf32>
    %90 = arith.addf %85, %89 : vector<192x128xf32>
    %91 = vector.extract_strided_slice %64 {offsets = [26, 0], sizes = [192, 128], strides = [1, 1]} : vector<248x128xbf16> to vector<192x128xbf16>
    %c5_62 = arith.constant 5 : index
    %c0_63 = arith.constant 0 : index
    %c0_64 = arith.constant 0 : index
    %92 = vector.load %arg5[%c5_62, %c0_63, %c0_64] : memref<9x128x128xbf16, #tpu.memory_space<vmem>>, vector<1x128x128xbf16>
    %93 = vector.shape_cast %92 : vector<1x128x128xbf16> to vector<128x128xbf16>
    %cst_65 = arith.constant dense<0.000000e+00> : vector<192x128xf32>
    %94 = tpu.matmul %91, %93, %cst_65 {dimension_numbers = #tpu.dot_dimension_numbers<[1], [0], [0], [1], [0, 0, 1, 1], [], []>} : vector<192x128xbf16>, vector<128x128xbf16>, vector<192x128xf32> -> vector<192x128xf32>
    %95 = arith.addf %90, %94 : vector<192x128xf32>
    %96 = vector.extract_strided_slice %64 {offsets = [48, 0], sizes = [192, 128], strides = [1, 1]} : vector<248x128xbf16> to vector<192x128xbf16>
    %c6_66 = arith.constant 6 : index
    %c0_67 = arith.constant 0 : index
    %c0_68 = arith.constant 0 : index
    %97 = vector.load %arg5[%c6_66, %c0_67, %c0_68] : memref<9x128x128xbf16, #tpu.memory_space<vmem>>, vector<1x128x128xbf16>
    %98 = vector.shape_cast %97 : vector<1x128x128xbf16> to vector<128x128xbf16>
    %cst_69 = arith.constant dense<0.000000e+00> : vector<192x128xf32>
    %99 = tpu.matmul %96, %98, %cst_69 {dimension_numbers = #tpu.dot_dimension_numbers<[1], [0], [0], [1], [0, 0, 1, 1], [], []>} : vector<192x128xbf16>, vector<128x128xbf16>, vector<192x128xf32> -> vector<192x128xf32>
    %100 = arith.addf %95, %99 : vector<192x128xf32>
    %101 = vector.extract_strided_slice %64 {offsets = [49, 0], sizes = [192, 128], strides = [1, 1]} : vector<248x128xbf16> to vector<192x128xbf16>
    %c7_70 = arith.constant 7 : index
    %c0_71 = arith.constant 0 : index
    %c0_72 = arith.constant 0 : index
    %102 = vector.load %arg5[%c7_70, %c0_71, %c0_72] : memref<9x128x128xbf16, #tpu.memory_space<vmem>>, vector<1x128x128xbf16>
    %103 = vector.shape_cast %102 : vector<1x128x128xbf16> to vector<128x128xbf16>
    %cst_73 = arith.constant dense<0.000000e+00> : vector<192x128xf32>
    %104 = tpu.matmul %101, %103, %cst_73 {dimension_numbers = #tpu.dot_dimension_numbers<[1], [0], [0], [1], [0, 0, 1, 1], [], []>} : vector<192x128xbf16>, vector<128x128xbf16>, vector<192x128xf32> -> vector<192x128xf32>
    %105 = arith.addf %100, %104 : vector<192x128xf32>
    %106 = vector.extract_strided_slice %64 {offsets = [50, 0], sizes = [192, 128], strides = [1, 1]} : vector<248x128xbf16> to vector<192x128xbf16>
    %c8_74 = arith.constant 8 : index
    %c0_75 = arith.constant 0 : index
    %c0_76 = arith.constant 0 : index
    %107 = vector.load %arg5[%c8_74, %c0_75, %c0_76] : memref<9x128x128xbf16, #tpu.memory_space<vmem>>, vector<1x128x128xbf16>
    %108 = vector.shape_cast %107 : vector<1x128x128xbf16> to vector<128x128xbf16>
    %cst_77 = arith.constant dense<0.000000e+00> : vector<192x128xf32>
    %109 = tpu.matmul %106, %108, %cst_77 {dimension_numbers = #tpu.dot_dimension_numbers<[1], [0], [0], [1], [0, 0, 1, 1], [], []>} : vector<192x128xbf16>, vector<128x128xbf16>, vector<192x128xf32> -> vector<192x128xf32>
    %110 = arith.addf %105, %109 : vector<192x128xf32>
    %c0_78 = arith.constant 0 : index
    %c0_79 = arith.constant 0 : index
    %111 = vector.load %arg6[%c0_78, %c0_79] : memref<1x128xf32, #tpu.memory_space<vmem>>, vector<1x128xf32>
    %112 = vector.broadcast %111 : vector<1x128xf32> to vector<192x128xf32>
    %113 = arith.addf %110, %112 : vector<192x128xf32>
    %cst_80 = arith.constant 0.000000e+00 : f32
    %114 = vector.broadcast %cst_80 : f32 to vector<192x128xf32>
    %115 = arith.maximumf %113, %114 : vector<192x128xf32>
    %c0_81 = arith.constant 0 : index
    %c0_82 = arith.constant 0 : index
    %c0_83 = arith.constant 0 : index
    %c0_84 = arith.constant 0 : index
    %116 = vector.load %arg8[%c0_81, %c0_82, %c0_83, %c0_84] : memref<1x1x192x128xf32, #tpu.memory_space<vmem>>, vector<1x1x192x128xf32>
    %117 = vector.shape_cast %116 : vector<1x1x192x128xf32> to vector<192x128xf32>
    %118 = vector.shape_cast %115 : vector<192x128xf32> to vector<1x1x192x128xf32>
    tpu.vector_store %arg8[%c0_81, %c0_82, %c0_83, %c0_84], %118 {strides = array<i32>} : memref<1x1x192x128xf32, #tpu.memory_space<vmem>>, vector<1x1x192x128xf32>,
    return
  }
  func.func @transform_0(%arg0: i32, %arg1: i32) -> (i32, i32, i32) {
    %c0_i32 = arith.constant 0 : i32
    %c0_i32_0 = arith.constant 0 : i32
    %c0_i32_1 = arith.constant 0 : i32
    return %arg0, %c0_i32, %c0_i32_0 : i32, i32, i32
  }
  func.func @transform_1(%arg0: i32, %arg1: i32) -> (i32, i32, i32) {
    %c0_i32 = arith.constant 0 : i32
    %c0_i32_0 = arith.constant 0 : i32
    %c0_i32_1 = arith.constant 0 : i32
    %c0_i32_2 = arith.constant 0 : i32
    return %c0_i32, %c0_i32_0, %c0_i32_1 : i32, i32, i32
  }
  func.func @transform_2(%arg0: i32, %arg1: i32) -> (i32, i32) {
    %c0_i32 = arith.constant 0 : i32
    %c0_i32_0 = arith.constant 0 : i32
    %c0_i32_1 = arith.constant 0 : i32
    return %c0_i32, %c0_i32_0 : i32, i32
  }
  func.func @transform_3(%arg0: i32, %arg1: i32) -> (i32, i32, i32) {
    %c0_i32 = arith.constant 0 : i32
    %c0_i32_0 = arith.constant 0 : i32
    %c0_i32_1 = arith.constant 0 : i32
    %c0_i32_2 = arith.constant 0 : i32
    return %c0_i32, %c0_i32_0, %c0_i32_1 : i32, i32, i32
  }
  func.func @transform_4(%arg0: i32, %arg1: i32) -> (i32, i32) {
    %c0_i32 = arith.constant 0 : i32
    %c0_i32_0 = arith.constant 0 : i32
    %c0_i32_1 = arith.constant 0 : i32
    return %c0_i32, %c0_i32_0 : i32, i32
  }
  func.func @transform_5(%arg0: i32, %arg1: i32) -> (i32, i32, i32) {
    %c0_i32 = arith.constant 0 : i32
    %c0_i32_0 = arith.constant 0 : i32
    %c0_i32_1 = arith.constant 0 : i32
    return %arg1, %c0_i32, %c0_i32_0 : i32, i32, i32
  }
  func.func @transform_6(%arg0: i32, %arg1: i32) -> (i32, i32, i32, i32) {
    %c0_i32 = arith.constant 0 : i32
    %c0_i32_0 = arith.constant 0 : i32
    %c0_i32_1 = arith.constant 0 : i32
    return %arg0, %arg1, %c0_i32, %c0_i32_0 : i32, i32, i32, i32
  }
}

</mosaic_0001>

<llo_original>
// kernel: double_conv.1
$region0: #{double_conv.1}
  #allocation0 [shape = 'u32[]', space=smem, size = 0x4, offset = 0x4, fixed_abs, tag = 'smem constant byte address 0x4 - core index']
  #allocation1 [shape = 'u32[144,128]{1,0:T(1,128)}', space=vmem, size = 0x12000, scoped, tag = 'internal scratch']
  #allocation2 [shape = 'bf16[248,128]{1,0:T(8,128)(2,1)}', space=vmem, size = 0xf800, scoped, tag = 'scratch operand']
  %s0 = inlined_call_operand.vmem [shape: bf16[2,504,128], index: 0, kind: input, shape index: {}]
  %s1 = inlined_call_operand.vmem [shape: bf16[9,128,128], index: 1, kind: input, shape index: {}]
  %s2 = inlined_call_operand.vmem [shape: f32[1,128], index: 2, kind: input, shape index: {}]
  %s3 = inlined_call_operand.vmem [shape: bf16[9,128,128], index: 3, kind: input, shape index: {}]
  %s4 = inlined_call_operand.vmem [shape: f32[1,128], index: 4, kind: input, shape index: {}]
  %s5 = inlined_call_operand.vmem [shape: f32[2,240,1], index: 5, kind: input, shape index: {}]
  %s6 = inlined_call_operand.vmem [shape: f32[2,2,192,128], index: 6, kind: output, shape index: {}]
  %s7 = sld [smem:[#allocation0]]
  $region57: #{double_conv.1} parent=0
    _
  %s9 = ssub.s32 1, %s7
  %s10 = scalar_select 0, %s9, %s7
  loop: start=0, step=1, limit=6
  $region2: #{double_conv.1} parent=0 // loop_pre_header
    _
  $region3: #{double_conv.1} parent=0 // loop_header
    %s12 = sphi 0, %s16
    %p13 = scmp.ge.s32.totalorder %s12, 6
    %s19 = sphi 0, %s31
    %s20 = sphi 0, %s27
    %s21 = sphi 0, %s19
    %s22 = sphi 0, %s20
    %s23 = sphi 0, %s21
    %s24 = sphi 0, %s22
    %s34 = sphi 0, %s36
    %s37 = sphi 0, %s34
    %s38 = sphi 0, %s37
    %s54 = sphi 0, %s38
    %s58 = sphi 0, %s58
    %s60 = sphi 0, %s58
    %s61 = sphi 0, %s60
    %s75 = sphi 0, %s61
    %s79 = sphi 0, %s79
    %s81 = sphi 0, %s79
    %s82 = sphi 0, %s81
    %s96 = sphi 0, %s82
    %s100 = sphi 0, %s100
    %s102 = sphi 0, %s100
    %s103 = sphi 0, %s102
    %s117 = sphi 0, %s103
    %s121 = sphi 0, %s121
    %s123 = sphi 0, %s121
    %s124 = sphi 0, %s123
    %s138 = sphi 0, %s124
    %s144 = sphi 0, %s146
    %s147 = sphi 0, %s144
    %s148 = sphi 0, %s147
    %s164 = sphi 0, %s148
    %s172 = sphi 0, %s174
    %s175 = sphi 0, %s172
    %s176 = sphi 0, %s175
    %s192 = sphi 0, %s176
  $region4: #{double_conv.1} parent=0 // loop_header_branch
    %15 = sbr.rel (%p13) target = $region8
  $region5: #{double_conv.1} parent=0 // loop_body
    %s17 = ssub.s32 %s12, 1
    %s18 = ssub.s32 %s12, 2
    %s25 = sadd.s32 1, %s20
    %p26 = scmp.ge.s32.totalorder %s25, 2
    %s27 = scalar_select %p26, 0, %s25
    %s28 = sadd.s32 1, %s19
    %s29 = scalar_select %p26, %s28, %s19
    %p30 = scmp.ge.s32.totalorder %s29, 2
    %s31 = scalar_select %p30, 0, %s29
    %s32 = ssub.s32 %s19, %s31
    %p33 = scmp.eq.s32.totalorder %s32, 0
    %s35 = sadd.s32 %s34, 1
    %s36 = scalar_select %p33, %s34, %s35
    %p39 = pneg %p33
    %p40 = scmp.eq.s32.totalorder %s12, 3
    %p41 = por %p39, %p40
    %p42 = scmp.ne.s32.totalorder %s34, %s37
    %p43 = scmp.eq.s32.totalorder %s12, 0
    %p44 = por %p42, %p43
    %p45 = scmp.ne.s32.totalorder %s34, %s37
    %p46 = scmp.eq.s32.totalorder %s17, 3
    %p47 = por %p45, %p46
    %p48 = scmp.ne.s32.totalorder %s37, %s38
    %p49 = scmp.eq.s32.totalorder %s17, 0
    %p50 = por %p48, %p49
    %p51 = scmp.ne.s32.totalorder %s37, %s38
    %p52 = scmp.eq.s32.totalorder %s18, 3
    %p53 = por %p51, %p52
    %p55 = scmp.ne.s32.totalorder %s38, %s54
    %p56 = scmp.eq.s32.totalorder %s18, 0
    %p57 = por %p55, %p56
    %s59 = sadd.s32 %s58, 1
    %p62 = scmp.eq.s32.totalorder %s12, 3
    %p63 = scmp.ne.s32.totalorder %s58, %s60
    %p64 = scmp.eq.s32.totalorder %s12, 0
    %p65 = por %p63, %p64
    %p66 = scmp.ne.s32.totalorder %s58, %s60
    %p67 = scmp.eq.s32.totalorder %s17, 3
    %p68 = por %p66, %p67
    %p69 = scmp.ne.s32.totalorder %s60, %s61
    %p70 = scmp.eq.s32.totalorder %s17, 0
    %p71 = por %p69, %p70
    %p72 = scmp.ne.s32.totalorder %s60, %s61
    %p73 = scmp.eq.s32.totalorder %s18, 3
    %p74 = por %p72, %p73
    %p76 = scmp.ne.s32.totalorder %s61, %s75
    %p77 = scmp.eq.s32.totalorder %s18, 0
    %p78 = por %p76, %p77
    %s80 = sadd.s32 %s79, 1
    %p83 = scmp.eq.s32.totalorder %s12, 3
    %p84 = scmp.ne.s32.totalorder %s79, %s81
    %p85 = scmp.eq.s32.totalorder %s12, 0
    %p86 = por %p84, %p85
    %p87 = scmp.ne.s32.totalorder %s79, %s81
    %p88 = scmp.eq.s32.totalorder %s17, 3
    %p89 = por %p87, %p88
    %p90 = scmp.ne.s32.totalorder %s81, %s82
    %p91 = scmp.eq.s32.totalorder %s17, 0
    %p92 = por %p90, %p91
    %p93 = scmp.ne.s32.totalorder %s81, %s82
    %p94 = scmp.eq.s32.totalorder %s18, 3
    %p95 = por %p93, %p94
    %p97 = scmp.ne.s32.totalorder %s82, %s96
    %p98 = scmp.eq.s32.totalorder %s18, 0
    %p99 = por %p97, %p98
    %s101 = sadd.s32 %s100, 1
    %p104 = scmp.eq.s32.totalorder %s12, 3
    %p105 = scmp.ne.s32.totalorder %s100, %s102
    %p106 = scmp.eq.s32.totalorder %s12, 0
    %p107 = por %p105, %p106
    %p108 = scmp.ne.s32.totalorder %s100, %s102
    %p109 = scmp.eq.s32.totalorder %s17, 3
    %p110 = por %p108, %p109
    %p111 = scmp.ne.s32.totalorder %s102, %s103
    %p112 = scmp.eq.s32.totalorder %s17, 0
    %p113 = por %p111, %p112
    %p114 = scmp.ne.s32.totalorder %s102, %s103
    %p115 = scmp.eq.s32.totalorder %s18, 3
    %p116 = por %p114, %p115
    %p118 = scmp.ne.s32.totalorder %s103, %s117
    %p119 = scmp.eq.s32.totalorder %s18, 0
    %p120 = por %p118, %p119
    %s122 = sadd.s32 %s121, 1
    %p125 = scmp.eq.s32.totalorder %s12, 3
    %p126 = scmp.ne.s32.totalorder %s121, %s123
    %p127 = scmp.eq.s32.totalorder %s12, 0
    %p128 = por %p126, %p127
    %p129 = scmp.ne.s32.totalorder %s121, %s123
    %p130 = scmp.eq.s32.totalorder %s17, 3
    %p131 = por %p129, %p130
    %p132 = scmp.ne.s32.totalorder %s123, %s124
    %p133 = scmp.eq.s32.totalorder %s17, 0
    %p134 = por %p132, %p133
    %p135 = scmp.ne.s32.totalorder %s123, %s124
    %p136 = scmp.eq.s32.totalorder %s18, 3
    %p137 = por %p135, %p136
    %p139 = scmp.ne.s32.totalorder %s124, %s138
    %p140 = scmp.eq.s32.totalorder %s18, 0
    %p141 = por %p139, %p140
    %s142 = ssub.s32 %s20, %s27
    %p143 = scmp.eq.s32.totalorder %s142, 0
    %s145 = sadd.s32 %s144, 1
    %s146 = scalar_select %p143, %s144, %s145
    %p149 = pneg %p143
    %p150 = scmp.eq.s32.totalorder %s12, 3
    %p151 = por %p149, %p150
    %p152 = scmp.ne.s32.totalorder %s144, %s147
    %p153 = scmp.eq.s32.totalorder %s12, 0
    %p154 = por %p152, %p153
    %p155 = scmp.ne.s32.totalorder %s144, %s147
    %p156 = scmp.eq.s32.totalorder %s17, 3
    %p157 = por %p155, %p156
    %p158 = scmp.ne.s32.totalorder %s147, %s148
    %p159 = scmp.eq.s32.totalorder %s17, 0
    %p160 = por %p158, %p159
    %p161 = scmp.ne.s32.totalorder %s147, %s148
    %p162 = scmp.eq.s32.totalorder %s18, 3
    %p163 = por %p161, %p162
    %p165 = scmp.ne.s32.totalorder %s148, %s164
    %p166 = scmp.eq.s32.totalorder %s18, 0
    %p167 = por %p165, %p166
    %s168 = ssub.s32 %s19, %s31
    %s169 = ssub.s32 %s20, %s27
    %s170 = sor.u32 %s168, %s169
    %p171 = scmp.eq.s32.totalorder %s170, 0
    %s173 = sadd.s32 %s172, 1
    %s174 = scalar_select %p171, %s172, %s173
    %p177 = pneg %p171
    %p178 = scmp.eq.s32.totalorder %s12, 3
    %p179 = por %p177, %p178
    %p180 = scmp.ne.s32.totalorder %s172, %s175
    %p181 = scmp.eq.s32.totalorder %s12, 0
    %p182 = por %p180, %p181
    %p183 = scmp.ne.s32.totalorder %s172, %s175
    %p184 = scmp.eq.s32.totalorder %s17, 3
    %p185 = por %p183, %p184
    %p186 = scmp.ne.s32.totalorder %s175, %s176
    %p187 = scmp.eq.s32.totalorder %s17, 0
    %p188 = por %p186, %p187
    %p189 = scmp.ne.s32.totalorder %s175, %s176
    %p190 = scmp.eq.s32.totalorder %s18, 3
    %p191 = por %p189, %p190
    %p193 = scmp.ne.s32.totalorder %s176, %s192
    %p194 = scmp.eq.s32.totalorder %s18, 0
    %p195 = por %p193, %p194
    %p196 = scmp.le.s32.totalorder 1, %s12
    %p197 = scmp.lt.s32.totalorder %s12, 5
    %p198 = pnand %p196, %p197
    %p199 = pneg %p198
    // Predicated region
    $region9: #{double_conv.1} parent=5 // pred_check
      _
    $region10: #{double_conv.1} parent=5 // pred_check_branch
      %201 = sbr.rel (%p198) target = $region12
    $region11: #{double_conv.1} parent=5 // pred_region
      %s202 = ssub.s32 %s12, 1
      // Predicated region
      $region13: #{double_conv.1} parent=11 // pred_check
        %p203 = pneg %p71
      $region14: #{double_conv.1} parent=11 // pred_check_branch
        %205 = sbr.rel (%p203) target = $region16
      $region15: #{double_conv.1} parent=11 // pred_region
        _
      $region16: #{double_conv.1} parent=11 // pred_fallthru
        _
      // Predicated region
      $region17: #{double_conv.1} parent=11 // pred_check
        %p206 = pneg %p92
      $region18: #{double_conv.1} parent=11 // pred_check_branch
        %208 = sbr.rel (%p206) target = $region20
      $region19: #{double_conv.1} parent=11 // pred_region
        _
      $region20: #{double_conv.1} parent=11 // pred_fallthru
        _
      // Predicated region
      $region21: #{double_conv.1} parent=11 // pred_check
        %p209 = pneg %p113
      $region22: #{double_conv.1} parent=11 // pred_check_branch
        %211 = sbr.rel (%p209) target = $region24
      $region23: #{double_conv.1} parent=11 // pred_region
        _
      $region24: #{double_conv.1} parent=11 // pred_fallthru
        _
      // Predicated region
      $region25: #{double_conv.1} parent=11 // pred_check
        %p212 = pneg %p134
      $region26: #{double_conv.1} parent=11 // pred_check_branch
        %214 = sbr.rel (%p212) target = $region28
      $region27: #{double_conv.1} parent=11 // pred_region
        _
      $region28: #{double_conv.1} parent=11 // pred_fallthru
        _
    $region12: #{double_conv.1} parent=5 // pred_fallthru
      _
    %p215 = scmp.lt.s32.totalorder %s12, 4
    // Predicated region
    $region29: #{double_conv.1} parent=5 // pred_check
      %p216 = pneg %p215
    $region30: #{double_conv.1} parent=5 // pred_check_branch
      %218 = sbr.rel (%p216) target = $region32
    $region31: #{double_conv.1} parent=5 // pred_region
      // Predicated region
      $region33: #{double_conv.1} parent=31 // pred_check
        %p219 = pneg %p44
      $region34: #{double_conv.1} parent=31 // pred_check_branch
        %221 = sbr.rel (%p219) target = $region36
      $region35: #{double_conv.1} parent=31 // pred_region
        %p222 = scmp.lt.s32.totalorder %s19, 1
        %s223 = scalar_select %p222, %s19, 1
        %s224 = smul.addr %s223, 63
        %s225 = smul.addr %s224, 4
        %s226 = scalar_lea.vmem %s0, %s225
      $region36: #{double_conv.1} parent=31 // pred_fallthru
        _
      // Predicated region
      $region37: #{double_conv.1} parent=31 // pred_check
        %p227 = pneg %p154
      $region38: #{double_conv.1} parent=31 // pred_check_branch
        %229 = sbr.rel (%p227) target = $region40
      $region39: #{double_conv.1} parent=31 // pred_region
        %p230 = scmp.lt.s32.totalorder %s20, 1
        %s231 = scalar_select %p230, %s20, 1
        %s232 = smul.addr %s231, 30
        %s233 = smul.addr %s232, 8
        %s234 = scalar_lea.vmem %s5, %s233
      $region40: #{double_conv.1} parent=31 // pred_fallthru
        _
    $region32: #{double_conv.1} parent=5 // pred_fallthru
      _
    %p235 = scmp.le.s32.totalorder 1, %s12
    %p236 = scmp.lt.s32.totalorder %s12, 5
    %p237 = pnand %p235, %p236
    %p238 = pneg %p237
    // Predicated region
    $region41: #{double_conv.1} parent=5 // pred_check
      _
    $region42: #{double_conv.1} parent=5 // pred_check_branch
      %240 = sbr.rel (%p237) target = $region44
    $region43: #{double_conv.1} parent=5 // pred_region
      %s241 = ssub.s32 %s12, 1
      %p242 = scmp.lt.s32.totalorder %s21, 1
      %s243 = scalar_select %p242, %s21, 1
      %s244 = smul.addr %s243, 63
      %s245 = smul.addr %s244, 4
      %s246 = scalar_lea.vmem %s0, %s245
      %p247 = pneg %p50
      %p248 = pneg %p47
      %p249 = pneg %p71
      %p250 = pneg %p68
      %p251 = pneg %p92
      %p252 = pneg %p89
      %p253 = pneg %p113
      %p254 = pneg %p110
      %p255 = pneg %p134
      %p256 = pneg %p131
      %p257 = scmp.lt.s32.totalorder %s22, 1
      %s258 = scalar_select %p257, %s22, 1
      %s259 = smul.addr %s258, 30
      %s260 = smul.addr %s259, 8
      %s261 = scalar_lea.vmem %s5, %s260
      %p262 = pneg %p160
      %p263 = pneg %p157
      %p264 = pneg %p188
      %p265 = pneg %p185
      %p266 = scmp.lt.s32.totalorder %s21, 1
      %s267 = scalar_select %p266, %s21, 1
      %p268 = scmp.lt.s32.totalorder %s22, 1
      %s269 = scalar_select %p268, %s22, 1
      %s270 = smul.addr %s269, 24
      %s271 = smul.addr %s267, 48
      %s272 = sadd.s32 %s270, %s271
      %s273 = smul.addr %s272, 8
      %s274 = scalar_lea.vmem %s6, %s273
      %p275 = scmp.lt.s32.totalorder %s21, 1
      %s276 = scalar_select %p275, %s21, 1
      %s277 = smul.addr %s276, 63
      %s278 = smul.addr %s277, 4
      %s279 = scalar_lea.vmem %s0, %s278
      %p280 = scmp.lt.s32.totalorder %s22, 1
      %s281 = scalar_select %p280, %s22, 1
      %s282 = smul.addr %s281, 30
      %s283 = smul.addr %s282, 8
      %s284 = scalar_lea.vmem %s5, %s283
      %p285 = scmp.lt.s32.totalorder %s21, 1
      %s286 = scalar_select %p285, %s21, 1
      %p287 = scmp.lt.s32.totalorder %s22, 1
      %s288 = scalar_select %p287, %s22, 1
      %s289 = smul.addr %s288, 24
      %s290 = smul.addr %s286, 48
      %s291 = sadd.s32 %s289, %s290
      %s292 = smul.addr %s291, 8
      %s293 = scalar_lea.vmem %s6, %s292
      %s295 = smul.u32 %s22, 192
      %s296 = sshra.s32 %s295, 3
      %s297 = sand.u32 %s295, 7
      %s298 = smul.addr %s296, 4
      %s299 = scalar_lea.vmem %s279, %s298
      %v300 = vld [vmem:[%s299] sm:$0xf]
      %v301 = vld [vmem:[%s299 + $0x4] sm:$0xf]
      %v302 = vld [vmem:[%s299 + $0x8] sm:$0xf]
      %v303 = vld [vmem:[%s299 + $0xc] sm:$0xf]
      %v304 = vld [vmem:[%s299 + $0x10] sm:$0xf]
      %v305 = vld [vmem:[%s299 + $0x14] sm:$0xf]
      %v306 = vld [vmem:[%s299 + $0x18] sm:$0xf]
      %v307 = vld [vmem:[%s299 + $0x1c] sm:$0xf]
      %v308 = vld [vmem:[%s299 + $0x20] sm:$0xf]
      %v309 = vld [vmem:[%s299 + $0x24] sm:$0xf]
      %v310 = vld [vmem:[%s299 + $0x28] sm:$0xf]
      %v311 = vld [vmem:[%s299 + $0x2c] sm:$0xf]
      %v312 = vld [vmem:[%s299 + $0x30] sm:$0xf]
      %v313 = vld [vmem:[%s299 + $0x34] sm:$0xf]
      %v314 = vld [vmem:[%s299 + $0x38] sm:$0xf]
      %v315 = vld [vmem:[%s299 + $0x3c] sm:$0xf]
      %v316 = vld [vmem:[%s299 + $0x40] sm:$0xf]
      %v317 = vld [vmem:[%s299 + $0x44] sm:$0xf]
      %v318 = vld [vmem:[%s299 + $0x48] sm:$0xf]
      %v319 = vld [vmem:[%s299 + $0x4c] sm:$0xf]
      %v320 = vld [vmem:[%s299 + $0x50] sm:$0xf]
      %v321 = vld [vmem:[%s299 + $0x54] sm:$0xf]
      %v322 = vld [vmem:[%s299 + $0x58] sm:$0xf]
      %v323 = vld [vmem:[%s299 + $0x5c] sm:$0xf]
      %v324 = vld [vmem:[%s299 + $0x60] sm:$0xf]
      %v325 = vld [vmem:[%s299 + $0x64] sm:$0xf]
      %v326 = vld [vmem:[%s299 + $0x68] sm:$0xf]
      %v327 = vld [vmem:[%s299 + $0x6c] sm:$0xf]
      %v328 = vld [vmem:[%s299 + $0x70] sm:$0xf]
      %v329 = vld [vmem:[%s299 + $0x74] sm:$0xf]
      %v330 = vld [vmem:[%s299 + $0x78] sm:$0xf]
      %v331 = vld [vmem:[%s299 + $0x7c] sm:$0xf]
      %v332 = vld [vmem:[%s299 + $0x80] sm:$0xf]
      %v333 = vld [vmem:[%s299 + $0x84] sm:$0xf]
      %v334 = vld [vmem:[%s299 + $0x88] sm:$0xf]
      %v335 = vld [vmem:[%s299 + $0x8c] sm:$0xf]
      %v336 = vld [vmem:[%s299 + $0x90] sm:$0xf]
      %v337 = vld [vmem:[%s1] sm:$0xf]
      %v338 = vld [vmem:[%s1 + $0x4] sm:$0xf]
      %v339 = vld [vmem:[%s1 + $0x8] sm:$0xf]
      %v340 = vld [vmem:[%s1 + $0xc] sm:$0xf]
      %v341 = vld [vmem:[%s1 + $0x10] sm:$0xf]
      %v342 = vld [vmem:[%s1 + $0x14] sm:$0xf]
      %v343 = vld [vmem:[%s1 + $0x18] sm:$0xf]
      %v344 = vld [vmem:[%s1 + $0x1c] sm:$0xf]
      %v345 = vld [vmem:[%s1 + $0x20] sm:$0xf]
      %v346 = vld [vmem:[%s1 + $0x24] sm:$0xf]
      %v347 = vld [vmem:[%s1 + $0x28] sm:$0xf]
      %v348 = vld [vmem:[%s1 + $0x2c] sm:$0xf]
      %v349 = vld [vmem:[%s1 + $0x30] sm:$0xf]
      %v350 = vld [vmem:[%s1 + $0x34] sm:$0xf]
      %v351 = vld [vmem:[%s1 + $0x38] sm:$0xf]
      %v352 = vld [vmem:[%s1 + $0x3c] sm:$0xf]
      %s353 = scalar_lea.vmem %s1, 64
      %v354 = vld [vmem:[%s353] sm:$0xf]
      %v355 = vld [vmem:[%s353 + $0x4] sm:$0xf]
      %v356 = vld [vmem:[%s353 + $0x8] sm:$0xf]
      %v357 = vld [vmem:[%s353 + $0xc] sm:$0xf]
      %v358 = vld [vmem:[%s353 + $0x10] sm:$0xf]
      %v359 = vld [vmem:[%s353 + $0x14] sm:$0xf]
      %v360 = vld [vmem:[%s353 + $0x18] sm:$0xf]
      %v361 = vld [vmem:[%s353 + $0x1c] sm:$0xf]
      %v362 = vld [vmem:[%s353 + $0x20] sm:$0xf]
      %v363 = vld [vmem:[%s353 + $0x24] sm:$0xf]
      %v364 = vld [vmem:[%s353 + $0x28] sm:$0xf]
      %v365 = vld [vmem:[%s353 + $0x2c] sm:$0xf]
      %v366 = vld [vmem:[%s353 + $0x30] sm:$0xf]
      %v367 = vld [vmem:[%s353 + $0x34] sm:$0xf]
      %v368 = vld [vmem:[%s353 + $0x38] sm:$0xf]
      %v369 = vld [vmem:[%s353 + $0x3c] sm:$0xf]
      %v401 = vunpack.c.l.b16 %v300
      %v402 = vunpack.c.l.b16 %v301
      %v403 = vunpack.c.l.b16 %v302
      %v404 = vunpack.c.l.b16 %v303
      %v405 = vunpack.c.l.b16 %v304
      %v406 = vunpack.c.l.b16 %v305
      %v407 = vunpack.c.l.b16 %v306
      %v408 = vunpack.c.l.b16 %v307
      %v409 = vunpack.c.l.b16 %v308
      %v410 = vunpack.c.l.b16 %v309
      %v411 = vunpack.c.l.b16 %v310
      %v412 = vunpack.c.l.b16 %v311
      %v413 = vunpack.c.l.b16 %v312
      %v414 = vunpack.c.l.b16 %v313
      %v415 = vunpack.c.l.b16 %v314
      %v416 = vunpack.c.l.b16 %v315
      %v417 = vunpack.c.l.b16 %v316
      %v418 = vunpack.c.l.b16 %v317
      %v419 = vunpack.c.l.b16 %v318
      %v420 = vunpack.c.l.b16 %v319
      %v421 = vunpack.c.l.b16 %v320
      %v422 = vunpack.c.l.b16 %v321
      %v423 = vunpack.c.l.b16 %v322
      %v424 = vunpack.c.l.b16 %v323
      %v425 = vunpack.c.l.b16 %v324
      %v426 = vunpack.c.l.b16 %v325
      %v427 = vunpack.c.l.b16 %v326
      %v428 = vunpack.c.l.b16 %v327
      %v429 = vunpack.c.l.b16 %v328
      %v430 = vunpack.c.l.b16 %v329
      %v431 = vunpack.c.l.b16 %v330
      %v432 = vpack.c.b16 %v402, %v401
      %v433 = vpack.c.b16 %v404, %v403
      %v434 = vpack.c.b16 %v406, %v405
      %v435 = vpack.c.b16 %v408, %v407
      %v436 = vpack.c.b16 %v410, %v409
      %v437 = vpack.c.b16 %v412, %v411
      %v438 = vpack.c.b16 %v414, %v413
      %v439 = vpack.c.b16 %v416, %v415
      %v440 = vpack.c.b16 %v418, %v417
      %v441 = vpack.c.b16 %v420, %v419
      %v442 = vpack.c.b16 %v422, %v421
      %v443 = vpack.c.b16 %v424, %v423
      %v444 = vpack.c.b16 %v426, %v425
      %v445 = vpack.c.b16 %v428, %v427
      %v446 = vpack.c.b16 %v430, %v429
      %v447 = vpack.c.b16 %v431, %v431
      %vm448 = vsmask.f32 7424
      %v450 = vshrl.u32 %v432, 16
      %v452 = vshll.u32 %v432, 16
      %v454 = vrot.slane %v452, 1
      %v455 = vor.u32 %v450, %v454
      %v457 = vshll.u32 %v433, 16
      %v459 = vrot.slane %v457, 1
      %v460 = vsel %vm448, %v455, %v459
      %v461 = vshrl.u32 %v433, 16
      %v463 = vor.u32 %v461, %v459
      %v465 = vshll.u32 %v434, 16
      %v467 = vrot.slane %v465, 1
      %v468 = vsel %vm448, %v463, %v467
      %v469 = vshrl.u32 %v434, 16
      %v471 = vor.u32 %v469, %v467
      %v473 = vshll.u32 %v435, 16
      %v475 = vrot.slane %v473, 1
      %v476 = vsel %vm448, %v471, %v475
      %v477 = vshrl.u32 %v435, 16
      %v479 = vor.u32 %v477, %v475
      %v481 = vshll.u32 %v436, 16
      %v483 = vrot.slane %v481, 1
      %v484 = vsel %vm448, %v479, %v483
      %v485 = vshrl.u32 %v436, 16
      %v487 = vor.u32 %v485, %v483
      %v489 = vshll.u32 %v437, 16
      %v491 = vrot.slane %v489, 1
      %v492 = vsel %vm448, %v487, %v491
      %v493 = vshrl.u32 %v437, 16
      %v495 = vor.u32 %v493, %v491
      %v497 = vshll.u32 %v438, 16
      %v499 = vrot.slane %v497, 1
      %v500 = vsel %vm448, %v495, %v499
      %v501 = vshrl.u32 %v438, 16
      %v503 = vor.u32 %v501, %v499
      %v505 = vshll.u32 %v439, 16
      %v507 = vrot.slane %v505, 1
      %v508 = vsel %vm448, %v503, %v507
      %v509 = vshrl.u32 %v439, 16
      %v511 = vor.u32 %v509, %v507
      %v513 = vshll.u32 %v440, 16
      %v515 = vrot.slane %v513, 1
      %v516 = vsel %vm448, %v511, %v515
      %v517 = vshrl.u32 %v440, 16
      %v519 = vor.u32 %v517, %v515
      %v521 = vshll.u32 %v441, 16
      %v523 = vrot.slane %v521, 1
      %v524 = vsel %vm448, %v519, %v523
      %v525 = vshrl.u32 %v441, 16
      %v527 = vor.u32 %v525, %v523
      %v529 = vshll.u32 %v442, 16
      %v531 = vrot.slane %v529, 1
      %v532 = vsel %vm448, %v527, %v531
      %v533 = vshrl.u32 %v442, 16
      %v535 = vor.u32 %v533, %v531
      %v537 = vshll.u32 %v443, 16
      %v539 = vrot.slane %v537, 1
      %v540 = vsel %vm448, %v535, %v539
      %v541 = vshrl.u32 %v443, 16
      %v543 = vor.u32 %v541, %v539
      %v545 = vshll.u32 %v444, 16
      %v547 = vrot.slane %v545, 1
      %v548 = vsel %vm448, %v543, %v547
      %v549 = vshrl.u32 %v444, 16
      %v551 = vor.u32 %v549, %v547
      %v553 = vshll.u32 %v445, 16
      %v555 = vrot.slane %v553, 1
      %v556 = vsel %vm448, %v551, %v555
      %v557 = vshrl.u32 %v445, 16
      %v559 = vor.u32 %v557, %v555
      %v561 = vshll.u32 %v446, 16
      %v563 = vrot.slane %v561, 1
      %v564 = vsel %vm448, %v559, %v563
      %v565 = vshrl.u32 %v446, 16
      %v567 = vor.u32 %v565, %v563
      %v569 = vshll.u32 %v447, 16
      %v571 = vrot.slane %v569, 1
      %v572 = vsel %vm448, %v567, %v571
      %v604 = vunpack.c.l.b16 %v354
      %v605 = vunpack.c.l.b16 %v355
      %v606 = vunpack.c.l.b16 %v356
      %v607 = vunpack.c.l.b16 %v357
      %v608 = vunpack.c.l.b16 %v358
      %v609 = vunpack.c.l.b16 %v359
      %v610 = vunpack.c.l.b16 %v360
      %v611 = vunpack.c.l.b16 %v361
      %v612 = vunpack.c.l.b16 %v362
      %v613 = vunpack.c.l.b16 %v363
      %v614 = vunpack.c.l.b16 %v364
      %v615 = vunpack.c.l.b16 %v365
      %v616 = vunpack.c.l.b16 %v366
      %v617 = vunpack.c.l.b16 %v367
      %v618 = vunpack.c.l.b16 %v368
      %v619 = vunpack.c.l.b16 %v369
      %v620 = vpack.c.b16 %v605, %v604
      %v621 = vpack.c.b16 %v607, %v606
      %v622 = vpack.c.b16 %v609, %v608
      %v623 = vpack.c.b16 %v611, %v610
      %v624 = vpack.c.b16 %v613, %v612
      %v625 = vpack.c.b16 %v615, %v614
      %v626 = vpack.c.b16 %v617, %v616
      %v627 = vpack.c.b16 %v619, %v618
      %636 = vmatprep.subr.bf16.mxu0 0
      %637 = vmatpush1.bf16.msra.mxu0 %v627
      %638 = vmatprep.subr.bf16.mxu0 0
      %639 = vmatpush1.bf16.msra.mxu0 %v626
      %640 = vmatprep.subr.bf16.mxu0 0
      %641 = vmatpush1.bf16.msra.mxu0 %v625
      %642 = vmatprep.subr.bf16.mxu0 0
      %643 = vmatpush1.bf16.msra.mxu0 %v624
      %644 = vmatprep.subr.bf16.mxu0 0
      %645 = vmatpush1.bf16.msra.mxu0 %v623
      %646 = vmatprep.subr.bf16.mxu0 0
      %647 = vmatpush1.bf16.msra.mxu0 %v622
      %648 = vmatprep.subr.bf16.mxu0 0
      %649 = vmatpush1.bf16.msra.mxu0 %v621
      %650 = vmatprep.subr.bf16.mxu0 0
      %651 = vmatpush1.bf16.msra.mxu0 %v620
      %652 = vmatprep.subr.bf16.mxu0 0
      %653 = vmatpush2.bf16.msra.mxu0 0
      %654 = vmatprep.subr.bf16.mxu0 0
      %655 = vmatpush2.bf16.msra.mxu0 0
      %656 = vmatprep.subr.bf16.mxu0 0
      %657 = vmatpush2.bf16.msra.mxu0 0
      %658 = vmatprep.subr.bf16.mxu0 0
      %659 = vmatpush2.bf16.msra.mxu0 0
      %660 = vmatprep.subr.bf16.mxu0 0
      %661 = vmatpush2.bf16.msra.mxu0 0
      %662 = vmatprep.subr.bf16.mxu0 0
      %663 = vmatpush2.bf16.msra.mxu0 0
      %664 = vmatprep.subr.bf16.mxu0 0
      %665 = vmatpush2.bf16.msra.mxu0 0
      %666 = vmatprep.subr.bf16.mxu0 0
      %667 = vmatpush2.bf16.msra.mxu0 0
      %668 = vmatprep.mubr.bf16.mxu0 0
      %669 = vmatmul.mubr.bf16.gmra.mxu0 %v460
      %v670 = vpop.f32.mrf.mxu0
      %v671 = vadd.f32 0.0, %v670
      %v672 = vpop.f32.mrf.mxu0
      %v673 = vpop.f32.mrf.mxu0
      %v674 = vadd.f32 0.0, %v673
      %v675 = vpop.f32.mrf.mxu0
      %676 = vmatprep.mubr.bf16.mxu0 0
      %677 = vmatmul.mubr.bf16.gmra.mxu0 %v468
      %v678 = vpop.f32.mrf.mxu0
      %v679 = vadd.f32 0.0, %v678
      %v680 = vpop.f32.mrf.mxu0
      %v681 = vpop.f32.mrf.mxu0
      %v682 = vadd.f32 0.0, %v681
      %v683 = vpop.f32.mrf.mxu0
      %684 = vmatprep.mubr.bf16.mxu0 0
      %685 = vmatmul.mubr.bf16.gmra.mxu0 %v476
      %v686 = vpop.f32.mrf.mxu0
      %v687 = vadd.f32 0.0, %v686
      %v688 = vpop.f32.mrf.mxu0
      %v689 = vpop.f32.mrf.mxu0
      %v690 = vadd.f32 0.0, %v689
      %v691 = vpop.f32.mrf.mxu0
      %692 = vmatprep.mubr.bf16.mxu0 0
      %693 = vmatmul.mubr.bf16.gmra.mxu0 %v484
      %v694 = vpop.f32.mrf.mxu0
      %v695 = vadd.f32 0.0, %v694
      %v696 = vpop.f32.mrf.mxu0
      %v697 = vpop.f32.mrf.mxu0
      %v698 = vadd.f32 0.0, %v697
      %v699 = vpop.f32.mrf.mxu0
      %700 = vmatprep.mubr.bf16.mxu0 0
      %701 = vmatmul.mubr.bf16.gmra.mxu0 %v492
      %v702 = vpop.f32.mrf.mxu0
      %v703 = vadd.f32 0.0, %v702
      %v704 = vpop.f32.mrf.mxu0
      %v705 = vpop.f32.mrf.mxu0
      %v706 = vadd.f32 0.0, %v705
      %v707 = vpop.f32.mrf.mxu0
      %708 = vmatprep.mubr.bf16.mxu0 0
      %709 = vmatmul.mubr.bf16.gmra.mxu0 %v500
      %v710 = vpop.f32.mrf.mxu0
      %v711 = vadd.f32 0.0, %v710
      %v712 = vpop.f32.mrf.mxu0
      %v713 = vpop.f32.mrf.mxu0
      %v714 = vadd.f32 0.0, %v713
      %v715 = vpop.f32.mrf.mxu0
      %716 = vmatprep.mubr.bf16.mxu0 0
      %717 = vmatmul.mubr.bf16.gmra.mxu0 %v508
      %v718 = vpop.f32.mrf.mxu0
      %v719 = vadd.f32 0.0, %v718
      %v720 = vpop.f32.mrf.mxu0
      %v721 = vpop.f32.mrf.mxu0
      %v722 = vadd.f32 0.0, %v721
      %v723 = vpop.f32.mrf.mxu0
      %724 = vmatprep.mubr.bf16.mxu0 0
      %725 = vmatmul.mubr.bf16.gmra.mxu0 %v516
      %v726 = vpop.f32.mrf.mxu0
      %v727 = vadd.f32 0.0, %v726
      %v728 = vpop.f32.mrf.mxu0
      %v729 = vpop.f32.mrf.mxu0
      %v730 = vadd.f32 0.0, %v729
      %v731 = vpop.f32.mrf.mxu0
      %732 = vmatprep.mubr.bf16.mxu0 0
      %733 = vmatmul.mubr.bf16.gmra.mxu0 %v524
      %v734 = vpop.f32.mrf.mxu0
      %v735 = vadd.f32 0.0, %v734
      %v736 = vpop.f32.mrf.mxu0
      %v737 = vpop.f32.mrf.mxu0
      %v738 = vadd.f32 0.0, %v737
      %v739 = vpop.f32.mrf.mxu0
      %740 = vmatprep.mubr.bf16.mxu0 0
      %741 = vmatmul.mubr.bf16.gmra.mxu0 %v532
      %v742 = vpop.f32.mrf.mxu0
      %v743 = vadd.f32 0.0, %v742
      %v744 = vpop.f32.mrf.mxu0
      %v745 = vpop.f32.mrf.mxu0
      %v746 = vadd.f32 0.0, %v745
      %v747 = vpop.f32.mrf.mxu0
      %748 = vmatprep.mubr.bf16.mxu0 0
      %749 = vmatmul.mubr.bf16.gmra.mxu0 %v540
      %v750 = vpop.f32.mrf.mxu0
      %v751 = vadd.f32 0.0, %v750
      %v752 = vpop.f32.mrf.mxu0
      %v753 = vpop.f32.mrf.mxu0
      %v754 = vadd.f32 0.0, %v753
      %v755 = vpop.f32.mrf.mxu0
      %756 = vmatprep.mubr.bf16.mxu0 0
      %757 = vmatmul.mubr.bf16.gmra.mxu0 %v548
      %v758 = vpop.f32.mrf.mxu0
      %v759 = vadd.f32 0.0, %v758
      %v760 = vpop.f32.mrf.mxu0
      %v761 = vpop.f32.mrf.mxu0
      %v762 = vadd.f32 0.0, %v761
      %v763 = vpop.f32.mrf.mxu0
      %764 = vmatprep.mubr.bf16.mxu0 0
      %765 = vmatmul.mubr.bf16.gmra.mxu0 %v556
      %v766 = vpop.f32.mrf.mxu0
      %v767 = vadd.f32 0.0, %v766
      %v768 = vpop.f32.mrf.mxu0
      %v769 = vpop.f32.mrf.mxu0
      %v770 = vadd.f32 0.0, %v769
      %v771 = vpop.f32.mrf.mxu0
      %772 = vmatprep.mubr.bf16.mxu0 0
      %773 = vmatmul.mubr.bf16.gmra.mxu0 %v564
      %v774 = vpop.f32.mrf.mxu0
      %v775 = vadd.f32 0.0, %v774
      %v776 = vpop.f32.mrf.mxu0
      %v777 = vpop.f32.mrf.mxu0
      %v778 = vadd.f32 0.0, %v777
      %v779 = vpop.f32.mrf.mxu0
      %780 = vmatprep.mubr.bf16.mxu0 0
      %781 = vmatmul.mubr.bf16.gmra.mxu0 %v572
      %v782 = vpop.f32.mrf.mxu0
      %v783 = vadd.f32 0.0, %v782
      %v784 = vpop.f32.mrf.mxu0
      %v785 = vpop.f32.mrf.mxu0
      %v786 = vadd.f32 0.0, %v785
      %v787 = vpop.f32.mrf.mxu0
      %788 = vdwg.mxu0
      %v820 = vunpack.c.l.b16 %v337
      %v821 = vunpack.c.l.b16 %v338
      %v822 = vunpack.c.l.b16 %v339
      %v823 = vunpack.c.l.b16 %v340
      %v824 = vunpack.c.l.b16 %v341
      %v825 = vunpack.c.l.b16 %v342
      %v826 = vunpack.c.l.b16 %v343
      %v827 = vunpack.c.l.b16 %v344
      %v828 = vunpack.c.l.b16 %v345
      %v829 = vunpack.c.l.b16 %v346
      %v830 = vunpack.c.l.b16 %v347
      %v831 = vunpack.c.l.b16 %v348
      %v832 = vunpack.c.l.b16 %v349
      %v833 = vunpack.c.l.b16 %v350
      %v834 = vunpack.c.l.b16 %v351
      %v835 = vunpack.c.l.b16 %v352
      %v836 = vpack.c.b16 %v821, %v820
      %v837 = vpack.c.b16 %v823, %v822
      %v838 = vpack.c.b16 %v825, %v824
      %v839 = vpack.c.b16 %v827, %v826
      %v840 = vpack.c.b16 %v829, %v828
      %v841 = vpack.c.b16 %v831, %v830
      %v842 = vpack.c.b16 %v833, %v832
      %v843 = vpack.c.b16 %v835, %v834
      %852 = vmatprep.subr.bf16.mxu0 0
      %853 = vmatpush1.bf16.msra.mxu0 %v843
      %854 = vmatprep.subr.bf16.mxu0 0
      %855 = vmatpush1.bf16.msra.mxu0 %v842
      %856 = vmatprep.subr.bf16.mxu0 0
      %857 = vmatpush1.bf16.msra.mxu0 %v841
      %858 = vmatprep.subr.bf16.mxu0 0
      %859 = vmatpush1.bf16.msra.mxu0 %v840
      %860 = vmatprep.subr.bf16.mxu0 0
      %861 = vmatpush1.bf16.msra.mxu0 %v839
      %862 = vmatprep.subr.bf16.mxu0 0
      %863 = vmatpush1.bf16.msra.mxu0 %v838
      %864 = vmatprep.subr.bf16.mxu0 0
      %865 = vmatpush1.bf16.msra.mxu0 %v837
      %866 = vmatprep.subr.bf16.mxu0 0
      %867 = vmatpush1.bf16.msra.mxu0 %v836
      %868 = vmatprep.subr.bf16.mxu0 0
      %869 = vmatpush2.bf16.msra.mxu0 0
      %870 = vmatprep.subr.bf16.mxu0 0
      %871 = vmatpush2.bf16.msra.mxu0 0
      %872 = vmatprep.subr.bf16.mxu0 0
      %873 = vmatpush2.bf16.msra.mxu0 0
      %874 = vmatprep.subr.bf16.mxu0 0
      %875 = vmatpush2.bf16.msra.mxu0 0
      %876 = vmatprep.subr.bf16.mxu0 0
      %877 = vmatpush2.bf16.msra.mxu0 0
      %878 = vmatprep.subr.bf16.mxu0 0
      %879 = vmatpush2.bf16.msra.mxu0 0
      %880 = vmatprep.subr.bf16.mxu0 0
      %881 = vmatpush2.bf16.msra.mxu0 0
      %882 = vmatprep.subr.bf16.mxu0 0
      %883 = vmatpush2.bf16.msra.mxu0 0
      %884 = vmatprep.mubr.bf16.mxu0 0
      %885 = vmatmul.mubr.bf16.gmra.mxu0 %v432
      %v886 = vpop.f32.mrf.mxu0
      %v887 = vadd.f32 %v671, %v886
      %v888 = vpop.f32.mrf.mxu0
      %v889 = vpop.f32.mrf.mxu0
      %v890 = vadd.f32 %v674, %v889
      %v891 = vpop.f32.mrf.mxu0
      %892 = vmatprep.mubr.bf16.mxu0 0
      %893 = vmatmul.mubr.bf16.gmra.mxu0 %v433
      %v894 = vpop.f32.mrf.mxu0
      %v895 = vadd.f32 %v679, %v894
      %v896 = vpop.f32.mrf.mxu0
      %v897 = vpop.f32.mrf.mxu0
      %v898 = vadd.f32 %v682, %v897
      %v899 = vpop.f32.mrf.mxu0
      %900 = vmatprep.mubr.bf16.mxu0 0
      %901 = vmatmul.mubr.bf16.gmra.mxu0 %v434
      %v902 = vpop.f32.mrf.mxu0
      %v903 = vadd.f32 %v687, %v902
      %v904 = vpop.f32.mrf.mxu0
      %v905 = vpop.f32.mrf.mxu0
      %v906 = vadd.f32 %v690, %v905
      %v907 = vpop.f32.mrf.mxu0
      %908 = vmatprep.mubr.bf16.mxu0 0
      %909 = vmatmul.mubr.bf16.gmra.mxu0 %v435
      %v910 = vpop.f32.mrf.mxu0
      %v911 = vadd.f32 %v695, %v910
      %v912 = vpop.f32.mrf.mxu0
      %v913 = vpop.f32.mrf.mxu0
      %v914 = vadd.f32 %v698, %v913
      %v915 = vpop.f32.mrf.mxu0
      %916 = vmatprep.mubr.bf16.mxu0 0
      %917 = vmatmul.mubr.bf16.gmra.mxu0 %v436
      %v918 = vpop.f32.mrf.mxu0
      %v919 = vadd.f32 %v703, %v918
      %v920 = vpop.f32.mrf.mxu0
      %v921 = vpop.f32.mrf.mxu0
      %v922 = vadd.f32 %v706, %v921
      %v923 = vpop.f32.mrf.mxu0
      %924 = vmatprep.mubr.bf16.mxu0 0
      %925 = vmatmul.mubr.bf16.gmra.mxu0 %v437
      %v926 = vpop.f32.mrf.mxu0
      %v927 = vadd.f32 %v711, %v926
      %v928 = vpop.f32.mrf.mxu0
      %v929 = vpop.f32.mrf.mxu0
      %v930 = vadd.f32 %v714, %v929
      %v931 = vpop.f32.mrf.mxu0
      %932 = vmatprep.mubr.bf16.mxu0 0
      %933 = vmatmul.mubr.bf16.gmra.mxu0 %v438
      %v934 = vpop.f32.mrf.mxu0
      %v935 = vadd.f32 %v719, %v934
      %v936 = vpop.f32.mrf.mxu0
      %v937 = vpop.f32.mrf.mxu0
      %v938 = vadd.f32 %v722, %v937
      %v939 = vpop.f32.mrf.mxu0
      %940 = vmatprep.mubr.bf16.mxu0 0
      %941 = vmatmul.mubr.bf16.gmra.mxu0 %v439
      %v942 = vpop.f32.mrf.mxu0
      %v943 = vadd.f32 %v727, %v942
      %v944 = vpop.f32.mrf.mxu0
      %v945 = vpop.f32.mrf.mxu0
      %v946 = vadd.f32 %v730, %v945
      %v947 = vpop.f32.mrf.mxu0
      %948 = vmatprep.mubr.bf16.mxu0 0
      %949 = vmatmul.mubr.bf16.gmra.mxu0 %v440
      %v950 = vpop.f32.mrf.mxu0
      %v951 = vadd.f32 %v735, %v950
      %v952 = vpop.f32.mrf.mxu0
      %v953 = vpop.f32.mrf.mxu0
      %v954 = vadd.f32 %v738, %v953
      %v955 = vpop.f32.mrf.mxu0
      %956 = vmatprep.mubr.bf16.mxu0 0
      %957 = vmatmul.mubr.bf16.gmra.mxu0 %v441
      %v958 = vpop.f32.mrf.mxu0
      %v959 = vadd.f32 %v743, %v958
      %v960 = vpop.f32.mrf.mxu0
      %v961 = vpop.f32.mrf.mxu0
      %v962 = vadd.f32 %v746, %v961
      %v963 = vpop.f32.mrf.mxu0
      %964 = vmatprep.mubr.bf16.mxu0 0
      %965 = vmatmul.mubr.bf16.gmra.mxu0 %v442
      %v966 = vpop.f32.mrf.mxu0
      %v967 = vadd.f32 %v751, %v966
      %v968 = vpop.f32.mrf.mxu0
      %v969 = vpop.f32.mrf.mxu0
      %v970 = vadd.f32 %v754, %v969
      %v971 = vpop.f32.mrf.mxu0
      %972 = vmatprep.mubr.bf16.mxu0 0
      %973 = vmatmul.mubr.bf16.gmra.mxu0 %v443
      %v974 = vpop.f32.mrf.mxu0
      %v975 = vadd.f32 %v759, %v974
      %v976 = vpop.f32.mrf.mxu0
      %v977 = vpop.f32.mrf.mxu0
      %v978 = vadd.f32 %v762, %v977
      %v979 = vpop.f32.mrf.mxu0
      %980 = vmatprep.mubr.bf16.mxu0 0
      %981 = vmatmul.mubr.bf16.gmra.mxu0 %v444
      %v982 = vpop.f32.mrf.mxu0
      %v983 = vadd.f32 %v767, %v982
      %v984 = vpop.f32.mrf.mxu0
      %v985 = vpop.f32.mrf.mxu0
      %v986 = vadd.f32 %v770, %v985
      %v987 = vpop.f32.mrf.mxu0
      %988 = vmatprep.mubr.bf16.mxu0 0
      %989 = vmatmul.mubr.bf16.gmra.mxu0 %v445
      %v990 = vpop.f32.mrf.mxu0
      %v991 = vadd.f32 %v775, %v990
      %v992 = vpop.f32.mrf.mxu0
      %v993 = vpop.f32.mrf.mxu0
      %v994 = vadd.f32 %v778, %v993
      %v995 = vpop.f32.mrf.mxu0
      %996 = vmatprep.mubr.bf16.mxu0 0
      %997 = vmatmul.mubr.bf16.gmra.mxu0 %v446
      %v998 = vpop.f32.mrf.mxu0
      %v999 = vadd.f32 %v783, %v998
      %v1000 = vpop.f32.mrf.mxu0
      %v1001 = vpop.f32.mrf.mxu0
      %v1002 = vadd.f32 %v786, %v1001
      %v1003 = vpop.f32.mrf.mxu0
      %1004 = vdwg.mxu0
      %s1005 = scalar_lea.vmem %s1, 128
      %v1006 = vld [vmem:[%s1005] sm:$0xf]
      %v1007 = vld [vmem:[%s1005 + $0x4] sm:$0xf]
      %v1008 = vld [vmem:[%s1005 + $0x8] sm:$0xf]
      %v1009 = vld [vmem:[%s1005 + $0xc] sm:$0xf]
      %v1010 = vld [vmem:[%s1005 + $0x10] sm:$0xf]
      %v1011 = vld [vmem:[%s1005 + $0x14] sm:$0xf]
      %v1012 = vld [vmem:[%s1005 + $0x18] sm:$0xf]
      %v1013 = vld [vmem:[%s1005 + $0x1c] sm:$0xf]
      %v1014 = vld [vmem:[%s1005 + $0x20] sm:$0xf]
      %v1015 = vld [vmem:[%s1005 + $0x24] sm:$0xf]
      %v1016 = vld [vmem:[%s1005 + $0x28] sm:$0xf]
      %v1017 = vld [vmem:[%s1005 + $0x2c] sm:$0xf]
      %v1018 = vld [vmem:[%s1005 + $0x30] sm:$0xf]
      %v1019 = vld [vmem:[%s1005 + $0x34] sm:$0xf]
      %v1020 = vld [vmem:[%s1005 + $0x38] sm:$0xf]
      %v1021 = vld [vmem:[%s1005 + $0x3c] sm:$0xf]
      %vm1022 = vcmask 1046528
      %v1023 = vrot.slane %v432, 1
      %v1024 = vrot.slane %v433, 1
      %v1025 = vsel %vm1022, %v1023, %v1024
      %v1026 = vrot.slane %v434, 1
      %v1027 = vsel %vm1022, %v1024, %v1026
      %v1028 = vrot.slane %v435, 1
      %v1029 = vsel %vm1022, %v1026, %v1028
      %v1030 = vrot.slane %v436, 1
      %v1031 = vsel %vm1022, %v1028, %v1030
      %v1032 = vrot.slane %v437, 1
      %v1033 = vsel %vm1022, %v1030, %v1032
      %v1034 = vrot.slane %v438, 1
      %v1035 = vsel %vm1022, %v1032, %v1034
      %v1036 = vrot.slane %v439, 1
      %v1037 = vsel %vm1022, %v1034, %v1036
      %v1038 = vrot.slane %v440, 1
      %v1039 = vsel %vm1022, %v1036, %v1038
      %v1040 = vrot.slane %v441, 1
      %v1041 = vsel %vm1022, %v1038, %v1040
      %v1042 = vrot.slane %v442, 1
      %v1043 = vsel %vm1022, %v1040, %v1042
      %v1044 = vrot.slane %v443, 1
      %v1045 = vsel %vm1022, %v1042, %v1044
      %v1046 = vrot.slane %v444, 1
      %v1047 = vsel %vm1022, %v1044, %v1046
      %v1048 = vrot.slane %v445, 1
      %v1049 = vsel %vm1022, %v1046, %v1048
      %v1050 = vrot.slane %v446, 1
      %v1051 = vsel %vm1022, %v1048, %v1050
      %v1052 = vrot.slane %v447, 1
      %v1053 = vsel %vm1022, %v1050, %v1052
      %v1085 = vunpack.c.l.b16 %v1006
      %v1086 = vunpack.c.l.b16 %v1007
      %v1087 = vunpack.c.l.b16 %v1008
      %v1088 = vunpack.c.l.b16 %v1009
      %v1089 = vunpack.c.l.b16 %v1010
      %v1090 = vunpack.c.l.b16 %v1011
      %v1091 = vunpack.c.l.b16 %v1012
      %v1092 = vunpack.c.l.b16 %v1013
      %v1093 = vunpack.c.l.b16 %v1014
      %v1094 = vunpack.c.l.b16 %v1015
      %v1095 = vunpack.c.l.b16 %v1016
      %v1096 = vunpack.c.l.b16 %v1017
      %v1097 = vunpack.c.l.b16 %v1018
      %v1098 = vunpack.c.l.b16 %v1019
      %v1099 = vunpack.c.l.b16 %v1020
      %v1100 = vunpack.c.l.b16 %v1021
      %v1101 = vpack.c.b16 %v1086, %v1085
      %v1102 = vpack.c.b16 %v1088, %v1087
      %v1103 = vpack.c.b16 %v1090, %v1089
      %v1104 = vpack.c.b16 %v1092, %v1091
      %v1105 = vpack.c.b16 %v1094, %v1093
      %v1106 = vpack.c.b16 %v1096, %v1095
      %v1107 = vpack.c.b16 %v1098, %v1097
      %v1108 = vpack.c.b16 %v1100, %v1099
      %1117 = vmatprep.subr.bf16.mxu0 0
      %1118 = vmatpush1.bf16.msra.mxu0 %v1108
      %1119 = vmatprep.subr.bf16.mxu0 0
      %1120 = vmatpush1.bf16.msra.mxu0 %v1107
      %1121 = vmatprep.subr.bf16.mxu0 0
      %1122 = vmatpush1.bf16.msra.mxu0 %v1106
      %1123 = vmatprep.subr.bf16.mxu0 0
      %1124 = vmatpush1.bf16.msra.mxu0 %v1105
      %1125 = vmatprep.subr.bf16.mxu0 0
      %1126 = vmatpush1.bf16.msra.mxu0 %v1104
      %1127 = vmatprep.subr.bf16.mxu0 0
      %1128 = vmatpush1.bf16.msra.mxu0 %v1103
      %1129 = vmatprep.subr.bf16.mxu0 0
      %1130 = vmatpush1.bf16.msra.mxu0 %v1102
      %1131 = vmatprep.subr.bf16.mxu0 0
      %1132 = vmatpush1.bf16.msra.mxu0 %v1101
      %1133 = vmatprep.subr.bf16.mxu0 0
      %1134 = vmatpush2.bf16.msra.mxu0 0
      %1135 = vmatprep.subr.bf16.mxu0 0
      %1136 = vmatpush2.bf16.msra.mxu0 0
      %1137 = vmatprep.subr.bf16.mxu0 0
      %1138 = vmatpush2.bf16.msra.mxu0 0
      %1139 = vmatprep.subr.bf16.mxu0 0
      %1140 = vmatpush2.bf16.msra.mxu0 0
      %1141 = vmatprep.subr.bf16.mxu0 0
      %1142 = vmatpush2.bf16.msra.mxu0 0
      %1143 = vmatprep.subr.bf16.mxu0 0
      %1144 = vmatpush2.bf16.msra.mxu0 0
      %1145 = vmatprep.subr.bf16.mxu0 0
      %1146 = vmatpush2.bf16.msra.mxu0 0
      %1147 = vmatprep.subr.bf16.mxu0 0
      %1148 = vmatpush2.bf16.msra.mxu0 0
      %1149 = vmatprep.mubr.bf16.mxu0 0
      %1150 = vmatmul.mubr.bf16.gmra.mxu0 %v1025
      %v1151 = vpop.f32.mrf.mxu0
      %v1152 = vadd.f32 0.0, %v1151
      %v1153 = vpop.f32.mrf.mxu0
      %v1154 = vpop.f32.mrf.mxu0
      %v1155 = vadd.f32 0.0, %v1154
      %v1156 = vpop.f32.mrf.mxu0
      %1157 = vmatprep.mubr.bf16.mxu0 0
      %1158 = vmatmul.mubr.bf16.gmra.mxu0 %v1027
      %v1159 = vpop.f32.mrf.mxu0
      %v1160 = vadd.f32 0.0, %v1159
      %v1161 = vpop.f32.mrf.mxu0
      %v1162 = vpop.f32.mrf.mxu0
      %v1163 = vadd.f32 0.0, %v1162
      %v1164 = vpop.f32.mrf.mxu0
      %1165 = vmatprep.mubr.bf16.mxu0 0
      %1166 = vmatmul.mubr.bf16.gmra.mxu0 %v1029
      %v1167 = vpop.f32.mrf.mxu0
      %v1168 = vadd.f32 0.0, %v1167
      %v1169 = vpop.f32.mrf.mxu0
      %v1170 = vpop.f32.mrf.mxu0
      %v1171 = vadd.f32 0.0, %v1170
      %v1172 = vpop.f32.mrf.mxu0
      %1173 = vmatprep.mubr.bf16.mxu0 0
      %1174 = vmatmul.mubr.bf16.gmra.mxu0 %v1031
      %v1175 = vpop.f32.mrf.mxu0
      %v1176 = vadd.f32 0.0, %v1175
      %v1177 = vpop.f32.mrf.mxu0
      %v1178 = vpop.f32.mrf.mxu0
      %v1179 = vadd.f32 0.0, %v1178
      %v1180 = vpop.f32.mrf.mxu0
      %1181 = vmatprep.mubr.bf16.mxu0 0
      %1182 = vmatmul.mubr.bf16.gmra.mxu0 %v1033
      %v1183 = vpop.f32.mrf.mxu0
      %v1184 = vadd.f32 0.0, %v1183
      %v1185 = vpop.f32.mrf.mxu0
      %v1186 = vpop.f32.mrf.mxu0
      %v1187 = vadd.f32 0.0, %v1186
      %v1188 = vpop.f32.mrf.mxu0
      %1189 = vmatprep.mubr.bf16.mxu0 0
      %1190 = vmatmul.mubr.bf16.gmra.mxu0 %v1035
      %v1191 = vpop.f32.mrf.mxu0
      %v1192 = vadd.f32 0.0, %v1191
      %v1193 = vpop.f32.mrf.mxu0
      %v1194 = vpop.f32.mrf.mxu0
      %v1195 = vadd.f32 0.0, %v1194
      %v1196 = vpop.f32.mrf.mxu0
      %1197 = vmatprep.mubr.bf16.mxu0 0
      %1198 = vmatmul.mubr.bf16.gmra.mxu0 %v1037
      %v1199 = vpop.f32.mrf.mxu0
      %v1200 = vadd.f32 0.0, %v1199
      %v1201 = vpop.f32.mrf.mxu0
      %v1202 = vpop.f32.mrf.mxu0
      %v1203 = vadd.f32 0.0, %v1202
      %v1204 = vpop.f32.mrf.mxu0
      %1205 = vmatprep.mubr.bf16.mxu0 0
      %1206 = vmatmul.mubr.bf16.gmra.mxu0 %v1039
      %v1207 = vpop.f32.mrf.mxu0
      %v1208 = vadd.f32 0.0, %v1207
      %v1209 = vpop.f32.mrf.mxu0
      %v1210 = vpop.f32.mrf.mxu0
      %v1211 = vadd.f32 0.0, %v1210
      %v1212 = vpop.f32.mrf.mxu0
      %1213 = vmatprep.mubr.bf16.mxu0 0
      %1214 = vmatmul.mubr.bf16.gmra.mxu0 %v1041
      %v1215 = vpop.f32.mrf.mxu0
      %v1216 = vadd.f32 0.0, %v1215
      %v1217 = vpop.f32.mrf.mxu0
      %v1218 = vpop.f32.mrf.mxu0
      %v1219 = vadd.f32 0.0, %v1218
      %v1220 = vpop.f32.mrf.mxu0
      %1221 = vmatprep.mubr.bf16.mxu0 0
      %1222 = vmatmul.mubr.bf16.gmra.mxu0 %v1043
      %v1223 = vpop.f32.mrf.mxu0
      %v1224 = vadd.f32 0.0, %v1223
      %v1225 = vpop.f32.mrf.mxu0
      %v1226 = vpop.f32.mrf.mxu0
      %v1227 = vadd.f32 0.0, %v1226
      %v1228 = vpop.f32.mrf.mxu0
      %1229 = vmatprep.mubr.bf16.mxu0 0
      %1230 = vmatmul.mubr.bf16.gmra.mxu0 %v1045
      %v1231 = vpop.f32.mrf.mxu0
      %v1232 = vadd.f32 0.0, %v1231
      %v1233 = vpop.f32.mrf.mxu0
      %v1234 = vpop.f32.mrf.mxu0
      %v1235 = vadd.f32 0.0, %v1234
      %v1236 = vpop.f32.mrf.mxu0
      %1237 = vmatprep.mubr.bf16.mxu0 0
      %1238 = vmatmul.mubr.bf16.gmra.mxu0 %v1047
      %v1239 = vpop.f32.mrf.mxu0
      %v1240 = vadd.f32 0.0, %v1239
      %v1241 = vpop.f32.mrf.mxu0
      %v1242 = vpop.f32.mrf.mxu0
      %v1243 = vadd.f32 0.0, %v1242
      %v1244 = vpop.f32.mrf.mxu0
      %1245 = vmatprep.mubr.bf16.mxu0 0
      %1246 = vmatmul.mubr.bf16.gmra.mxu0 %v1049
      %v1247 = vpop.f32.mrf.mxu0
      %v1248 = vadd.f32 0.0, %v1247
      %v1249 = vpop.f32.mrf.mxu0
      %v1250 = vpop.f32.mrf.mxu0
      %v1251 = vadd.f32 0.0, %v1250
      %v1252 = vpop.f32.mrf.mxu0
      %1253 = vmatprep.mubr.bf16.mxu0 0
      %1254 = vmatmul.mubr.bf16.gmra.mxu0 %v1051
      %v1255 = vpop.f32.mrf.mxu0
      %v1256 = vadd.f32 0.0, %v1255
      %v1257 = vpop.f32.mrf.mxu0
      %v1258 = vpop.f32.mrf.mxu0
      %v1259 = vadd.f32 0.0, %v1258
      %v1260 = vpop.f32.mrf.mxu0
      %1261 = vmatprep.mubr.bf16.mxu0 0
      %1262 = vmatmul.mubr.bf16.gmra.mxu0 %v1053
      %v1263 = vpop.f32.mrf.mxu0
      %v1264 = vadd.f32 0.0, %v1263
      %v1265 = vpop.f32.mrf.mxu0
      %v1266 = vpop.f32.mrf.mxu0
      %v1267 = vadd.f32 0.0, %v1266
      %v1268 = vpop.f32.mrf.mxu0
      %1269 = vdwg.mxu0
      %v1270 = vadd.f32 %v887, %v1152
      %v1271 = vadd.f32 %v890, %v1155
      %v1272 = vadd.f32 %v895, %v1160
      %v1273 = vadd.f32 %v898, %v1163
      %v1274 = vadd.f32 %v903, %v1168
      %v1275 = vadd.f32 %v906, %v1171
      %v1276 = vadd.f32 %v911, %v1176
      %v1277 = vadd.f32 %v914, %v1179
      %v1278 = vadd.f32 %v919, %v1184
      %v1279 = vadd.f32 %v922, %v1187
      %v1280 = vadd.f32 %v927, %v1192
      %v1281 = vadd.f32 %v930, %v1195
      %v1282 = vadd.f32 %v935, %v1200
      %v1283 = vadd.f32 %v938, %v1203
      %v1284 = vadd.f32 %v943, %v1208
      %v1285 = vadd.f32 %v946, %v1211
      %v1286 = vadd.f32 %v951, %v1216
      %v1287 = vadd.f32 %v954, %v1219
      %v1288 = vadd.f32 %v959, %v1224
      %v1289 = vadd.f32 %v962, %v1227
      %v1290 = vadd.f32 %v967, %v1232
      %v1291 = vadd.f32 %v970, %v1235
      %v1292 = vadd.f32 %v975, %v1240
      %v1293 = vadd.f32 %v978, %v1243
      %v1294 = vadd.f32 %v983, %v1248
      %v1295 = vadd.f32 %v986, %v1251
      %v1296 = vadd.f32 %v991, %v1256
      %v1297 = vadd.f32 %v994, %v1259
      %v1298 = vadd.f32 %v999, %v1264
      %v1299 = vadd.f32 %v1002, %v1267
      %s1300 = scalar_lea.vmem %s1, 192
      %v1301 = vld [vmem:[%s1300] sm:$0xf]
      %v1302 = vld [vmem:[%s1300 + $0x4] sm:$0xf]
      %v1303 = vld [vmem:[%s1300 + $0x8] sm:$0xf]
      %v1304 = vld [vmem:[%s1300 + $0xc] sm:$0xf]
      %v1305 = vld [vmem:[%s1300 + $0x10] sm:$0xf]
      %v1306 = vld [vmem:[%s1300 + $0x14] sm:$0xf]
      %v1307 = vld [vmem:[%s1300 + $0x18] sm:$0xf]
      %v1308 = vld [vmem:[%s1300 + $0x1c] sm:$0xf]
      %v1309 = vld [vmem:[%s1300 + $0x20] sm:$0xf]
      %v1310 = vld [vmem:[%s1300 + $0x24] sm:$0xf]
      %v1311 = vld [vmem:[%s1300 + $0x28] sm:$0xf]
      %v1312 = vld [vmem:[%s1300 + $0x2c] sm:$0xf]
      %v1313 = vld [vmem:[%s1300 + $0x30] sm:$0xf]
      %v1314 = vld [vmem:[%s1300 + $0x34] sm:$0xf]
      %v1315 = vld [vmem:[%s1300 + $0x38] sm:$0xf]
      %v1316 = vld [vmem:[%s1300 + $0x3c] sm:$0xf]
      %v1319 = vunpack.c.l.b16 %v331
      %v1320 = vunpack.c.l.b16 %v332
      %v1321 = vpack.c.b16 %v405, %v404
      %v1322 = vpack.c.b16 %v407, %v406
      %v1323 = vpack.c.b16 %v409, %v408
      %v1324 = vpack.c.b16 %v411, %v410
      %v1325 = vpack.c.b16 %v413, %v412
      %v1326 = vpack.c.b16 %v415, %v414
      %v1327 = vpack.c.b16 %v417, %v416
      %v1328 = vpack.c.b16 %v419, %v418
      %v1329 = vpack.c.b16 %v421, %v420
      %v1330 = vpack.c.b16 %v423, %v422
      %v1331 = vpack.c.b16 %v425, %v424
      %v1332 = vpack.c.b16 %v427, %v426
      %v1333 = vpack.c.b16 %v429, %v428
      %v1334 = vpack.c.b16 %v431, %v430
      %v1335 = vpack.c.b16 %v1320, %v1319
      %v1367 = vunpack.c.l.b16 %v1301
      %v1368 = vunpack.c.l.b16 %v1302
      %v1369 = vunpack.c.l.b16 %v1303
      %v1370 = vunpack.c.l.b16 %v1304
      %v1371 = vunpack.c.l.b16 %v1305
      %v1372 = vunpack.c.l.b16 %v1306
      %v1373 = vunpack.c.l.b16 %v1307
      %v1374 = vunpack.c.l.b16 %v1308
      %v1375 = vunpack.c.l.b16 %v1309
      %v1376 = vunpack.c.l.b16 %v1310
      %v1377 = vunpack.c.l.b16 %v1311
      %v1378 = vunpack.c.l.b16 %v1312
      %v1379 = vunpack.c.l.b16 %v1313
      %v1380 = vunpack.c.l.b16 %v1314
      %v1381 = vunpack.c.l.b16 %v1315
      %v1382 = vunpack.c.l.b16 %v1316
      %v1383 = vpack.c.b16 %v1368, %v1367
      %v1384 = vpack.c.b16 %v1370, %v1369
      %v1385 = vpack.c.b16 %v1372, %v1371
      %v1386 = vpack.c.b16 %v1374, %v1373
      %v1387 = vpack.c.b16 %v1376, %v1375
      %v1388 = vpack.c.b16 %v1378, %v1377
      %v1389 = vpack.c.b16 %v1380, %v1379
      %v1390 = vpack.c.b16 %v1382, %v1381
      %1399 = vmatprep.subr.bf16.mxu0 0
      %1400 = vmatpush1.bf16.msra.mxu0 %v1390
      %1401 = vmatprep.subr.bf16.mxu0 0
      %1402 = vmatpush1.bf16.msra.mxu0 %v1389
      %1403 = vmatprep.subr.bf16.mxu0 0
      %1404 = vmatpush1.bf16.msra.mxu0 %v1388
      %1405 = vmatprep.subr.bf16.mxu0 0
      %1406 = vmatpush1.bf16.msra.mxu0 %v1387
      %1407 = vmatprep.subr.bf16.mxu0 0
      %1408 = vmatpush1.bf16.msra.mxu0 %v1386
      %1409 = vmatprep.subr.bf16.mxu0 0
      %1410 = vmatpush1.bf16.msra.mxu0 %v1385
      %1411 = vmatprep.subr.bf16.mxu0 0
      %1412 = vmatpush1.bf16.msra.mxu0 %v1384
      %1413 = vmatprep.subr.bf16.mxu0 0
      %1414 = vmatpush1.bf16.msra.mxu0 %v1383
      %1415 = vmatprep.subr.bf16.mxu0 0
      %1416 = vmatpush2.bf16.msra.mxu0 0
      %1417 = vmatprep.subr.bf16.mxu0 0
      %1418 = vmatpush2.bf16.msra.mxu0 0
      %1419 = vmatprep.subr.bf16.mxu0 0
      %1420 = vmatpush2.bf16.msra.mxu0 0
      %1421 = vmatprep.subr.bf16.mxu0 0
      %1422 = vmatpush2.bf16.msra.mxu0 0
      %1423 = vmatprep.subr.bf16.mxu0 0
      %1424 = vmatpush2.bf16.msra.mxu0 0
      %1425 = vmatprep.subr.bf16.mxu0 0
      %1426 = vmatpush2.bf16.msra.mxu0 0
      %1427 = vmatprep.subr.bf16.mxu0 0
      %1428 = vmatpush2.bf16.msra.mxu0 0
      %1429 = vmatprep.subr.bf16.mxu0 0
      %1430 = vmatpush2.bf16.msra.mxu0 0
      %1431 = vmatprep.mubr.bf16.mxu0 0
      %1432 = vmatmul.mubr.bf16.gmra.mxu0 %v1321
      %v1433 = vpop.f32.mrf.mxu0
      %v1434 = vadd.f32 0.0, %v1433
      %v1435 = vpop.f32.mrf.mxu0
      %v1436 = vpop.f32.mrf.mxu0
      %v1437 = vadd.f32 0.0, %v1436
      %v1438 = vpop.f32.mrf.mxu0
      %1439 = vmatprep.mubr.bf16.mxu0 0
      %1440 = vmatmul.mubr.bf16.gmra.mxu0 %v1322
      %v1441 = vpop.f32.mrf.mxu0
      %v1442 = vadd.f32 0.0, %v1441
      %v1443 = vpop.f32.mrf.mxu0
      %v1444 = vpop.f32.mrf.mxu0
      %v1445 = vadd.f32 0.0, %v1444
      %v1446 = vpop.f32.mrf.mxu0
      %1447 = vmatprep.mubr.bf16.mxu0 0
      %1448 = vmatmul.mubr.bf16.gmra.mxu0 %v1323
      %v1449 = vpop.f32.mrf.mxu0
      %v1450 = vadd.f32 0.0, %v1449
      %v1451 = vpop.f32.mrf.mxu0
      %v1452 = vpop.f32.mrf.mxu0
      %v1453 = vadd.f32 0.0, %v1452
      %v1454 = vpop.f32.mrf.mxu0
      %1455 = vmatprep.mubr.bf16.mxu0 0
      %1456 = vmatmul.mubr.bf16.gmra.mxu0 %v1324
      %v1457 = vpop.f32.mrf.mxu0
      %v1458 = vadd.f32 0.0, %v1457
      %v1459 = vpop.f32.mrf.mxu0
      %v1460 = vpop.f32.mrf.mxu0
      %v1461 = vadd.f32 0.0, %v1460
      %v1462 = vpop.f32.mrf.mxu0
      %1463 = vmatprep.mubr.bf16.mxu0 0
      %1464 = vmatmul.mubr.bf16.gmra.mxu0 %v1325
      %v1465 = vpop.f32.mrf.mxu0
      %v1466 = vadd.f32 0.0, %v1465
      %v1467 = vpop.f32.mrf.mxu0
      %v1468 = vpop.f32.mrf.mxu0
      %v1469 = vadd.f32 0.0, %v1468
      %v1470 = vpop.f32.mrf.mxu0
      %1471 = vmatprep.mubr.bf16.mxu0 0
      %1472 = vmatmul.mubr.bf16.gmra.mxu0 %v1326
      %v1473 = vpop.f32.mrf.mxu0
      %v1474 = vadd.f32 0.0, %v1473
      %v1475 = vpop.f32.mrf.mxu0
      %v1476 = vpop.f32.mrf.mxu0
      %v1477 = vadd.f32 0.0, %v1476
      %v1478 = vpop.f32.mrf.mxu0
      %1479 = vmatprep.mubr.bf16.mxu0 0
      %1480 = vmatmul.mubr.bf16.gmra.mxu0 %v1327
      %v1481 = vpop.f32.mrf.mxu0
      %v1482 = vadd.f32 0.0, %v1481
      %v1483 = vpop.f32.mrf.mxu0
      %v1484 = vpop.f32.mrf.mxu0
      %v1485 = vadd.f32 0.0, %v1484
      %v1486 = vpop.f32.mrf.mxu0
      %1487 = vmatprep.mubr.bf16.mxu0 0
      %1488 = vmatmul.mubr.bf16.gmra.mxu0 %v1328
      %v1489 = vpop.f32.mrf.mxu0
      %v1490 = vadd.f32 0.0, %v1489
      %v1491 = vpop.f32.mrf.mxu0
      %v1492 = vpop.f32.mrf.mxu0
      %v1493 = vadd.f32 0.0, %v1492
      %v1494 = vpop.f32.mrf.mxu0
      %1495 = vmatprep.mubr.bf16.mxu0 0
      %1496 = vmatmul.mubr.bf16.gmra.mxu0 %v1329
      %v1497 = vpop.f32.mrf.mxu0
      %v1498 = vadd.f32 0.0, %v1497
      %v1499 = vpop.f32.mrf.mxu0
      %v1500 = vpop.f32.mrf.mxu0
      %v1501 = vadd.f32 0.0, %v1500
      %v1502 = vpop.f32.mrf.mxu0
      %1503 = vmatprep.mubr.bf16.mxu0 0
      %1504 = vmatmul.mubr.bf16.gmra.mxu0 %v1330
      %v1505 = vpop.f32.mrf.mxu0
      %v1506 = vadd.f32 0.0, %v1505
      %v1507 = vpop.f32.mrf.mxu0
      %v1508 = vpop.f32.mrf.mxu0
      %v1509 = vadd.f32 0.0, %v1508
      %v1510 = vpop.f32.mrf.mxu0
      %1511 = vmatprep.mubr.bf16.mxu0 0
      %1512 = vmatmul.mubr.bf16.gmra.mxu0 %v1331
      %v1513 = vpop.f32.mrf.mxu0
      %v1514 = vadd.f32 0.0, %v1513
      %v1515 = vpop.f32.mrf.mxu0
      %v1516 = vpop.f32.mrf.mxu0
      %v1517 = vadd.f32 0.0, %v1516
      %v1518 = vpop.f32.mrf.mxu0
      %1519 = vmatprep.mubr.bf16.mxu0 0
      %1520 = vmatmul.mubr.bf16.gmra.mxu0 %v1332
      %v1521 = vpop.f32.mrf.mxu0
      %v1522 = vadd.f32 0.0, %v1521
      %v1523 = vpop.f32.mrf.mxu0
      %v1524 = vpop.f32.mrf.mxu0
      %v1525 = vadd.f32 0.0, %v1524
      %v1526 = vpop.f32.mrf.mxu0
      %1527 = vmatprep.mubr.bf16.mxu0 0
      %1528 = vmatmul.mubr.bf16.gmra.mxu0 %v1333
      %v1529 = vpop.f32.mrf.mxu0
      %v1530 = vadd.f32 0.0, %v1529
      %v1531 = vpop.f32.mrf.mxu0
      %v1532 = vpop.f32.mrf.mxu0
      %v1533 = vadd.f32 0.0, %v1532
      %v1534 = vpop.f32.mrf.mxu0
      %1535 = vmatprep.mubr.bf16.mxu0 0
      %1536 = vmatmul.mubr.bf16.gmra.mxu0 %v1334
      %v1537 = vpop.f32.mrf.mxu0
      %v1538 = vadd.f32 0.0, %v1537
      %v1539 = vpop.f32.mrf.mxu0
      %v1540 = vpop.f32.mrf.mxu0
      %v1541 = vadd.f32 0.0, %v1540
      %v1542 = vpop.f32.mrf.mxu0
      %1543 = vmatprep.mubr.bf16.mxu0 0
      %1544 = vmatmul.mubr.bf16.gmra.mxu0 %v1335
      %v1545 = vpop.f32.mrf.mxu0
      %v1546 = vadd.f32 0.0, %v1545
      %v1547 = vpop.f32.mrf.mxu0
      %v1548 = vpop.f32.mrf.mxu0
      %v1549 = vadd.f32 0.0, %v1548
      %v1550 = vpop.f32.mrf.mxu0
      %1551 = vdwg.mxu0
      %v1552 = vadd.f32 %v1270, %v1434
      %v1553 = vadd.f32 %v1271, %v1437
      %v1554 = vadd.f32 %v1272, %v1442
      %v1555 = vadd.f32 %v1273, %v1445
      %v1556 = vadd.f32 %v1274, %v1450
      %v1557 = vadd.f32 %v1275, %v1453
      %v1558 = vadd.f32 %v1276, %v1458
      %v1559 = vadd.f32 %v1277, %v1461
      %v1560 = vadd.f32 %v1278, %v1466
      %v1561 = vadd.f32 %v1279, %v1469
      %v1562 = vadd.f32 %v1280, %v1474
      %v1563 = vadd.f32 %v1281, %v1477
      %v1564 = vadd.f32 %v1282, %v1482
      %v1565 = vadd.f32 %v1283, %v1485
      %v1566 = vadd.f32 %v1284, %v1490
      %v1567 = vadd.f32 %v1285, %v1493
      %v1568 = vadd.f32 %v1286, %v1498
      %v1569 = vadd.f32 %v1287, %v1501
      %v1570 = vadd.f32 %v1288, %v1506
      %v1571 = vadd.f32 %v1289, %v1509
      %v1572 = vadd.f32 %v1290, %v1514
      %v1573 = vadd.f32 %v1291, %v1517
      %v1574 = vadd.f32 %v1292, %v1522
      %v1575 = vadd.f32 %v1293, %v1525
      %v1576 = vadd.f32 %v1294, %v1530
      %v1577 = vadd.f32 %v1295, %v1533
      %v1578 = vadd.f32 %v1296, %v1538
      %v1579 = vadd.f32 %v1297, %v1541
      %v1580 = vadd.f32 %v1298, %v1546
      %v1581 = vadd.f32 %v1299, %v1549
      %s1582 = scalar_lea.vmem %s1, 256
      %v1583 = vld [vmem:[%s1582] sm:$0xf]
      %v1584 = vld [vmem:[%s1582 + $0x4] sm:$0xf]
      %v1585 = vld [vmem:[%s1582 + $0x8] sm:$0xf]
      %v1586 = vld [vmem:[%s1582 + $0xc] sm:$0xf]
      %v1587 = vld [vmem:[%s1582 + $0x10] sm:$0xf]
      %v1588 = vld [vmem:[%s1582 + $0x14] sm:$0xf]
      %v1589 = vld [vmem:[%s1582 + $0x18] sm:$0xf]
      %v1590 = vld [vmem:[%s1582 + $0x1c] sm:$0xf]
      %v1591 = vld [vmem:[%s1582 + $0x20] sm:$0xf]
      %v1592 = vld [vmem:[%s1582 + $0x24] sm:$0xf]
      %v1593 = vld [vmem:[%s1582 + $0x28] sm:$0xf]
      %v1594 = vld [vmem:[%s1582 + $0x2c] sm:$0xf]
      %v1595 = vld [vmem:[%s1582 + $0x30] sm:$0xf]
      %v1596 = vld [vmem:[%s1582 + $0x34] sm:$0xf]
      %v1597 = vld [vmem:[%s1582 + $0x38] sm:$0xf]
      %v1598 = vld [vmem:[%s1582 + $0x3c] sm:$0xf]
      %v1600 = vunpack.c.l.b16 %v333
      %v1601 = vpack.c.b16 %v1600, %v1600
      %v1603 = vshrl.u32 %v1321, 16
      %v1605 = vshll.u32 %v1321, 16
      %v1607 = vrot.slane %v1605, 1
      %v1608 = vor.u32 %v1603, %v1607
      %v1610 = vshll.u32 %v1322, 16
      %v1612 = vrot.slane %v1610, 1
      %v1613 = vsel %vm448, %v1608, %v1612
      %v1614 = vshrl.u32 %v1322, 16
      %v1616 = vor.u32 %v1614, %v1612
      %v1618 = vshll.u32 %v1323, 16
      %v1620 = vrot.slane %v1618, 1
      %v1621 = vsel %vm448, %v1616, %v1620
      %v1622 = vshrl.u32 %v1323, 16
      %v1624 = vor.u32 %v1622, %v1620
      %v1626 = vshll.u32 %v1324, 16
      %v1628 = vrot.slane %v1626, 1
      %v1629 = vsel %vm448, %v1624, %v1628
      %v1630 = vshrl.u32 %v1324, 16
      %v1632 = vor.u32 %v1630, %v1628
      %v1634 = vshll.u32 %v1325, 16
      %v1636 = vrot.slane %v1634, 1
      %v1637 = vsel %vm448, %v1632, %v1636
      %v1638 = vshrl.u32 %v1325, 16
      %v1640 = vor.u32 %v1638, %v1636
      %v1642 = vshll.u32 %v1326, 16
      %v1644 = vrot.slane %v1642, 1
      %v1645 = vsel %vm448, %v1640, %v1644
      %v1646 = vshrl.u32 %v1326, 16
      %v1648 = vor.u32 %v1646, %v1644
      %v1650 = vshll.u32 %v1327, 16
      %v1652 = vrot.slane %v1650, 1
      %v1653 = vsel %vm448, %v1648, %v1652
      %v1654 = vshrl.u32 %v1327, 16
      %v1656 = vor.u32 %v1654, %v1652
      %v1658 = vshll.u32 %v1328, 16
      %v1660 = vrot.slane %v1658, 1
      %v1661 = vsel %vm448, %v1656, %v1660
      %v1662 = vshrl.u32 %v1328, 16
      %v1664 = vor.u32 %v1662, %v1660
      %v1666 = vshll.u32 %v1329, 16
      %v1668 = vrot.slane %v1666, 1
      %v1669 = vsel %vm448, %v1664, %v1668
      %v1670 = vshrl.u32 %v1329, 16
      %v1672 = vor.u32 %v1670, %v1668
      %v1674 = vshll.u32 %v1330, 16
      %v1676 = vrot.slane %v1674, 1
      %v1677 = vsel %vm448, %v1672, %v1676
      %v1678 = vshrl.u32 %v1330, 16
      %v1680 = vor.u32 %v1678, %v1676
      %v1682 = vshll.u32 %v1331, 16
      %v1684 = vrot.slane %v1682, 1
      %v1685 = vsel %vm448, %v1680, %v1684
      %v1686 = vshrl.u32 %v1331, 16
      %v1688 = vor.u32 %v1686, %v1684
      %v1690 = vshll.u32 %v1332, 16
      %v1692 = vrot.slane %v1690, 1
      %v1693 = vsel %vm448, %v1688, %v1692
      %v1694 = vshrl.u32 %v1332, 16
      %v1696 = vor.u32 %v1694, %v1692
      %v1698 = vshll.u32 %v1333, 16
      %v1700 = vrot.slane %v1698, 1
      %v1701 = vsel %vm448, %v1696, %v1700
      %v1702 = vshrl.u32 %v1333, 16
      %v1704 = vor.u32 %v1702, %v1700
      %v1706 = vshll.u32 %v1334, 16
      %v1708 = vrot.slane %v1706, 1
      %v1709 = vsel %vm448, %v1704, %v1708
      %v1710 = vshrl.u32 %v1334, 16
      %v1712 = vor.u32 %v1710, %v1708
      %v1714 = vshll.u32 %v1335, 16
      %v1716 = vrot.slane %v1714, 1
      %v1717 = vsel %vm448, %v1712, %v1716
      %v1718 = vshrl.u32 %v1335, 16
      %v1720 = vor.u32 %v1718, %v1716
      %v1722 = vshll.u32 %v1601, 16
      %v1724 = vrot.slane %v1722, 1
      %v1725 = vsel %vm448, %v1720, %v1724
      %v1757 = vunpack.c.l.b16 %v1583
      %v1758 = vunpack.c.l.b16 %v1584
      %v1759 = vunpack.c.l.b16 %v1585
      %v1760 = vunpack.c.l.b16 %v1586
      %v1761 = vunpack.c.l.b16 %v1587
      %v1762 = vunpack.c.l.b16 %v1588
      %v1763 = vunpack.c.l.b16 %v1589
      %v1764 = vunpack.c.l.b16 %v1590
      %v1765 = vunpack.c.l.b16 %v1591
      %v1766 = vunpack.c.l.b16 %v1592
      %v1767 = vunpack.c.l.b16 %v1593
      %v1768 = vunpack.c.l.b16 %v1594
      %v1769 = vunpack.c.l.b16 %v1595
      %v1770 = vunpack.c.l.b16 %v1596
      %v1771 = vunpack.c.l.b16 %v1597
      %v1772 = vunpack.c.l.b16 %v1598
      %v1773 = vpack.c.b16 %v1758, %v1757
      %v1774 = vpack.c.b16 %v1760, %v1759
      %v1775 = vpack.c.b16 %v1762, %v1761
      %v1776 = vpack.c.b16 %v1764, %v1763
      %v1777 = vpack.c.b16 %v1766, %v1765
      %v1778 = vpack.c.b16 %v1768, %v1767
      %v1779 = vpack.c.b16 %v1770, %v1769
      %v1780 = vpack.c.b16 %v1772, %v1771
      %1789 = vmatprep.subr.bf16.mxu0 0
      %1790 = vmatpush1.bf16.msra.mxu0 %v1780
      %1791 = vmatprep.subr.bf16.mxu0 0
      %1792 = vmatpush1.bf16.msra.mxu0 %v1779
      %1793 = vmatprep.subr.bf16.mxu0 0
      %1794 = vmatpush1.bf16.msra.mxu0 %v1778
      %1795 = vmatprep.subr.bf16.mxu0 0
      %1796 = vmatpush1.bf16.msra.mxu0 %v1777
      %1797 = vmatprep.subr.bf16.mxu0 0
      %1798 = vmatpush1.bf16.msra.mxu0 %v1776
      %1799 = vmatprep.subr.bf16.mxu0 0
      %1800 = vmatpush1.bf16.msra.mxu0 %v1775
      %1801 = vmatprep.subr.bf16.mxu0 0
      %1802 = vmatpush1.bf16.msra.mxu0 %v1774
      %1803 = vmatprep.subr.bf16.mxu0 0
      %1804 = vmatpush1.bf16.msra.mxu0 %v1773
      %1805 = vmatprep.subr.bf16.mxu0 0
      %1806 = vmatpush2.bf16.msra.mxu0 0
      %1807 = vmatprep.subr.bf16.mxu0 0
      %1808 = vmatpush2.bf16.msra.mxu0 0
      %1809 = vmatprep.subr.bf16.mxu0 0
      %1810 = vmatpush2.bf16.msra.mxu0 0
      %1811 = vmatprep.subr.bf16.mxu0 0
      %1812 = vmatpush2.bf16.msra.mxu0 0
      %1813 = vmatprep.subr.bf16.mxu0 0
      %1814 = vmatpush2.bf16.msra.mxu0 0
      %1815 = vmatprep.subr.bf16.mxu0 0
      %1816 = vmatpush2.bf16.msra.mxu0 0
      %1817 = vmatprep.subr.bf16.mxu0 0
      %1818 = vmatpush2.bf16.msra.mxu0 0
      %1819 = vmatprep.subr.bf16.mxu0 0
      %1820 = vmatpush2.bf16.msra.mxu0 0
      %1821 = vmatprep.mubr.bf16.mxu0 0
      %1822 = vmatmul.mubr.bf16.gmra.mxu0 %v1613
      %v1823 = vpop.f32.mrf.mxu0
      %v1824 = vadd.f32 0.0, %v1823
      %v1825 = vpop.f32.mrf.mxu0
      %v1826 = vpop.f32.mrf.mxu0
      %v1827 = vadd.f32 0.0, %v1826
      %v1828 = vpop.f32.mrf.mxu0
      %1829 = vmatprep.mubr.bf16.mxu0 0
      %1830 = vmatmul.mubr.bf16.gmra.mxu0 %v1621
      %v1831 = vpop.f32.mrf.mxu0
      %v1832 = vadd.f32 0.0, %v1831
      %v1833 = vpop.f32.mrf.mxu0
      %v1834 = vpop.f32.mrf.mxu0
      %v1835 = vadd.f32 0.0, %v1834
      %v1836 = vpop.f32.mrf.mxu0
      %1837 = vmatprep.mubr.bf16.mxu0 0
      %1838 = vmatmul.mubr.bf16.gmra.mxu0 %v1629
      %v1839 = vpop.f32.mrf.mxu0
      %v1840 = vadd.f32 0.0, %v1839
      %v1841 = vpop.f32.mrf.mxu0
      %v1842 = vpop.f32.mrf.mxu0
      %v1843 = vadd.f32 0.0, %v1842
      %v1844 = vpop.f32.mrf.mxu0
      %1845 = vmatprep.mubr.bf16.mxu0 0
      %1846 = vmatmul.mubr.bf16.gmra.mxu0 %v1637
      %v1847 = vpop.f32.mrf.mxu0
      %v1848 = vadd.f32 0.0, %v1847
      %v1849 = vpop.f32.mrf.mxu0
      %v1850 = vpop.f32.mrf.mxu0
      %v1851 = vadd.f32 0.0, %v1850
      %v1852 = vpop.f32.mrf.mxu0
      %1853 = vmatprep.mubr.bf16.mxu0 0
      %1854 = vmatmul.mubr.bf16.gmra.mxu0 %v1645
      %v1855 = vpop.f32.mrf.mxu0
      %v1856 = vadd.f32 0.0, %v1855
      %v1857 = vpop.f32.mrf.mxu0
      %v1858 = vpop.f32.mrf.mxu0
      %v1859 = vadd.f32 0.0, %v1858
      %v1860 = vpop.f32.mrf.mxu0
      %1861 = vmatprep.mubr.bf16.mxu0 0
      %1862 = vmatmul.mubr.bf16.gmra.mxu0 %v1653
      %v1863 = vpop.f32.mrf.mxu0
      %v1864 = vadd.f32 0.0, %v1863
      %v1865 = vpop.f32.mrf.mxu0
      %v1866 = vpop.f32.mrf.mxu0
      %v1867 = vadd.f32 0.0, %v1866
      %v1868 = vpop.f32.mrf.mxu0
      %1869 = vmatprep.mubr.bf16.mxu0 0
      %1870 = vmatmul.mubr.bf16.gmra.mxu0 %v1661
      %v1871 = vpop.f32.mrf.mxu0
      %v1872 = vadd.f32 0.0, %v1871
      %v1873 = vpop.f32.mrf.mxu0
      %v1874 = vpop.f32.mrf.mxu0
      %v1875 = vadd.f32 0.0, %v1874
      %v1876 = vpop.f32.mrf.mxu0
      %1877 = vmatprep.mubr.bf16.mxu0 0
      %1878 = vmatmul.mubr.bf16.gmra.mxu0 %v1669
      %v1879 = vpop.f32.mrf.mxu0
      %v1880 = vadd.f32 0.0, %v1879
      %v1881 = vpop.f32.mrf.mxu0
      %v1882 = vpop.f32.mrf.mxu0
      %v1883 = vadd.f32 0.0, %v1882
      %v1884 = vpop.f32.mrf.mxu0
      %1885 = vmatprep.mubr.bf16.mxu0 0
      %1886 = vmatmul.mubr.bf16.gmra.mxu0 %v1677
      %v1887 = vpop.f32.mrf.mxu0
      %v1888 = vadd.f32 0.0, %v1887
      %v1889 = vpop.f32.mrf.mxu0
      %v1890 = vpop.f32.mrf.mxu0
      %v1891 = vadd.f32 0.0, %v1890
      %v1892 = vpop.f32.mrf.mxu0
      %1893 = vmatprep.mubr.bf16.mxu0 0
      %1894 = vmatmul.mubr.bf16.gmra.mxu0 %v1685
      %v1895 = vpop.f32.mrf.mxu0
      %v1896 = vadd.f32 0.0, %v1895
      %v1897 = vpop.f32.mrf.mxu0
      %v1898 = vpop.f32.mrf.mxu0
      %v1899 = vadd.f32 0.0, %v1898
      %v1900 = vpop.f32.mrf.mxu0
      %1901 = vmatprep.mubr.bf16.mxu0 0
      %1902 = vmatmul.mubr.bf16.gmra.mxu0 %v1693
      %v1903 = vpop.f32.mrf.mxu0
      %v1904 = vadd.f32 0.0, %v1903
      %v1905 = vpop.f32.mrf.mxu0
      %v1906 = vpop.f32.mrf.mxu0
      %v1907 = vadd.f32 0.0, %v1906
      %v1908 = vpop.f32.mrf.mxu0
      %1909 = vmatprep.mubr.bf16.mxu0 0
      %1910 = vmatmul.mubr.bf16.gmra.mxu0 %v1701
      %v1911 = vpop.f32.mrf.mxu0
      %v1912 = vadd.f32 0.0, %v1911
      %v1913 = vpop.f32.mrf.mxu0
      %v1914 = vpop.f32.mrf.mxu0
      %v1915 = vadd.f32 0.0, %v1914
      %v1916 = vpop.f32.mrf.mxu0
      %1917 = vmatprep.mubr.bf16.mxu0 0
      %1918 = vmatmul.mubr.bf16.gmra.mxu0 %v1709
      %v1919 = vpop.f32.mrf.mxu0
      %v1920 = vadd.f32 0.0, %v1919
      %v1921 = vpop.f32.mrf.mxu0
      %v1922 = vpop.f32.mrf.mxu0
      %v1923 = vadd.f32 0.0, %v1922
      %v1924 = vpop.f32.mrf.mxu0
      %1925 = vmatprep.mubr.bf16.mxu0 0
      %1926 = vmatmul.mubr.bf16.gmra.mxu0 %v1717
      %v1927 = vpop.f32.mrf.mxu0
      %v1928 = vadd.f32 0.0, %v1927
      %v1929 = vpop.f32.mrf.mxu0
      %v1930 = vpop.f32.mrf.mxu0
      %v1931 = vadd.f32 0.0, %v1930
      %v1932 = vpop.f32.mrf.mxu0
      %1933 = vmatprep.mubr.bf16.mxu0 0
      %1934 = vmatmul.mubr.bf16.gmra.mxu0 %v1725
      %v1935 = vpop.f32.mrf.mxu0
      %v1936 = vadd.f32 0.0, %v1935
      %v1937 = vpop.f32.mrf.mxu0
      %v1938 = vpop.f32.mrf.mxu0
      %v1939 = vadd.f32 0.0, %v1938
      %v1940 = vpop.f32.mrf.mxu0
      %1941 = vdwg.mxu0
      %v1942 = vadd.f32 %v1552, %v1824
      %v1943 = vadd.f32 %v1553, %v1827
      %v1944 = vadd.f32 %v1554, %v1832
      %v1945 = vadd.f32 %v1555, %v1835
      %v1946 = vadd.f32 %v1556, %v1840
      %v1947 = vadd.f32 %v1557, %v1843
      %v1948 = vadd.f32 %v1558, %v1848
      %v1949 = vadd.f32 %v1559, %v1851
      %v1950 = vadd.f32 %v1560, %v1856
      %v1951 = vadd.f32 %v1561, %v1859
      %v1952 = vadd.f32 %v1562, %v1864
      %v1953 = vadd.f32 %v1563, %v1867
      %v1954 = vadd.f32 %v1564, %v1872
      %v1955 = vadd.f32 %v1565, %v1875
      %v1956 = vadd.f32 %v1566, %v1880
      %v1957 = vadd.f32 %v1567, %v1883
      %v1958 = vadd.f32 %v1568, %v1888
      %v1959 = vadd.f32 %v1569, %v1891
      %v1960 = vadd.f32 %v1570, %v1896
      %v1961 = vadd.f32 %v1571, %v1899
      %v1962 = vadd.f32 %v1572, %v1904
      %v1963 = vadd.f32 %v1573, %v1907
      %v1964 = vadd.f32 %v1574, %v1912
      %v1965 = vadd.f32 %v1575, %v1915
      %v1966 = vadd.f32 %v1576, %v1920
      %v1967 = vadd.f32 %v1577, %v1923
      %v1968 = vadd.f32 %v1578, %v1928
      %v1969 = vadd.f32 %v1579, %v1931
      %v1970 = vadd.f32 %v1580, %v1936
      %v1971 = vadd.f32 %v1581, %v1939
      %s1972 = scalar_lea.vmem %s1, 320
      %v1973 = vld [vmem:[%s1972] sm:$0xf]
      %v1974 = vld [vmem:[%s1972 + $0x4] sm:$0xf]
      %v1975 = vld [vmem:[%s1972 + $0x8] sm:$0xf]
      %v1976 = vld [vmem:[%s1972 + $0xc] sm:$0xf]
      %v1977 = vld [vmem:[%s1972 + $0x10] sm:$0xf]
      %v1978 = vld [vmem:[%s1972 + $0x14] sm:$0xf]
      %v1979 = vld [vmem:[%s1972 + $0x18] sm:$0xf]
      %v1980 = vld [vmem:[%s1972 + $0x1c] sm:$0xf]
      %v1981 = vld [vmem:[%s1972 + $0x20] sm:$0xf]
      %v1982 = vld [vmem:[%s1972 + $0x24] sm:$0xf]
      %v1983 = vld [vmem:[%s1972 + $0x28] sm:$0xf]
      %v1984 = vld [vmem:[%s1972 + $0x2c] sm:$0xf]
      %v1985 = vld [vmem:[%s1972 + $0x30] sm:$0xf]
      %v1986 = vld [vmem:[%s1972 + $0x34] sm:$0xf]
      %v1987 = vld [vmem:[%s1972 + $0x38] sm:$0xf]
      %v1988 = vld [vmem:[%s1972 + $0x3c] sm:$0xf]
      %v1989 = vrot.slane %v1321, 1
      %v1990 = vrot.slane %v1322, 1
      %v1991 = vsel %vm1022, %v1989, %v1990
      %v1992 = vrot.slane %v1323, 1
      %v1993 = vsel %vm1022, %v1990, %v1992
      %v1994 = vrot.slane %v1324, 1
      %v1995 = vsel %vm1022, %v1992, %v1994
      %v1996 = vrot.slane %v1325, 1
      %v1997 = vsel %vm1022, %v1994, %v1996
      %v1998 = vrot.slane %v1326, 1
      %v1999 = vsel %vm1022, %v1996, %v1998
      %v2000 = vrot.slane %v1327, 1
      %v2001 = vsel %vm1022, %v1998, %v2000
      %v2002 = vrot.slane %v1328, 1
      %v2003 = vsel %vm1022, %v2000, %v2002
      %v2004 = vrot.slane %v1329, 1
      %v2005 = vsel %vm1022, %v2002, %v2004
      %v2006 = vrot.slane %v1330, 1
      %v2007 = vsel %vm1022, %v2004, %v2006
      %v2008 = vrot.slane %v1331, 1
      %v2009 = vsel %vm1022, %v2006, %v2008
      %v2010 = vrot.slane %v1332, 1
      %v2011 = vsel %vm1022, %v2008, %v2010
      %v2012 = vrot.slane %v1333, 1
      %v2013 = vsel %vm1022, %v2010, %v2012
      %v2014 = vrot.slane %v1334, 1
      %v2015 = vsel %vm1022, %v2012, %v2014
      %v2016 = vrot.slane %v1335, 1
      %v2017 = vsel %vm1022, %v2014, %v2016
      %v2018 = vrot.slane %v1601, 1
      %v2019 = vsel %vm1022, %v2016, %v2018
      %v2051 = vunpack.c.l.b16 %v1973
      %v2052 = vunpack.c.l.b16 %v1974
      %v2053 = vunpack.c.l.b16 %v1975
      %v2054 = vunpack.c.l.b16 %v1976
      %v2055 = vunpack.c.l.b16 %v1977
      %v2056 = vunpack.c.l.b16 %v1978
      %v2057 = vunpack.c.l.b16 %v1979
      %v2058 = vunpack.c.l.b16 %v1980
      %v2059 = vunpack.c.l.b16 %v1981
      %v2060 = vunpack.c.l.b16 %v1982
      %v2061 = vunpack.c.l.b16 %v1983
      %v2062 = vunpack.c.l.b16 %v1984
      %v2063 = vunpack.c.l.b16 %v1985
      %v2064 = vunpack.c.l.b16 %v1986
      %v2065 = vunpack.c.l.b16 %v1987
      %v2066 = vunpack.c.l.b16 %v1988
      %v2067 = vpack.c.b16 %v2052, %v2051
      %v2068 = vpack.c.b16 %v2054, %v2053
      %v2069 = vpack.c.b16 %v2056, %v2055
      %v2070 = vpack.c.b16 %v2058, %v2057
      %v2071 = vpack.c.b16 %v2060, %v2059
      %v2072 = vpack.c.b16 %v2062, %v2061
      %v2073 = vpack.c.b16 %v2064, %v2063
      %v2074 = vpack.c.b16 %v2066, %v2065
      %2083 = vmatprep.subr.bf16.mxu0 0
      %2084 = vmatpush1.bf16.msra.mxu0 %v2074
      %2085 = vmatprep.subr.bf16.mxu0 0
      %2086 = vmatpush1.bf16.msra.mxu0 %v2073
      %2087 = vmatprep.subr.bf16.mxu0 0
      %2088 = vmatpush1.bf16.msra.mxu0 %v2072
      %2089 = vmatprep.subr.bf16.mxu0 0
      %2090 = vmatpush1.bf16.msra.mxu0 %v2071
      %2091 = vmatprep.subr.bf16.mxu0 0
      %2092 = vmatpush1.bf16.msra.mxu0 %v2070
      %2093 = vmatprep.subr.bf16.mxu0 0
      %2094 = vmatpush1.bf16.msra.mxu0 %v2069
      %2095 = vmatprep.subr.bf16.mxu0 0
      %2096 = vmatpush1.bf16.msra.mxu0 %v2068
      %2097 = vmatprep.subr.bf16.mxu0 0
      %2098 = vmatpush1.bf16.msra.mxu0 %v2067
      %2099 = vmatprep.subr.bf16.mxu0 0
      %2100 = vmatpush2.bf16.msra.mxu0 0
      %2101 = vmatprep.subr.bf16.mxu0 0
      %2102 = vmatpush2.bf16.msra.mxu0 0
      %2103 = vmatprep.subr.bf16.mxu0 0
      %2104 = vmatpush2.bf16.msra.mxu0 0
      %2105 = vmatprep.subr.bf16.mxu0 0
      %2106 = vmatpush2.bf16.msra.mxu0 0
      %2107 = vmatprep.subr.bf16.mxu0 0
      %2108 = vmatpush2.bf16.msra.mxu0 0
      %2109 = vmatprep.subr.bf16.mxu0 0
      %2110 = vmatpush2.bf16.msra.mxu0 0
      %2111 = vmatprep.subr.bf16.mxu0 0
      %2112 = vmatpush2.bf16.msra.mxu0 0
      %2113 = vmatprep.subr.bf16.mxu0 0
      %2114 = vmatpush2.bf16.msra.mxu0 0
      %2115 = vmatprep.mubr.bf16.mxu0 0
      %2116 = vmatmul.mubr.bf16.gmra.mxu0 %v1991
      %v2117 = vpop.f32.mrf.mxu0
      %v2118 = vadd.f32 0.0, %v2117
      %v2119 = vpop.f32.mrf.mxu0
      %v2120 = vpop.f32.mrf.mxu0
      %v2121 = vadd.f32 0.0, %v2120
      %v2122 = vpop.f32.mrf.mxu0
      %2123 = vmatprep.mubr.bf16.mxu0 0
      %2124 = vmatmul.mubr.bf16.gmra.mxu0 %v1993
      %v2125 = vpop.f32.mrf.mxu0
      %v2126 = vadd.f32 0.0, %v2125
      %v2127 = vpop.f32.mrf.mxu0
      %v2128 = vpop.f32.mrf.mxu0
      %v2129 = vadd.f32 0.0, %v2128
      %v2130 = vpop.f32.mrf.mxu0
      %2131 = vmatprep.mubr.bf16.mxu0 0
      %2132 = vmatmul.mubr.bf16.gmra.mxu0 %v1995
      %v2133 = vpop.f32.mrf.mxu0
      %v2134 = vadd.f32 0.0, %v2133
      %v2135 = vpop.f32.mrf.mxu0
      %v2136 = vpop.f32.mrf.mxu0
      %v2137 = vadd.f32 0.0, %v2136
      %v2138 = vpop.f32.mrf.mxu0
      %2139 = vmatprep.mubr.bf16.mxu0 0
      %2140 = vmatmul.mubr.bf16.gmra.mxu0 %v1997
      %v2141 = vpop.f32.mrf.mxu0
      %v2142 = vadd.f32 0.0, %v2141
      %v2143 = vpop.f32.mrf.mxu0
      %v2144 = vpop.f32.mrf.mxu0
      %v2145 = vadd.f32 0.0, %v2144
      %v2146 = vpop.f32.mrf.mxu0
      %2147 = vmatprep.mubr.bf16.mxu0 0
      %2148 = vmatmul.mubr.bf16.gmra.mxu0 %v1999
      %v2149 = vpop.f32.mrf.mxu0
      %v2150 = vadd.f32 0.0, %v2149
      %v2151 = vpop.f32.mrf.mxu0
      %v2152 = vpop.f32.mrf.mxu0
      %v2153 = vadd.f32 0.0, %v2152
      %v2154 = vpop.f32.mrf.mxu0
      %2155 = vmatprep.mubr.bf16.mxu0 0
      %2156 = vmatmul.mubr.bf16.gmra.mxu0 %v2001
      %v2157 = vpop.f32.mrf.mxu0
      %v2158 = vadd.f32 0.0, %v2157
      %v2159 = vpop.f32.mrf.mxu0
      %v2160 = vpop.f32.mrf.mxu0
      %v2161 = vadd.f32 0.0, %v2160
      %v2162 = vpop.f32.mrf.mxu0
      %2163 = vmatprep.mubr.bf16.mxu0 0
      %2164 = vmatmul.mubr.bf16.gmra.mxu0 %v2003
      %v2165 = vpop.f32.mrf.mxu0
      %v2166 = vadd.f32 0.0, %v2165
      %v2167 = vpop.f32.mrf.mxu0
      %v2168 = vpop.f32.mrf.mxu0
      %v2169 = vadd.f32 0.0, %v2168
      %v2170 = vpop.f32.mrf.mxu0
      %2171 = vmatprep.mubr.bf16.mxu0 0
      %2172 = vmatmul.mubr.bf16.gmra.mxu0 %v2005
      %v2173 = vpop.f32.mrf.mxu0
      %v2174 = vadd.f32 0.0, %v2173
      %v2175 = vpop.f32.mrf.mxu0
      %v2176 = vpop.f32.mrf.mxu0
      %v2177 = vadd.f32 0.0, %v2176
      %v2178 = vpop.f32.mrf.mxu0
      %2179 = vmatprep.mubr.bf16.mxu0 0
      %2180 = vmatmul.mubr.bf16.gmra.mxu0 %v2007
      %v2181 = vpop.f32.mrf.mxu0
      %v2182 = vadd.f32 0.0, %v2181
      %v2183 = vpop.f32.mrf.mxu0
      %v2184 = vpop.f32.mrf.mxu0
      %v2185 = vadd.f32 0.0, %v2184
      %v2186 = vpop.f32.mrf.mxu0
      %2187 = vmatprep.mubr.bf16.mxu0 0
      %2188 = vmatmul.mubr.bf16.gmra.mxu0 %v2009
      %v2189 = vpop.f32.mrf.mxu0
      %v2190 = vadd.f32 0.0, %v2189
      %v2191 = vpop.f32.mrf.mxu0
      %v2192 = vpop.f32.mrf.mxu0
      %v2193 = vadd.f32 0.0, %v2192
      %v2194 = vpop.f32.mrf.mxu0
      %2195 = vmatprep.mubr.bf16.mxu0 0
      %2196 = vmatmul.mubr.bf16.gmra.mxu0 %v2011
      %v2197 = vpop.f32.mrf.mxu0
      %v2198 = vadd.f32 0.0, %v2197
      %v2199 = vpop.f32.mrf.mxu0
      %v2200 = vpop.f32.mrf.mxu0
      %v2201 = vadd.f32 0.0, %v2200
      %v2202 = vpop.f32.mrf.mxu0
      %2203 = vmatprep.mubr.bf16.mxu0 0
      %2204 = vmatmul.mubr.bf16.gmra.mxu0 %v2013
      %v2205 = vpop.f32.mrf.mxu0
      %v2206 = vadd.f32 0.0, %v2205
      %v2207 = vpop.f32.mrf.mxu0
      %v2208 = vpop.f32.mrf.mxu0
      %v2209 = vadd.f32 0.0, %v2208
      %v2210 = vpop.f32.mrf.mxu0
      %2211 = vmatprep.mubr.bf16.mxu0 0
      %2212 = vmatmul.mubr.bf16.gmra.mxu0 %v2015
      %v2213 = vpop.f32.mrf.mxu0
      %v2214 = vadd.f32 0.0, %v2213
      %v2215 = vpop.f32.mrf.mxu0
      %v2216 = vpop.f32.mrf.mxu0
      %v2217 = vadd.f32 0.0, %v2216
      %v2218 = vpop.f32.mrf.mxu0
      %2219 = vmatprep.mubr.bf16.mxu0 0
      %2220 = vmatmul.mubr.bf16.gmra.mxu0 %v2017
      %v2221 = vpop.f32.mrf.mxu0
      %v2222 = vadd.f32 0.0, %v2221
      %v2223 = vpop.f32.mrf.mxu0
      %v2224 = vpop.f32.mrf.mxu0
      %v2225 = vadd.f32 0.0, %v2224
      %v2226 = vpop.f32.mrf.mxu0
      %2227 = vmatprep.mubr.bf16.mxu0 0
      %2228 = vmatmul.mubr.bf16.gmra.mxu0 %v2019
      %v2229 = vpop.f32.mrf.mxu0
      %v2230 = vadd.f32 0.0, %v2229
      %v2231 = vpop.f32.mrf.mxu0
      %v2232 = vpop.f32.mrf.mxu0
      %v2233 = vadd.f32 0.0, %v2232
      %v2234 = vpop.f32.mrf.mxu0
      %2235 = vdwg.mxu0
      %v2236 = vadd.f32 %v1942, %v2118
      %v2237 = vadd.f32 %v1943, %v2121
      %v2238 = vadd.f32 %v1944, %v2126
      %v2239 = vadd.f32 %v1945, %v2129
      %v2240 = vadd.f32 %v1946, %v2134
      %v2241 = vadd.f32 %v1947, %v2137
      %v2242 = vadd.f32 %v1948, %v2142
      %v2243 = vadd.f32 %v1949, %v2145
      %v2244 = vadd.f32 %v1950, %v2150
      %v2245 = vadd.f32 %v1951, %v2153
      %v2246 = vadd.f32 %v1952, %v2158
      %v2247 = vadd.f32 %v1953, %v2161
      %v2248 = vadd.f32 %v1954, %v2166
      %v2249 = vadd.f32 %v1955, %v2169
      %v2250 = vadd.f32 %v1956, %v2174
      %v2251 = vadd.f32 %v1957, %v2177
      %v2252 = vadd.f32 %v1958, %v2182
      %v2253 = vadd.f32 %v1959, %v2185
      %v2254 = vadd.f32 %v1960, %v2190
      %v2255 = vadd.f32 %v1961, %v2193
      %v2256 = vadd.f32 %v1962, %v2198
      %v2257 = vadd.f32 %v1963, %v2201
      %v2258 = vadd.f32 %v1964, %v2206
      %v2259 = vadd.f32 %v1965, %v2209
      %v2260 = vadd.f32 %v1966, %v2214
      %v2261 = vadd.f32 %v1967, %v2217
      %v2262 = vadd.f32 %v1968, %v2222
      %v2263 = vadd.f32 %v1969, %v2225
      %v2264 = vadd.f32 %v1970, %v2230
      %v2265 = vadd.f32 %v1971, %v2233
      %s2266 = scalar_lea.vmem %s1, 384
      %v2267 = vld [vmem:[%s2266] sm:$0xf]
      %v2268 = vld [vmem:[%s2266 + $0x4] sm:$0xf]
      %v2269 = vld [vmem:[%s2266 + $0x8] sm:$0xf]
      %v2270 = vld [vmem:[%s2266 + $0xc] sm:$0xf]
      %v2271 = vld [vmem:[%s2266 + $0x10] sm:$0xf]
      %v2272 = vld [vmem:[%s2266 + $0x14] sm:$0xf]
      %v2273 = vld [vmem:[%s2266 + $0x18] sm:$0xf]
      %v2274 = vld [vmem:[%s2266 + $0x1c] sm:$0xf]
      %v2275 = vld [vmem:[%s2266 + $0x20] sm:$0xf]
      %v2276 = vld [vmem:[%s2266 + $0x24] sm:$0xf]
      %v2277 = vld [vmem:[%s2266 + $0x28] sm:$0xf]
      %v2278 = vld [vmem:[%s2266 + $0x2c] sm:$0xf]
      %v2279 = vld [vmem:[%s2266 + $0x30] sm:$0xf]
      %v2280 = vld [vmem:[%s2266 + $0x34] sm:$0xf]
      %v2281 = vld [vmem:[%s2266 + $0x38] sm:$0xf]
      %v2282 = vld [vmem:[%s2266 + $0x3c] sm:$0xf]
      %v2285 = vunpack.c.l.b16 %v334
      %v2286 = vunpack.c.l.b16 %v335
      %v2287 = vpack.c.b16 %v1319, %v431
      %v2288 = vpack.c.b16 %v1600, %v1320
      %v2289 = vpack.c.b16 %v2286, %v2285
      %v2309 = vunpack.c.l.b16 %v2267
      %v2310 = vunpack.c.l.b16 %v2268
      %v2311 = vunpack.c.l.b16 %v2269
      %v2312 = vunpack.c.l.b16 %v2270
      %v2313 = vunpack.c.l.b16 %v2271
      %v2314 = vunpack.c.l.b16 %v2272
      %v2315 = vunpack.c.l.b16 %v2273
      %v2316 = vunpack.c.l.b16 %v2274
      %v2317 = vunpack.c.l.b16 %v2275
      %v2318 = vunpack.c.l.b16 %v2276
      %v2319 = vunpack.c.l.b16 %v2277
      %v2320 = vunpack.c.l.b16 %v2278
      %v2321 = vunpack.c.l.b16 %v2279
      %v2322 = vunpack.c.l.b16 %v2280
      %v2323 = vunpack.c.l.b16 %v2281
      %v2324 = vunpack.c.l.b16 %v2282
      %v2325 = vpack.c.b16 %v2310, %v2309
      %v2326 = vpack.c.b16 %v2312, %v2311
      %v2327 = vpack.c.b16 %v2314, %v2313
      %v2328 = vpack.c.b16 %v2316, %v2315
      %v2329 = vpack.c.b16 %v2318, %v2317
      %v2330 = vpack.c.b16 %v2320, %v2319
      %v2331 = vpack.c.b16 %v2322, %v2321
      %v2332 = vpack.c.b16 %v2324, %v2323
      %2341 = vmatprep.subr.bf16.mxu0 0
      %2342 = vmatpush1.bf16.msra.mxu0 %v2332
      %2343 = vmatprep.subr.bf16.mxu0 0
      %2344 = vmatpush1.bf16.msra.mxu0 %v2331
      %2345 = vmatprep.subr.bf16.mxu0 0
      %2346 = vmatpush1.bf16.msra.mxu0 %v2330
      %2347 = vmatprep.subr.bf16.mxu0 0
      %2348 = vmatpush1.bf16.msra.mxu0 %v2329
      %2349 = vmatprep.subr.bf16.mxu0 0
      %2350 = vmatpush1.bf16.msra.mxu0 %v2328
      %2351 = vmatprep.subr.bf16.mxu0 0
      %2352 = vmatpush1.bf16.msra.mxu0 %v2327
      %2353 = vmatprep.subr.bf16.mxu0 0
      %2354 = vmatpush1.bf16.msra.mxu0 %v2326
      %2355 = vmatprep.subr.bf16.mxu0 0
      %2356 = vmatpush1.bf16.msra.mxu0 %v2325
      %2357 = vmatprep.subr.bf16.mxu0 0
      %2358 = vmatpush2.bf16.msra.mxu0 0
      %2359 = vmatprep.subr.bf16.mxu0 0
      %2360 = vmatpush2.bf16.msra.mxu0 0
      %2361 = vmatprep.subr.bf16.mxu0 0
      %2362 = vmatpush2.bf16.msra.mxu0 0
      %2363 = vmatprep.subr.bf16.mxu0 0
      %2364 = vmatpush2.bf16.msra.mxu0 0
      %2365 = vmatprep.subr.bf16.mxu0 0
      %2366 = vmatpush2.bf16.msra.mxu0 0
      %2367 = vmatprep.subr.bf16.mxu0 0
      %2368 = vmatpush2.bf16.msra.mxu0 0
      %2369 = vmatprep.subr.bf16.mxu0 0
      %2370 = vmatpush2.bf16.msra.mxu0 0
      %2371 = vmatprep.subr.bf16.mxu0 0
      %2372 = vmatpush2.bf16.msra.mxu0 0
      %2373 = vmatprep.mubr.bf16.mxu0 0
      %2374 = vmatmul.mubr.bf16.gmra.mxu0 %v435
      %v2375 = vpop.f32.mrf.mxu0
      %v2376 = vadd.f32 0.0, %v2375
      %v2377 = vpop.f32.mrf.mxu0
      %v2378 = vpop.f32.mrf.mxu0
      %v2379 = vadd.f32 0.0, %v2378
      %v2380 = vpop.f32.mrf.mxu0
      %2381 = vmatprep.mubr.bf16.mxu0 0
      %2382 = vmatmul.mubr.bf16.gmra.mxu0 %v436
      %v2383 = vpop.f32.mrf.mxu0
      %v2384 = vadd.f32 0.0, %v2383
      %v2385 = vpop.f32.mrf.mxu0
      %v2386 = vpop.f32.mrf.mxu0
      %v2387 = vadd.f32 0.0, %v2386
      %v2388 = vpop.f32.mrf.mxu0
      %2389 = vmatprep.mubr.bf16.mxu0 0
      %2390 = vmatmul.mubr.bf16.gmra.mxu0 %v437
      %v2391 = vpop.f32.mrf.mxu0
      %v2392 = vadd.f32 0.0, %v2391
      %v2393 = vpop.f32.mrf.mxu0
      %v2394 = vpop.f32.mrf.mxu0
      %v2395 = vadd.f32 0.0, %v2394
      %v2396 = vpop.f32.mrf.mxu0
      %2397 = vmatprep.mubr.bf16.mxu0 0
      %2398 = vmatmul.mubr.bf16.gmra.mxu0 %v438
      %v2399 = vpop.f32.mrf.mxu0
      %v2400 = vadd.f32 0.0, %v2399
      %v2401 = vpop.f32.mrf.mxu0
      %v2402 = vpop.f32.mrf.mxu0
      %v2403 = vadd.f32 0.0, %v2402
      %v2404 = vpop.f32.mrf.mxu0
      %2405 = vmatprep.mubr.bf16.mxu0 0
      %2406 = vmatmul.mubr.bf16.gmra.mxu0 %v439
      %v2407 = vpop.f32.mrf.mxu0
      %v2408 = vadd.f32 0.0, %v2407
      %v2409 = vpop.f32.mrf.mxu0
      %v2410 = vpop.f32.mrf.mxu0
      %v2411 = vadd.f32 0.0, %v2410
      %v2412 = vpop.f32.mrf.mxu0
      %2413 = vmatprep.mubr.bf16.mxu0 0
      %2414 = vmatmul.mubr.bf16.gmra.mxu0 %v440
      %v2415 = vpop.f32.mrf.mxu0
      %v2416 = vadd.f32 0.0, %v2415
      %v2417 = vpop.f32.mrf.mxu0
      %v2418 = vpop.f32.mrf.mxu0
      %v2419 = vadd.f32 0.0, %v2418
      %v2420 = vpop.f32.mrf.mxu0
      %2421 = vmatprep.mubr.bf16.mxu0 0
      %2422 = vmatmul.mubr.bf16.gmra.mxu0 %v441
      %v2423 = vpop.f32.mrf.mxu0
      %v2424 = vadd.f32 0.0, %v2423
      %v2425 = vpop.f32.mrf.mxu0
      %v2426 = vpop.f32.mrf.mxu0
      %v2427 = vadd.f32 0.0, %v2426
      %v2428 = vpop.f32.mrf.mxu0
      %2429 = vmatprep.mubr.bf16.mxu0 0
      %2430 = vmatmul.mubr.bf16.gmra.mxu0 %v442
      %v2431 = vpop.f32.mrf.mxu0
      %v2432 = vadd.f32 0.0, %v2431
      %v2433 = vpop.f32.mrf.mxu0
      %v2434 = vpop.f32.mrf.mxu0
      %v2435 = vadd.f32 0.0, %v2434
      %v2436 = vpop.f32.mrf.mxu0
      %2437 = vmatprep.mubr.bf16.mxu0 0
      %2438 = vmatmul.mubr.bf16.gmra.mxu0 %v443
      %v2439 = vpop.f32.mrf.mxu0
      %v2440 = vadd.f32 0.0, %v2439
      %v2441 = vpop.f32.mrf.mxu0
      %v2442 = vpop.f32.mrf.mxu0
      %v2443 = vadd.f32 0.0, %v2442
      %v2444 = vpop.f32.mrf.mxu0
      %2445 = vmatprep.mubr.bf16.mxu0 0
      %2446 = vmatmul.mubr.bf16.gmra.mxu0 %v444
      %v2447 = vpop.f32.mrf.mxu0
      %v2448 = vadd.f32 0.0, %v2447
      %v2449 = vpop.f32.mrf.mxu0
      %v2450 = vpop.f32.mrf.mxu0
      %v2451 = vadd.f32 0.0, %v2450
      %v2452 = vpop.f32.mrf.mxu0
      %2453 = vmatprep.mubr.bf16.mxu0 0
      %2454 = vmatmul.mubr.bf16.gmra.mxu0 %v445
      %v2455 = vpop.f32.mrf.mxu0
      %v2456 = vadd.f32 0.0, %v2455
      %v2457 = vpop.f32.mrf.mxu0
      %v2458 = vpop.f32.mrf.mxu0
      %v2459 = vadd.f32 0.0, %v2458
      %v2460 = vpop.f32.mrf.mxu0
      %2461 = vmatprep.mubr.bf16.mxu0 0
      %2462 = vmatmul.mubr.bf16.gmra.mxu0 %v446
      %v2463 = vpop.f32.mrf.mxu0
      %v2464 = vadd.f32 0.0, %v2463
      %v2465 = vpop.f32.mrf.mxu0
      %v2466 = vpop.f32.mrf.mxu0
      %v2467 = vadd.f32 0.0, %v2466
      %v2468 = vpop.f32.mrf.mxu0
      %2469 = vmatprep.mubr.bf16.mxu0 0
      %2470 = vmatmul.mubr.bf16.gmra.mxu0 %v2287
      %v2471 = vpop.f32.mrf.mxu0
      %v2472 = vadd.f32 0.0, %v2471
      %v2473 = vpop.f32.mrf.mxu0
      %v2474 = vpop.f32.mrf.mxu0
      %v2475 = vadd.f32 0.0, %v2474
      %v2476 = vpop.f32.mrf.mxu0
      %2477 = vmatprep.mubr.bf16.mxu0 0
      %2478 = vmatmul.mubr.bf16.gmra.mxu0 %v2288
      %v2479 = vpop.f32.mrf.mxu0
      %v2480 = vadd.f32 0.0, %v2479
      %v2481 = vpop.f32.mrf.mxu0
      %v2482 = vpop.f32.mrf.mxu0
      %v2483 = vadd.f32 0.0, %v2482
      %v2484 = vpop.f32.mrf.mxu0
      %2485 = vmatprep.mubr.bf16.mxu0 0
      %2486 = vmatmul.mubr.bf16.gmra.mxu0 %v2289
      %v2487 = vpop.f32.mrf.mxu0
      %v2488 = vadd.f32 0.0, %v2487
      %v2489 = vpop.f32.mrf.mxu0
      %v2490 = vpop.f32.mrf.mxu0
      %v2491 = vadd.f32 0.0, %v2490
      %v2492 = vpop.f32.mrf.mxu0
      %2493 = vdwg.mxu0
      %v2494 = vadd.f32 %v2236, %v2376
      %v2495 = vadd.f32 %v2237, %v2379
      %v2496 = vadd.f32 %v2238, %v2384
      %v2497 = vadd.f32 %v2239, %v2387
      %v2498 = vadd.f32 %v2240, %v2392
      %v2499 = vadd.f32 %v2241, %v2395
      %v2500 = vadd.f32 %v2242, %v2400
      %v2501 = vadd.f32 %v2243, %v2403
      %v2502 = vadd.f32 %v2244, %v2408
      %v2503 = vadd.f32 %v2245, %v2411
      %v2504 = vadd.f32 %v2246, %v2416
      %v2505 = vadd.f32 %v2247, %v2419
      %v2506 = vadd.f32 %v2248, %v2424
      %v2507 = vadd.f32 %v2249, %v2427
      %v2508 = vadd.f32 %v2250, %v2432
      %v2509 = vadd.f32 %v2251, %v2435
      %v2510 = vadd.f32 %v2252, %v2440
      %v2511 = vadd.f32 %v2253, %v2443
      %v2512 = vadd.f32 %v2254, %v2448
      %v2513 = vadd.f32 %v2255, %v2451
      %v2514 = vadd.f32 %v2256, %v2456
      %v2515 = vadd.f32 %v2257, %v2459
      %v2516 = vadd.f32 %v2258, %v2464
      %v2517 = vadd.f32 %v2259, %v2467
      %v2518 = vadd.f32 %v2260, %v2472
      %v2519 = vadd.f32 %v2261, %v2475
      %v2520 = vadd.f32 %v2262, %v2480
      %v2521 = vadd.f32 %v2263, %v2483
      %v2522 = vadd.f32 %v2264, %v2488
      %v2523 = vadd.f32 %v2265, %v2491
      %s2524 = scalar_lea.vmem %s1, 448
      %v2525 = vld [vmem:[%s2524] sm:$0xf]
      %v2526 = vld [vmem:[%s2524 + $0x4] sm:$0xf]
      %v2527 = vld [vmem:[%s2524 + $0x8] sm:$0xf]
      %v2528 = vld [vmem:[%s2524 + $0xc] sm:$0xf]
      %v2529 = vld [vmem:[%s2524 + $0x10] sm:$0xf]
      %v2530 = vld [vmem:[%s2524 + $0x14] sm:$0xf]
      %v2531 = vld [vmem:[%s2524 + $0x18] sm:$0xf]
      %v2532 = vld [vmem:[%s2524 + $0x1c] sm:$0xf]
      %v2533 = vld [vmem:[%s2524 + $0x20] sm:$0xf]
      %v2534 = vld [vmem:[%s2524 + $0x24] sm:$0xf]
      %v2535 = vld [vmem:[%s2524 + $0x28] sm:$0xf]
      %v2536 = vld [vmem:[%s2524 + $0x2c] sm:$0xf]
      %v2537 = vld [vmem:[%s2524 + $0x30] sm:$0xf]
      %v2538 = vld [vmem:[%s2524 + $0x34] sm:$0xf]
      %v2539 = vld [vmem:[%s2524 + $0x38] sm:$0xf]
      %v2540 = vld [vmem:[%s2524 + $0x3c] sm:$0xf]
      %v2542 = vunpack.c.l.b16 %v336
      %v2543 = vpack.c.b16 %v2542, %v2542
      %v2545 = vshll.u32 %v2287, 16
      %v2547 = vrot.slane %v2545, 1
      %v2548 = vsel %vm448, %v567, %v2547
      %v2549 = vshrl.u32 %v2287, 16
      %v2551 = vor.u32 %v2549, %v2547
      %v2553 = vshll.u32 %v2288, 16
      %v2555 = vrot.slane %v2553, 1
      %v2556 = vsel %vm448, %v2551, %v2555
      %v2557 = vshrl.u32 %v2288, 16
      %v2559 = vor.u32 %v2557, %v2555
      %v2561 = vshll.u32 %v2289, 16
      %v2563 = vrot.slane %v2561, 1
      %v2564 = vsel %vm448, %v2559, %v2563
      %v2565 = vshrl.u32 %v2289, 16
      %v2567 = vor.u32 %v2565, %v2563
      %v2569 = vshll.u32 %v2543, 16
      %v2571 = vrot.slane %v2569, 1
      %v2572 = vsel %vm448, %v2567, %v2571
      %v2593 = vunpack.c.l.b16 %v2525
      %v2594 = vunpack.c.l.b16 %v2526
      %v2595 = vunpack.c.l.b16 %v2527
      %v2596 = vunpack.c.l.b16 %v2528
      %v2597 = vunpack.c.l.b16 %v2529
      %v2598 = vunpack.c.l.b16 %v2530
      %v2599 = vunpack.c.l.b16 %v2531
      %v2600 = vunpack.c.l.b16 %v2532
      %v2601 = vunpack.c.l.b16 %v2533
      %v2602 = vunpack.c.l.b16 %v2534
      %v2603 = vunpack.c.l.b16 %v2535
      %v2604 = vunpack.c.l.b16 %v2536
      %v2605 = vunpack.c.l.b16 %v2537
      %v2606 = vunpack.c.l.b16 %v2538
      %v2607 = vunpack.c.l.b16 %v2539
      %v2608 = vunpack.c.l.b16 %v2540
      %v2609 = vpack.c.b16 %v2594, %v2593
      %v2610 = vpack.c.b16 %v2596, %v2595
      %v2611 = vpack.c.b16 %v2598, %v2597
      %v2612 = vpack.c.b16 %v2600, %v2599
      %v2613 = vpack.c.b16 %v2602, %v2601
      %v2614 = vpack.c.b16 %v2604, %v2603
      %v2615 = vpack.c.b16 %v2606, %v2605
      %v2616 = vpack.c.b16 %v2608, %v2607
      %2625 = vmatprep.subr.bf16.mxu0 0
      %2626 = vmatpush1.bf16.msra.mxu0 %v2616
      %2627 = vmatprep.subr.bf16.mxu0 0
      %2628 = vmatpush1.bf16.msra.mxu0 %v2615
      %2629 = vmatprep.subr.bf16.mxu0 0
      %2630 = vmatpush1.bf16.msra.mxu0 %v2614
      %2631 = vmatprep.subr.bf16.mxu0 0
      %2632 = vmatpush1.bf16.msra.mxu0 %v2613
      %2633 = vmatprep.subr.bf16.mxu0 0
      %2634 = vmatpush1.bf16.msra.mxu0 %v2612
      %2635 = vmatprep.subr.bf16.mxu0 0
      %2636 = vmatpush1.bf16.msra.mxu0 %v2611
      %2637 = vmatprep.subr.bf16.mxu0 0
      %2638 = vmatpush1.bf16.msra.mxu0 %v2610
      %2639 = vmatprep.subr.bf16.mxu0 0
      %2640 = vmatpush1.bf16.msra.mxu0 %v2609
      %2641 = vmatprep.subr.bf16.mxu0 0
      %2642 = vmatpush2.bf16.msra.mxu0 0
      %2643 = vmatprep.subr.bf16.mxu0 0
      %2644 = vmatpush2.bf16.msra.mxu0 0
      %2645 = vmatprep.subr.bf16.mxu0 0
      %2646 = vmatpush2.bf16.msra.mxu0 0
      %2647 = vmatprep.subr.bf16.mxu0 0
      %2648 = vmatpush2.bf16.msra.mxu0 0
      %2649 = vmatprep.subr.bf16.mxu0 0
      %2650 = vmatpush2.bf16.msra.mxu0 0
      %2651 = vmatprep.subr.bf16.mxu0 0
      %2652 = vmatpush2.bf16.msra.mxu0 0
      %2653 = vmatprep.subr.bf16.mxu0 0
      %2654 = vmatpush2.bf16.msra.mxu0 0
      %2655 = vmatprep.subr.bf16.mxu0 0
      %2656 = vmatpush2.bf16.msra.mxu0 0
      %2657 = vmatprep.mubr.bf16.mxu0 0
      %2658 = vmatmul.mubr.bf16.gmra.mxu0 %v484
      %v2659 = vpop.f32.mrf.mxu0
      %v2660 = vadd.f32 0.0, %v2659
      %v2661 = vpop.f32.mrf.mxu0
      %v2662 = vpop.f32.mrf.mxu0
      %v2663 = vadd.f32 0.0, %v2662
      %v2664 = vpop.f32.mrf.mxu0
      %2665 = vmatprep.mubr.bf16.mxu0 0
      %2666 = vmatmul.mubr.bf16.gmra.mxu0 %v492
      %v2667 = vpop.f32.mrf.mxu0
      %v2668 = vadd.f32 0.0, %v2667
      %v2669 = vpop.f32.mrf.mxu0
      %v2670 = vpop.f32.mrf.mxu0
      %v2671 = vadd.f32 0.0, %v2670
      %v2672 = vpop.f32.mrf.mxu0
      %2673 = vmatprep.mubr.bf16.mxu0 0
      %2674 = vmatmul.mubr.bf16.gmra.mxu0 %v500
      %v2675 = vpop.f32.mrf.mxu0
      %v2676 = vadd.f32 0.0, %v2675
      %v2677 = vpop.f32.mrf.mxu0
      %v2678 = vpop.f32.mrf.mxu0
      %v2679 = vadd.f32 0.0, %v2678
      %v2680 = vpop.f32.mrf.mxu0
      %2681 = vmatprep.mubr.bf16.mxu0 0
      %2682 = vmatmul.mubr.bf16.gmra.mxu0 %v508
      %v2683 = vpop.f32.mrf.mxu0
      %v2684 = vadd.f32 0.0, %v2683
      %v2685 = vpop.f32.mrf.mxu0
      %v2686 = vpop.f32.mrf.mxu0
      %v2687 = vadd.f32 0.0, %v2686
      %v2688 = vpop.f32.mrf.mxu0
      %2689 = vmatprep.mubr.bf16.mxu0 0
      %2690 = vmatmul.mubr.bf16.gmra.mxu0 %v516
      %v2691 = vpop.f32.mrf.mxu0
      %v2692 = vadd.f32 0.0, %v2691
      %v2693 = vpop.f32.mrf.mxu0
      %v2694 = vpop.f32.mrf.mxu0
      %v2695 = vadd.f32 0.0, %v2694
      %v2696 = vpop.f32.mrf.mxu0
      %2697 = vmatprep.mubr.bf16.mxu0 0
      %2698 = vmatmul.mubr.bf16.gmra.mxu0 %v524
      %v2699 = vpop.f32.mrf.mxu0
      %v2700 = vadd.f32 0.0, %v2699
      %v2701 = vpop.f32.mrf.mxu0
      %v2702 = vpop.f32.mrf.mxu0
      %v2703 = vadd.f32 0.0, %v2702
      %v2704 = vpop.f32.mrf.mxu0
      %2705 = vmatprep.mubr.bf16.mxu0 0
      %2706 = vmatmul.mubr.bf16.gmra.mxu0 %v532
      %v2707 = vpop.f32.mrf.mxu0
      %v2708 = vadd.f32 0.0, %v2707
      %v2709 = vpop.f32.mrf.mxu0
      %v2710 = vpop.f32.mrf.mxu0
      %v2711 = vadd.f32 0.0, %v2710
      %v2712 = vpop.f32.mrf.mxu0
      %2713 = vmatprep.mubr.bf16.mxu0 0
      %2714 = vmatmul.mubr.bf16.gmra.mxu0 %v540
      %v2715 = vpop.f32.mrf.mxu0
      %v2716 = vadd.f32 0.0, %v2715
      %v2717 = vpop.f32.mrf.mxu0
      %v2718 = vpop.f32.mrf.mxu0
      %v2719 = vadd.f32 0.0, %v2718
      %v2720 = vpop.f32.mrf.mxu0
      %2721 = vmatprep.mubr.bf16.mxu0 0
      %2722 = vmatmul.mubr.bf16.gmra.mxu0 %v548
      %v2723 = vpop.f32.mrf.mxu0
      %v2724 = vadd.f32 0.0, %v2723
      %v2725 = vpop.f32.mrf.mxu0
      %v2726 = vpop.f32.mrf.mxu0
      %v2727 = vadd.f32 0.0, %v2726
      %v2728 = vpop.f32.mrf.mxu0
      %2729 = vmatprep.mubr.bf16.mxu0 0
      %2730 = vmatmul.mubr.bf16.gmra.mxu0 %v556
      %v2731 = vpop.f32.mrf.mxu0
      %v2732 = vadd.f32 0.0, %v2731
      %v2733 = vpop.f32.mrf.mxu0
      %v2734 = vpop.f32.mrf.mxu0
      %v2735 = vadd.f32 0.0, %v2734
      %v2736 = vpop.f32.mrf.mxu0
      %2737 = vmatprep.mubr.bf16.mxu0 0
      %2738 = vmatmul.mubr.bf16.gmra.mxu0 %v564
      %v2739 = vpop.f32.mrf.mxu0
      %v2740 = vadd.f32 0.0, %v2739
      %v2741 = vpop.f32.mrf.mxu0
      %v2742 = vpop.f32.mrf.mxu0
      %v2743 = vadd.f32 0.0, %v2742
      %v2744 = vpop.f32.mrf.mxu0
      %2745 = vmatprep.mubr.bf16.mxu0 0
      %2746 = vmatmul.mubr.bf16.gmra.mxu0 %v2548
      %v2747 = vpop.f32.mrf.mxu0
      %v2748 = vadd.f32 0.0, %v2747
      %v2749 = vpop.f32.mrf.mxu0
      %v2750 = vpop.f32.mrf.mxu0
      %v2751 = vadd.f32 0.0, %v2750
      %v2752 = vpop.f32.mrf.mxu0
      %2753 = vmatprep.mubr.bf16.mxu0 0
      %2754 = vmatmul.mubr.bf16.gmra.mxu0 %v2556
      %v2755 = vpop.f32.mrf.mxu0
      %v2756 = vadd.f32 0.0, %v2755
      %v2757 = vpop.f32.mrf.mxu0
      %v2758 = vpop.f32.mrf.mxu0
      %v2759 = vadd.f32 0.0, %v2758
      %v2760 = vpop.f32.mrf.mxu0
      %2761 = vmatprep.mubr.bf16.mxu0 0
      %2762 = vmatmul.mubr.bf16.gmra.mxu0 %v2564
      %v2763 = vpop.f32.mrf.mxu0
      %v2764 = vadd.f32 0.0, %v2763
      %v2765 = vpop.f32.mrf.mxu0
      %v2766 = vpop.f32.mrf.mxu0
      %v2767 = vadd.f32 0.0, %v2766
      %v2768 = vpop.f32.mrf.mxu0
      %2769 = vmatprep.mubr.bf16.mxu0 0
      %2770 = vmatmul.mubr.bf16.gmra.mxu0 %v2572
      %v2771 = vpop.f32.mrf.mxu0
      %v2772 = vadd.f32 0.0, %v2771
      %v2773 = vpop.f32.mrf.mxu0
      %v2774 = vpop.f32.mrf.mxu0
      %v2775 = vadd.f32 0.0, %v2774
      %v2776 = vpop.f32.mrf.mxu0
      %2777 = vdwg.mxu0
      %v2778 = vadd.f32 %v2494, %v2660
      %v2779 = vadd.f32 %v2495, %v2663
      %v2780 = vadd.f32 %v2496, %v2668
      %v2781 = vadd.f32 %v2497, %v2671
      %v2782 = vadd.f32 %v2498, %v2676
      %v2783 = vadd.f32 %v2499, %v2679
      %v2784 = vadd.f32 %v2500, %v2684
      %v2785 = vadd.f32 %v2501, %v2687
      %v2786 = vadd.f32 %v2502, %v2692
      %v2787 = vadd.f32 %v2503, %v2695
      %v2788 = vadd.f32 %v2504, %v2700
      %v2789 = vadd.f32 %v2505, %v2703
      %v2790 = vadd.f32 %v2506, %v2708
      %v2791 = vadd.f32 %v2507, %v2711
      %v2792 = vadd.f32 %v2508, %v2716
      %v2793 = vadd.f32 %v2509, %v2719
      %v2794 = vadd.f32 %v2510, %v2724
      %v2795 = vadd.f32 %v2511, %v2727
      %v2796 = vadd.f32 %v2512, %v2732
      %v2797 = vadd.f32 %v2513, %v2735
      %v2798 = vadd.f32 %v2514, %v2740
      %v2799 = vadd.f32 %v2515, %v2743
      %v2800 = vadd.f32 %v2516, %v2748
      %v2801 = vadd.f32 %v2517, %v2751
      %v2802 = vadd.f32 %v2518, %v2756
      %v2803 = vadd.f32 %v2519, %v2759
      %v2804 = vadd.f32 %v2520, %v2764
      %v2805 = vadd.f32 %v2521, %v2767
      %v2806 = vadd.f32 %v2522, %v2772
      %v2807 = vadd.f32 %v2523, %v2775
      %s2808 = scalar_lea.vmem %s1, 512
      %v2809 = vld [vmem:[%s2808] sm:$0xf]
      %v2810 = vld [vmem:[%s2808 + $0x4] sm:$0xf]
      %v2811 = vld [vmem:[%s2808 + $0x8] sm:$0xf]
      %v2812 = vld [vmem:[%s2808 + $0xc] sm:$0xf]
      %v2813 = vld [vmem:[%s2808 + $0x10] sm:$0xf]
      %v2814 = vld [vmem:[%s2808 + $0x14] sm:$0xf]
      %v2815 = vld [vmem:[%s2808 + $0x18] sm:$0xf]
      %v2816 = vld [vmem:[%s2808 + $0x1c] sm:$0xf]
      %v2817 = vld [vmem:[%s2808 + $0x20] sm:$0xf]
      %v2818 = vld [vmem:[%s2808 + $0x24] sm:$0xf]
      %v2819 = vld [vmem:[%s2808 + $0x28] sm:$0xf]
      %v2820 = vld [vmem:[%s2808 + $0x2c] sm:$0xf]
      %v2821 = vld [vmem:[%s2808 + $0x30] sm:$0xf]
      %v2822 = vld [vmem:[%s2808 + $0x34] sm:$0xf]
      %v2823 = vld [vmem:[%s2808 + $0x38] sm:$0xf]
      %v2824 = vld [vmem:[%s2808 + $0x3c] sm:$0xf]
      %v2825 = vrot.slane %v2287, 1
      %v2826 = vsel %vm1022, %v1050, %v2825
      %v2827 = vrot.slane %v2288, 1
      %v2828 = vsel %vm1022, %v2825, %v2827
      %v2829 = vrot.slane %v2289, 1
      %v2830 = vsel %vm1022, %v2827, %v2829
      %v2831 = vrot.slane %v2543, 1
      %v2832 = vsel %vm1022, %v2829, %v2831
      %v2853 = vunpack.c.l.b16 %v2809
      %v2854 = vunpack.c.l.b16 %v2810
      %v2855 = vunpack.c.l.b16 %v2811
      %v2856 = vunpack.c.l.b16 %v2812
      %v2857 = vunpack.c.l.b16 %v2813
      %v2858 = vunpack.c.l.b16 %v2814
      %v2859 = vunpack.c.l.b16 %v2815
      %v2860 = vunpack.c.l.b16 %v2816
      %v2861 = vunpack.c.l.b16 %v2817
      %v2862 = vunpack.c.l.b16 %v2818
      %v2863 = vunpack.c.l.b16 %v2819
      %v2864 = vunpack.c.l.b16 %v2820
      %v2865 = vunpack.c.l.b16 %v2821
      %v2866 = vunpack.c.l.b16 %v2822
      %v2867 = vunpack.c.l.b16 %v2823
      %v2868 = vunpack.c.l.b16 %v2824
      %v2869 = vpack.c.b16 %v2854, %v2853
      %v2870 = vpack.c.b16 %v2856, %v2855
      %v2871 = vpack.c.b16 %v2858, %v2857
      %v2872 = vpack.c.b16 %v2860, %v2859
      %v2873 = vpack.c.b16 %v2862, %v2861
      %v2874 = vpack.c.b16 %v2864, %v2863
      %v2875 = vpack.c.b16 %v2866, %v2865
      %v2876 = vpack.c.b16 %v2868, %v2867
      %2885 = vmatprep.subr.bf16.mxu0 0
      %2886 = vmatpush1.bf16.msra.mxu0 %v2876
      %2887 = vmatprep.subr.bf16.mxu0 0
      %2888 = vmatpush1.bf16.msra.mxu0 %v2875
      %2889 = vmatprep.subr.bf16.mxu0 0
      %2890 = vmatpush1.bf16.msra.mxu0 %v2874
      %2891 = vmatprep.subr.bf16.mxu0 0
      %2892 = vmatpush1.bf16.msra.mxu0 %v2873
      %2893 = vmatprep.subr.bf16.mxu0 0
      %2894 = vmatpush1.bf16.msra.mxu0 %v2872
      %2895 = vmatprep.subr.bf16.mxu0 0
      %2896 = vmatpush1.bf16.msra.mxu0 %v2871
      %2897 = vmatprep.subr.bf16.mxu0 0
      %2898 = vmatpush1.bf16.msra.mxu0 %v2870
      %2899 = vmatprep.subr.bf16.mxu0 0
      %2900 = vmatpush1.bf16.msra.mxu0 %v2869
      %2901 = vmatprep.subr.bf16.mxu0 0
      %2902 = vmatpush2.bf16.msra.mxu0 0
      %2903 = vmatprep.subr.bf16.mxu0 0
      %2904 = vmatpush2.bf16.msra.mxu0 0
      %2905 = vmatprep.subr.bf16.mxu0 0
      %2906 = vmatpush2.bf16.msra.mxu0 0
      %2907 = vmatprep.subr.bf16.mxu0 0
      %2908 = vmatpush2.bf16.msra.mxu0 0
      %2909 = vmatprep.subr.bf16.mxu0 0
      %2910 = vmatpush2.bf16.msra.mxu0 0
      %2911 = vmatprep.subr.bf16.mxu0 0
      %2912 = vmatpush2.bf16.msra.mxu0 0
      %2913 = vmatprep.subr.bf16.mxu0 0
      %2914 = vmatpush2.bf16.msra.mxu0 0
      %2915 = vmatprep.subr.bf16.mxu0 0
      %2916 = vmatpush2.bf16.msra.mxu0 0
      %2917 = vmatprep.mubr.bf16.mxu0 0
      %2918 = vmatmul.mubr.bf16.gmra.mxu0 %v1031
      %v2919 = vpop.f32.mrf.mxu0
      %v2920 = vadd.f32 0.0, %v2919
      %v2921 = vpop.f32.mrf.mxu0
      %v2922 = vpop.f32.mrf.mxu0
      %v2923 = vadd.f32 0.0, %v2922
      %v2924 = vpop.f32.mrf.mxu0
      %2925 = vmatprep.mubr.bf16.mxu0 0
      %2926 = vmatmul.mubr.bf16.gmra.mxu0 %v1033
      %v2927 = vpop.f32.mrf.mxu0
      %v2928 = vadd.f32 0.0, %v2927
      %v2929 = vpop.f32.mrf.mxu0
      %v2930 = vpop.f32.mrf.mxu0
      %v2931 = vadd.f32 0.0, %v2930
      %v2932 = vpop.f32.mrf.mxu0
      %2933 = vmatprep.mubr.bf16.mxu0 0
      %2934 = vmatmul.mubr.bf16.gmra.mxu0 %v1035
      %v2935 = vpop.f32.mrf.mxu0
      %v2936 = vadd.f32 0.0, %v2935
      %v2937 = vpop.f32.mrf.mxu0
      %v2938 = vpop.f32.mrf.mxu0
      %v2939 = vadd.f32 0.0, %v2938
      %v2940 = vpop.f32.mrf.mxu0
      %2941 = vmatprep.mubr.bf16.mxu0 0
      %2942 = vmatmul.mubr.bf16.gmra.mxu0 %v1037
      %v2943 = vpop.f32.mrf.mxu0
      %v2944 = vadd.f32 0.0, %v2943
      %v2945 = vpop.f32.mrf.mxu0
      %v2946 = vpop.f32.mrf.mxu0
      %v2947 = vadd.f32 0.0, %v2946
      %v2948 = vpop.f32.mrf.mxu0
      %2949 = vmatprep.mubr.bf16.mxu0 0
      %2950 = vmatmul.mubr.bf16.gmra.mxu0 %v1039
      %v2951 = vpop.f32.mrf.mxu0
      %v2952 = vadd.f32 0.0, %v2951
      %v2953 = vpop.f32.mrf.mxu0
      %v2954 = vpop.f32.mrf.mxu0
      %v2955 = vadd.f32 0.0, %v2954
      %v2956 = vpop.f32.mrf.mxu0
      %2957 = vmatprep.mubr.bf16.mxu0 0
      %2958 = vmatmul.mubr.bf16.gmra.mxu0 %v1041
      %v2959 = vpop.f32.mrf.mxu0
      %v2960 = vadd.f32 0.0, %v2959
      %v2961 = vpop.f32.mrf.mxu0
      %v2962 = vpop.f32.mrf.mxu0
      %v2963 = vadd.f32 0.0, %v2962
      %v2964 = vpop.f32.mrf.mxu0
      %2965 = vmatprep.mubr.bf16.mxu0 0
      %2966 = vmatmul.mubr.bf16.gmra.mxu0 %v1043
      %v2967 = vpop.f32.mrf.mxu0
      %v2968 = vadd.f32 0.0, %v2967
      %v2969 = vpop.f32.mrf.mxu0
      %v2970 = vpop.f32.mrf.mxu0
      %v2971 = vadd.f32 0.0, %v2970
      %v2972 = vpop.f32.mrf.mxu0
      %2973 = vmatprep.mubr.bf16.mxu0 0
      %2974 = vmatmul.mubr.bf16.gmra.mxu0 %v1045
      %v2975 = vpop.f32.mrf.mxu0
      %v2976 = vadd.f32 0.0, %v2975
      %v2977 = vpop.f32.mrf.mxu0
      %v2978 = vpop.f32.mrf.mxu0
      %v2979 = vadd.f32 0.0, %v2978
      %v2980 = vpop.f32.mrf.mxu0
      %2981 = vmatprep.mubr.bf16.mxu0 0
      %2982 = vmatmul.mubr.bf16.gmra.mxu0 %v1047
      %v2983 = vpop.f32.mrf.mxu0
      %v2984 = vadd.f32 0.0, %v2983
      %v2985 = vpop.f32.mrf.mxu0
      %v2986 = vpop.f32.mrf.mxu0
      %v2987 = vadd.f32 0.0, %v2986
      %v2988 = vpop.f32.mrf.mxu0
      %2989 = vmatprep.mubr.bf16.mxu0 0
      %2990 = vmatmul.mubr.bf16.gmra.mxu0 %v1049
      %v2991 = vpop.f32.mrf.mxu0
      %v2992 = vadd.f32 0.0, %v2991
      %v2993 = vpop.f32.mrf.mxu0
      %v2994 = vpop.f32.mrf.mxu0
      %v2995 = vadd.f32 0.0, %v2994
      %v2996 = vpop.f32.mrf.mxu0
      %2997 = vmatprep.mubr.bf16.mxu0 0
      %2998 = vmatmul.mubr.bf16.gmra.mxu0 %v1051
      %v2999 = vpop.f32.mrf.mxu0
      %v3000 = vadd.f32 0.0, %v2999
      %v3001 = vpop.f32.mrf.mxu0
      %v3002 = vpop.f32.mrf.mxu0
      %v3003 = vadd.f32 0.0, %v3002
      %v3004 = vpop.f32.mrf.mxu0
      %3005 = vmatprep.mubr.bf16.mxu0 0
      %3006 = vmatmul.mubr.bf16.gmra.mxu0 %v2826
      %v3007 = vpop.f32.mrf.mxu0
      %v3008 = vadd.f32 0.0, %v3007
      %v3009 = vpop.f32.mrf.mxu0
      %v3010 = vpop.f32.mrf.mxu0
      %v3011 = vadd.f32 0.0, %v3010
      %v3012 = vpop.f32.mrf.mxu0
      %3013 = vmatprep.mubr.bf16.mxu0 0
      %3014 = vmatmul.mubr.bf16.gmra.mxu0 %v2828
      %v3015 = vpop.f32.mrf.mxu0
      %v3016 = vadd.f32 0.0, %v3015
      %v3017 = vpop.f32.mrf.mxu0
      %v3018 = vpop.f32.mrf.mxu0
      %v3019 = vadd.f32 0.0, %v3018
      %v3020 = vpop.f32.mrf.mxu0
      %3021 = vmatprep.mubr.bf16.mxu0 0
      %3022 = vmatmul.mubr.bf16.gmra.mxu0 %v2830
      %v3023 = vpop.f32.mrf.mxu0
      %v3024 = vadd.f32 0.0, %v3023
      %v3025 = vpop.f32.mrf.mxu0
      %v3026 = vpop.f32.mrf.mxu0
      %v3027 = vadd.f32 0.0, %v3026
      %v3028 = vpop.f32.mrf.mxu0
      %3029 = vmatprep.mubr.bf16.mxu0 0
      %3030 = vmatmul.mubr.bf16.gmra.mxu0 %v2832
      %v3031 = vpop.f32.mrf.mxu0
      %v3032 = vadd.f32 0.0, %v3031
      %v3033 = vpop.f32.mrf.mxu0
      %v3034 = vpop.f32.mrf.mxu0
      %v3035 = vadd.f32 0.0, %v3034
      %v3036 = vpop.f32.mrf.mxu0
      %3037 = vdwg.mxu0
      %v3038 = vadd.f32 %v2778, %v2920
      %v3039 = vadd.f32 %v2779, %v2923
      %v3040 = vadd.f32 %v2780, %v2928
      %v3041 = vadd.f32 %v2781, %v2931
      %v3042 = vadd.f32 %v2782, %v2936
      %v3043 = vadd.f32 %v2783, %v2939
      %v3044 = vadd.f32 %v2784, %v2944
      %v3045 = vadd.f32 %v2785, %v2947
      %v3046 = vadd.f32 %v2786, %v2952
      %v3047 = vadd.f32 %v2787, %v2955
      %v3048 = vadd.f32 %v2788, %v2960
      %v3049 = vadd.f32 %v2789, %v2963
      %v3050 = vadd.f32 %v2790, %v2968
      %v3051 = vadd.f32 %v2791, %v2971
      %v3052 = vadd.f32 %v2792, %v2976
      %v3053 = vadd.f32 %v2793, %v2979
      %v3054 = vadd.f32 %v2794, %v2984
      %v3055 = vadd.f32 %v2795, %v2987
      %v3056 = vadd.f32 %v2796, %v2992
      %v3057 = vadd.f32 %v2797, %v2995
      %v3058 = vadd.f32 %v2798, %v3000
      %v3059 = vadd.f32 %v2799, %v3003
      %v3060 = vadd.f32 %v2800, %v3008
      %v3061 = vadd.f32 %v2801, %v3011
      %v3062 = vadd.f32 %v2802, %v3016
      %v3063 = vadd.f32 %v2803, %v3019
      %v3064 = vadd.f32 %v2804, %v3024
      %v3065 = vadd.f32 %v2805, %v3027
      %v3066 = vadd.f32 %v2806, %v3032
      %v3067 = vadd.f32 %v2807, %v3035
      %v3068 = vld [vmem:[%s2] sm:$0x1]
      %v3070 = vlaneseq
      %v3071 = vshrl.u32 %v3070, 7
      %v3072 = vsub.s32 0, %v3071
      %v3073 = vrot.slane %v3068, %v3072
      %v3075 = vadd.f32 %v3038, %v3073
      %v3076 = vadd.f32 %v3039, %v3073
      %v3077 = vadd.f32 %v3040, %v3073
      %v3078 = vadd.f32 %v3041, %v3073
      %v3079 = vadd.f32 %v3042, %v3073
      %v3080 = vadd.f32 %v3043, %v3073
      %v3081 = vadd.f32 %v3044, %v3073
      %v3082 = vadd.f32 %v3045, %v3073
      %v3083 = vadd.f32 %v3046, %v3073
      %v3084 = vadd.f32 %v3047, %v3073
      %v3085 = vadd.f32 %v3048, %v3073
      %v3086 = vadd.f32 %v3049, %v3073
      %v3087 = vadd.f32 %v3050, %v3073
      %v3088 = vadd.f32 %v3051, %v3073
      %v3089 = vadd.f32 %v3052, %v3073
      %v3090 = vadd.f32 %v3053, %v3073
      %v3091 = vadd.f32 %v3054, %v3073
      %v3092 = vadd.f32 %v3055, %v3073
      %v3093 = vadd.f32 %v3056, %v3073
      %v3094 = vadd.f32 %v3057, %v3073
      %v3095 = vadd.f32 %v3058, %v3073
      %v3096 = vadd.f32 %v3059, %v3073
      %v3097 = vadd.f32 %v3060, %v3073
      %v3098 = vadd.f32 %v3061, %v3073
      %v3099 = vadd.f32 %v3062, %v3073
      %v3100 = vadd.f32 %v3063, %v3073
      %v3101 = vadd.f32 %v3064, %v3073
      %v3102 = vadd.f32 %v3065, %v3073
      %v3103 = vadd.f32 %v3066, %v3073
      %v3104 = vadd.f32 %v3067, %v3073
      %v3105 = vmax.f32 %v3075, 0.0
      %v3106 = vmax.f32 %v3076, 0.0
      %v3107 = vmax.f32 %v3077, 0.0
      %v3108 = vmax.f32 %v3078, 0.0
      %v3109 = vmax.f32 %v3079, 0.0
      %v3110 = vmax.f32 %v3080, 0.0
      %v3111 = vmax.f32 %v3081, 0.0
      %v3112 = vmax.f32 %v3082, 0.0
      %v3113 = vmax.f32 %v3083, 0.0
      %v3114 = vmax.f32 %v3084, 0.0
      %v3115 = vmax.f32 %v3085, 0.0
      %v3116 = vmax.f32 %v3086, 0.0
      %v3117 = vmax.f32 %v3087, 0.0
      %v3118 = vmax.f32 %v3088, 0.0
      %v3119 = vmax.f32 %v3089, 0.0
      %v3120 = vmax.f32 %v3090, 0.0
      %v3121 = vmax.f32 %v3091, 0.0
      %v3122 = vmax.f32 %v3092, 0.0
      %v3123 = vmax.f32 %v3093, 0.0
      %v3124 = vmax.f32 %v3094, 0.0
      %v3125 = vmax.f32 %v3095, 0.0
      %v3126 = vmax.f32 %v3096, 0.0
      %v3127 = vmax.f32 %v3097, 0.0
      %v3128 = vmax.f32 %v3098, 0.0
      %v3129 = vmax.f32 %v3099, 0.0
      %v3130 = vmax.f32 %v3100, 0.0
      %v3131 = vmax.f32 %v3101, 0.0
      %v3132 = vmax.f32 %v3102, 0.0
      %v3133 = vmax.f32 %v3103, 0.0
      %v3134 = vmax.f32 %v3104, 0.0
      %v3135 = vld [vmem:[%s284] sm:$0xff]
      %v3136 = vld [vmem:[%s284 + $0x8] sm:$0xff]
      %v3137 = vld [vmem:[%s284 + $0x10] sm:$0xff]
      %v3138 = vld [vmem:[%s284 + $0x18] sm:$0xff]
      %v3139 = vld [vmem:[%s284 + $0x20] sm:$0xff]
      %v3140 = vld [vmem:[%s284 + $0x28] sm:$0xff]
      %v3141 = vld [vmem:[%s284 + $0x30] sm:$0xff]
      %v3142 = vld [vmem:[%s284 + $0x38] sm:$0xff]
      %v3143 = vld [vmem:[%s284 + $0x40] sm:$0xff]
      %v3144 = vld [vmem:[%s284 + $0x48] sm:$0xff]
      %v3145 = vld [vmem:[%s284 + $0x50] sm:$0xff]
      %v3146 = vld [vmem:[%s284 + $0x58] sm:$0xff]
      %v3147 = vld [vmem:[%s284 + $0x60] sm:$0xff]
      %v3148 = vld [vmem:[%s284 + $0x68] sm:$0xff]
      %v3149 = vld [vmem:[%s284 + $0x70] sm:$0xff]
      %v3150 = vld [vmem:[%s284 + $0x78] sm:$0xff]
      %v3151 = vld [vmem:[%s284 + $0x80] sm:$0xff]
      %v3152 = vld [vmem:[%s284 + $0x88] sm:$0xff]
      %v3153 = vld [vmem:[%s284 + $0x90] sm:$0xff]
      %v3154 = vld [vmem:[%s284 + $0x98] sm:$0xff]
      %v3155 = vld [vmem:[%s284 + $0xa0] sm:$0xff]
      %v3156 = vld [vmem:[%s284 + $0xa8] sm:$0xff]
      %v3157 = vld [vmem:[%s284 + $0xb0] sm:$0xff]
      %v3158 = vld [vmem:[%s284 + $0xb8] sm:$0xff]
      %v3159 = vld [vmem:[%s284 + $0xc0] sm:$0xff]
      %v3160 = vld [vmem:[%s284 + $0xc8] sm:$0xff]
      %v3161 = vld [vmem:[%s284 + $0xd0] sm:$0xff]
      %v3162 = vld [vmem:[%s284 + $0xd8] sm:$0xff]
      %v3163 = vld [vmem:[%s284 + $0xe0] sm:$0xff]
      %v3164 = vld [vmem:[%s284 + $0xe8] sm:$0xff]
      %3166 = vset.pattern.permute.xlu0 0
      %3167 = vperm.xlu0 %3166, %v3135
      %v3168 = vpop.permute.xlu0 %3167
      %3171 = vset.pattern.permute.xlu0 0
      %3172 = vperm.xlu0 %3171, %v3136
      %v3173 = vpop.permute.xlu0 %3172
      %3176 = vset.pattern.permute.xlu0 0
      %3177 = vperm.xlu0 %3176, %v3137
      %v3178 = vpop.permute.xlu0 %3177
      %3181 = vset.pattern.permute.xlu0 0
      %3182 = vperm.xlu0 %3181, %v3138
      %v3183 = vpop.permute.xlu0 %3182
      %3186 = vset.pattern.permute.xlu0 0
      %3187 = vperm.xlu0 %3186, %v3139
      %v3188 = vpop.permute.xlu0 %3187
      %3191 = vset.pattern.permute.xlu0 0
      %3192 = vperm.xlu0 %3191, %v3140
      %v3193 = vpop.permute.xlu0 %3192
      %3196 = vset.pattern.permute.xlu0 0
      %3197 = vperm.xlu0 %3196, %v3141
      %v3198 = vpop.permute.xlu0 %3197
      %3201 = vset.pattern.permute.xlu0 0
      %3202 = vperm.xlu0 %3201, %v3142
      %v3203 = vpop.permute.xlu0 %3202
      %3206 = vset.pattern.permute.xlu0 0
      %3207 = vperm.xlu0 %3206, %v3143
      %v3208 = vpop.permute.xlu0 %3207
      %3211 = vset.pattern.permute.xlu0 0
      %3212 = vperm.xlu0 %3211, %v3144
      %v3213 = vpop.permute.xlu0 %3212
      %3216 = vset.pattern.permute.xlu0 0
      %3217 = vperm.xlu0 %3216, %v3145
      %v3218 = vpop.permute.xlu0 %3217
      %3221 = vset.pattern.permute.xlu0 0
      %3222 = vperm.xlu0 %3221, %v3146
      %v3223 = vpop.permute.xlu0 %3222
      %3226 = vset.pattern.permute.xlu0 0
      %3227 = vperm.xlu0 %3226, %v3147
      %v3228 = vpop.permute.xlu0 %3227
      %3231 = vset.pattern.permute.xlu0 0
      %3232 = vperm.xlu0 %3231, %v3148
      %v3233 = vpop.permute.xlu0 %3232
      %3236 = vset.pattern.permute.xlu0 0
      %3237 = vperm.xlu0 %3236, %v3149
      %v3238 = vpop.permute.xlu0 %3237
      %3241 = vset.pattern.permute.xlu0 0
      %3242 = vperm.xlu0 %3241, %v3150
      %v3243 = vpop.permute.xlu0 %3242
      %3246 = vset.pattern.permute.xlu0 0
      %3247 = vperm.xlu0 %3246, %v3151
      %v3248 = vpop.permute.xlu0 %3247
      %3251 = vset.pattern.permute.xlu0 0
      %3252 = vperm.xlu0 %3251, %v3152
      %v3253 = vpop.permute.xlu0 %3252
      %3256 = vset.pattern.permute.xlu0 0
      %3257 = vperm.xlu0 %3256, %v3153
      %v3258 = vpop.permute.xlu0 %3257
      %3261 = vset.pattern.permute.xlu0 0
      %3262 = vperm.xlu0 %3261, %v3154
      %v3263 = vpop.permute.xlu0 %3262
      %3266 = vset.pattern.permute.xlu0 0
      %3267 = vperm.xlu0 %3266, %v3155
      %v3268 = vpop.permute.xlu0 %3267
      %3271 = vset.pattern.permute.xlu0 0
      %3272 = vperm.xlu0 %3271, %v3156
      %v3273 = vpop.permute.xlu0 %3272
      %3276 = vset.pattern.permute.xlu0 0
      %3277 = vperm.xlu0 %3276, %v3157
      %v3278 = vpop.permute.xlu0 %3277
      %3281 = vset.pattern.permute.xlu0 0
      %3282 = vperm.xlu0 %3281, %v3158
      %v3283 = vpop.permute.xlu0 %3282
      %3286 = vset.pattern.permute.xlu0 0
      %3287 = vperm.xlu0 %3286, %v3159
      %v3288 = vpop.permute.xlu0 %3287
      %3291 = vset.pattern.permute.xlu0 0
      %3292 = vperm.xlu0 %3291, %v3160
      %v3293 = vpop.permute.xlu0 %3292
      %3296 = vset.pattern.permute.xlu0 0
      %3297 = vperm.xlu0 %3296, %v3161
      %v3298 = vpop.permute.xlu0 %3297
      %3301 = vset.pattern.permute.xlu0 0
      %3302 = vperm.xlu0 %3301, %v3162
      %v3303 = vpop.permute.xlu0 %3302
      %3306 = vset.pattern.permute.xlu0 0
      %3307 = vperm.xlu0 %3306, %v3163
      %v3308 = vpop.permute.xlu0 %3307
      %3311 = vset.pattern.permute.xlu0 0
      %3312 = vperm.xlu0 %3311, %v3164
      %v3313 = vpop.permute.xlu0 %3312
      %v3315 = vmul.f32 %v3105, %v3168
      %v3316 = vmul.f32 %v3106, %v3173
      %v3317 = vmul.f32 %v3107, %v3178
      %v3318 = vmul.f32 %v3108, %v3183
      %v3319 = vmul.f32 %v3109, %v3188
      %v3320 = vmul.f32 %v3110, %v3193
      %v3321 = vmul.f32 %v3111, %v3198
      %v3322 = vmul.f32 %v3112, %v3203
      %v3323 = vmul.f32 %v3113, %v3208
      %v3324 = vmul.f32 %v3114, %v3213
      %v3325 = vmul.f32 %v3115, %v3218
      %v3326 = vmul.f32 %v3116, %v3223
      %v3327 = vmul.f32 %v3117, %v3228
      %v3328 = vmul.f32 %v3118, %v3233
      %v3329 = vmul.f32 %v3119, %v3238
      %v3330 = vmul.f32 %v3120, %v3243
      %v3331 = vmul.f32 %v3121, %v3248
      %v3332 = vmul.f32 %v3122, %v3253
      %v3333 = vmul.f32 %v3123, %v3258
      %v3334 = vmul.f32 %v3124, %v3263
      %v3335 = vmul.f32 %v3125, %v3268
      %v3336 = vmul.f32 %v3126, %v3273
      %v3337 = vmul.f32 %v3127, %v3278
      %v3338 = vmul.f32 %v3128, %v3283
      %v3339 = vmul.f32 %v3129, %v3288
      %v3340 = vmul.f32 %v3130, %v3293
      %v3341 = vmul.f32 %v3131, %v3298
      %v3342 = vmul.f32 %v3132, %v3303
      %v3343 = vmul.f32 %v3133, %v3308
      %v3344 = vmul.f32 %v3134, %v3313
      %v3345 = vpack.c.bf16 %v3316, %v3315
      %v3346 = vpack.c.bf16 %v3318, %v3317
      %v3347 = vpack.c.bf16 %v3320, %v3319
      %v3348 = vpack.c.bf16 %v3322, %v3321
      %v3349 = vpack.c.bf16 %v3324, %v3323
      %v3350 = vpack.c.bf16 %v3326, %v3325
      %v3351 = vpack.c.bf16 %v3328, %v3327
      %v3352 = vpack.c.bf16 %v3330, %v3329
      %v3353 = vpack.c.bf16 %v3332, %v3331
      %v3354 = vpack.c.bf16 %v3334, %v3333
      %v3355 = vpack.c.bf16 %v3336, %v3335
      %v3356 = vpack.c.bf16 %v3338, %v3337
      %v3357 = vpack.c.bf16 %v3340, %v3339
      %v3358 = vpack.c.bf16 %v3342, %v3341
      %v3359 = vpack.c.bf16 %v3344, %v3343
      %v3375 = vunpack.c.l.b16 %v3345
      %v3376 = vunpack.c.h.b16 %v3345
      %v3377 = vunpack.c.l.b16 %v3346
      %v3378 = vunpack.c.h.b16 %v3346
      %v3379 = vunpack.c.l.b16 %v3347
      %v3380 = vunpack.c.h.b16 %v3347
      %v3381 = vunpack.c.l.b16 %v3348
      %v3382 = vunpack.c.h.b16 %v3348
      %v3383 = vunpack.c.l.b16 %v3349
      %v3384 = vunpack.c.h.b16 %v3349
      %v3385 = vunpack.c.l.b16 %v3350
      %v3386 = vunpack.c.h.b16 %v3350
      %v3387 = vunpack.c.l.b16 %v3351
      %v3388 = vunpack.c.h.b16 %v3351
      %v3389 = vunpack.c.l.b16 %v3352
      %v3390 = vunpack.c.h.b16 %v3352
      %v3391 = vunpack.c.l.b16 %v3353
      %v3392 = vunpack.c.h.b16 %v3353
      %v3393 = vunpack.c.l.b16 %v3354
      %v3394 = vunpack.c.h.b16 %v3354
      %v3395 = vunpack.c.l.b16 %v3355
      %v3396 = vunpack.c.h.b16 %v3355
      %v3397 = vunpack.c.l.b16 %v3356
      %v3398 = vunpack.c.h.b16 %v3356
      %v3399 = vunpack.c.l.b16 %v3357
      %v3400 = vunpack.c.h.b16 %v3357
      %v3401 = vunpack.c.l.b16 %v3358
      %v3402 = vunpack.c.h.b16 %v3358
      %v3403 = vunpack.c.l.b16 %v3359
      %v3404 = vunpack.c.h.b16 %v3359
      %v3405 = vpack.c.b16 %v3375, %v3375
      %v3406 = vpack.c.b16 %v3376, %v3376
      %v3407 = vpack.c.b16 %v3377, %v3377
      %v3408 = vpack.c.b16 %v3378, %v3378
      %v3409 = vpack.c.b16 %v3379, %v3379
      %v3410 = vpack.c.b16 %v3380, %v3380
      %v3411 = vpack.c.b16 %v3381, %v3381
      %v3412 = vpack.c.b16 %v3382, %v3382
      %v3413 = vpack.c.b16 %v3383, %v3383
      %v3414 = vpack.c.b16 %v3384, %v3384
      %v3415 = vpack.c.b16 %v3385, %v3385
      %v3416 = vpack.c.b16 %v3386, %v3386
      %v3417 = vpack.c.b16 %v3387, %v3387
      %v3418 = vpack.c.b16 %v3388, %v3388
      %v3419 = vpack.c.b16 %v3389, %v3389
      %v3420 = vpack.c.b16 %v3390, %v3390
      %v3421 = vpack.c.b16 %v3391, %v3391
      %v3422 = vpack.c.b16 %v3392, %v3392
      %v3423 = vpack.c.b16 %v3393, %v3393
      %v3424 = vpack.c.b16 %v3394, %v3394
      %v3425 = vpack.c.b16 %v3395, %v3395
      %v3426 = vpack.c.b16 %v3396, %v3396
      %v3427 = vpack.c.b16 %v3397, %v3397
      %v3428 = vpack.c.b16 %v3398, %v3398
      %v3429 = vpack.c.b16 %v3399, %v3399
      %v3430 = vpack.c.b16 %v3400, %v3400
      %v3431 = vpack.c.b16 %v3401, %v3401
      %v3432 = vpack.c.b16 %v3402, %v3402
      %v3433 = vpack.c.b16 %v3403, %v3403
      %v3434 = vpack.c.b16 %v3404, %v3404
      %3465 = vst [vmem:[#allocation2] sm:$0xf] %v3405
      %3466 = vst [vmem:[#allocation2 + $0x4] sm:$0xf] %v3406
      %3467 = vst [vmem:[#allocation2 + $0x8] sm:$0xf] %v3407
      %3468 = vst [vmem:[#allocation2 + $0xc] sm:$0xf] %v3408
      %3469 = vst [vmem:[#allocation2 + $0x10] sm:$0xf] %v3409
      %3470 = vst [vmem:[#allocation2 + $0x14] sm:$0xf] %v3410
      %3471 = vst [vmem:[#allocation2 + $0x18] sm:$0xf] %v3411
      %3472 = vst [vmem:[#allocation2 + $0x1c] sm:$0xf] %v3412
      %3473 = vst [vmem:[#allocation2 + $0x20] sm:$0xf] %v3413
      %3474 = vst [vmem:[#allocation2 + $0x24] sm:$0xf] %v3414
      %3475 = vst [vmem:[#allocation2 + $0x28] sm:$0xf] %v3415
      %3476 = vst [vmem:[#allocation2 + $0x2c] sm:$0xf] %v3416
      %3477 = vst [vmem:[#allocation2 + $0x30] sm:$0xf] %v3417
      %3478 = vst [vmem:[#allocation2 + $0x34] sm:$0xf] %v3418
      %3479 = vst [vmem:[#allocation2 + $0x38] sm:$0xf] %v3419
      %3480 = vst [vmem:[#allocation2 + $0x3c] sm:$0xf] %v3420
      %3481 = vst [vmem:[#allocation2 + $0x40] sm:$0xf] %v3421
      %3482 = vst [vmem:[#allocation2 + $0x44] sm:$0xf] %v3422
      %3483 = vst [vmem:[#allocation2 + $0x48] sm:$0xf] %v3423
      %3484 = vst [vmem:[#allocation2 + $0x4c] sm:$0xf] %v3424
      %3485 = vst [vmem:[#allocation2 + $0x50] sm:$0xf] %v3425
      %3486 = vst [vmem:[#allocation2 + $0x54] sm:$0xf] %v3426
      %3487 = vst [vmem:[#allocation2 + $0x58] sm:$0xf] %v3427
      %3488 = vst [vmem:[#allocation2 + $0x5c] sm:$0xf] %v3428
      %3489 = vst [vmem:[#allocation2 + $0x60] sm:$0xf] %v3429
      %3490 = vst [vmem:[#allocation2 + $0x64] sm:$0xf] %v3430
      %3491 = vst [vmem:[#allocation2 + $0x68] sm:$0xf] %v3431
      %3492 = vst [vmem:[#allocation2 + $0x6c] sm:$0xf] %v3432
      %3493 = vst [vmem:[#allocation2 + $0x70] sm:$0xf] %v3433
      %3494 = vst [vmem:[#allocation2 + $0x74] sm:$0xf] %v3434
      %3495 = vst [vmem:[#allocation2 + $0x78] sm:$0xf] 0
      %v3496 = vld [vmem:[#allocation2] sm:$0xf]
      %v3497 = vld [vmem:[#allocation2 + $0x4] sm:$0xf]
      %v3498 = vld [vmem:[#allocation2 + $0x8] sm:$0xf]
      %v3499 = vld [vmem:[#allocation2 + $0xc] sm:$0xf]
      %v3500 = vld [vmem:[#allocation2 + $0x10] sm:$0xf]
      %v3501 = vld [vmem:[#allocation2 + $0x14] sm:$0xf]
      %v3502 = vld [vmem:[#allocation2 + $0x18] sm:$0xf]
      %v3503 = vld [vmem:[#allocation2 + $0x1c] sm:$0xf]
      %v3504 = vld [vmem:[#allocation2 + $0x20] sm:$0xf]
      %v3505 = vld [vmem:[#allocation2 + $0x24] sm:$0xf]
      %v3506 = vld [vmem:[#allocation2 + $0x28] sm:$0xf]
      %v3507 = vld [vmem:[#allocation2 + $0x2c] sm:$0xf]
      %v3508 = vld [vmem:[#allocation2 + $0x30] sm:$0xf]
      %v3509 = vld [vmem:[#allocation2 + $0x34] sm:$0xf]
      %v3510 = vld [vmem:[#allocation2 + $0x38] sm:$0xf]
      %v3511 = vld [vmem:[#allocation2 + $0x3c] sm:$0xf]
      %v3512 = vld [vmem:[#allocation2 + $0x40] sm:$0xf]
      %v3513 = vld [vmem:[#allocation2 + $0x44] sm:$0xf]
      %v3514 = vld [vmem:[#allocation2 + $0x48] sm:$0xf]
      %v3515 = vld [vmem:[#allocation2 + $0x4c] sm:$0xf]
      %v3516 = vld [vmem:[#allocation2 + $0x50] sm:$0xf]
      %v3517 = vld [vmem:[#allocation2 + $0x54] sm:$0xf]
      %v3518 = vld [vmem:[#allocation2 + $0x58] sm:$0xf]
      %v3519 = vld [vmem:[#allocation2 + $0x5c] sm:$0xf]
      %v3520 = vld [vmem:[#allocation2 + $0x60] sm:$0xf]
      %v3521 = vld [vmem:[#allocation2 + $0x64] sm:$0xf]
      %v3522 = vld [vmem:[#allocation2 + $0x68] sm:$0xf]
      %v3523 = vld [vmem:[#allocation2 + $0x6c] sm:$0xf]
      %v3524 = vld [vmem:[#allocation2 + $0x70] sm:$0xf]
      %v3525 = vld [vmem:[#allocation2 + $0x74] sm:$0xf]
      %v3526 = vld [vmem:[#allocation2 + $0x78] sm:$0xf]
      %v3527 = vld [vmem:[%s3] sm:$0xf]
      %v3528 = vld [vmem:[%s3 + $0x4] sm:$0xf]
      %v3529 = vld [vmem:[%s3 + $0x8] sm:$0xf]
      %v3530 = vld [vmem:[%s3 + $0xc] sm:$0xf]
      %v3531 = vld [vmem:[%s3 + $0x10] sm:$0xf]
      %v3532 = vld [vmem:[%s3 + $0x14] sm:$0xf]
      %v3533 = vld [vmem:[%s3 + $0x18] sm:$0xf]
      %v3534 = vld [vmem:[%s3 + $0x1c] sm:$0xf]
      %v3535 = vld [vmem:[%s3 + $0x20] sm:$0xf]
      %v3536 = vld [vmem:[%s3 + $0x24] sm:$0xf]
      %v3537 = vld [vmem:[%s3 + $0x28] sm:$0xf]
      %v3538 = vld [vmem:[%s3 + $0x2c] sm:$0xf]
      %v3539 = vld [vmem:[%s3 + $0x30] sm:$0xf]
      %v3540 = vld [vmem:[%s3 + $0x34] sm:$0xf]
      %v3541 = vld [vmem:[%s3 + $0x38] sm:$0xf]
      %v3542 = vld [vmem:[%s3 + $0x3c] sm:$0xf]
      %s3543 = scalar_lea.vmem %s3, 64
      %v3544 = vld [vmem:[%s3543] sm:$0xf]
      %v3545 = vld [vmem:[%s3543 + $0x4] sm:$0xf]
      %v3546 = vld [vmem:[%s3543 + $0x8] sm:$0xf]
      %v3547 = vld [vmem:[%s3543 + $0xc] sm:$0xf]
      %v3548 = vld [vmem:[%s3543 + $0x10] sm:$0xf]
      %v3549 = vld [vmem:[%s3543 + $0x14] sm:$0xf]
      %v3550 = vld [vmem:[%s3543 + $0x18] sm:$0xf]
      %v3551 = vld [vmem:[%s3543 + $0x1c] sm:$0xf]
      %v3552 = vld [vmem:[%s3543 + $0x20] sm:$0xf]
      %v3553 = vld [vmem:[%s3543 + $0x24] sm:$0xf]
      %v3554 = vld [vmem:[%s3543 + $0x28] sm:$0xf]
      %v3555 = vld [vmem:[%s3543 + $0x2c] sm:$0xf]
      %v3556 = vld [vmem:[%s3543 + $0x30] sm:$0xf]
      %v3557 = vld [vmem:[%s3543 + $0x34] sm:$0xf]
      %v3558 = vld [vmem:[%s3543 + $0x38] sm:$0xf]
      %v3559 = vld [vmem:[%s3543 + $0x3c] sm:$0xf]
      %v3585 = vunpack.c.l.b16 %v3496
      %v3586 = vunpack.c.l.b16 %v3497
      %v3587 = vunpack.c.l.b16 %v3498
      %v3588 = vunpack.c.l.b16 %v3499
      %v3589 = vunpack.c.l.b16 %v3500
      %v3590 = vunpack.c.l.b16 %v3501
      %v3591 = vunpack.c.l.b16 %v3502
      %v3592 = vunpack.c.l.b16 %v3503
      %v3593 = vunpack.c.l.b16 %v3504
      %v3594 = vunpack.c.l.b16 %v3505
      %v3595 = vunpack.c.l.b16 %v3506
      %v3596 = vunpack.c.l.b16 %v3507
      %v3597 = vunpack.c.l.b16 %v3508
      %v3598 = vunpack.c.l.b16 %v3509
      %v3599 = vunpack.c.l.b16 %v3510
      %v3600 = vunpack.c.l.b16 %v3511
      %v3601 = vunpack.c.l.b16 %v3512
      %v3602 = vunpack.c.l.b16 %v3513
      %v3603 = vunpack.c.l.b16 %v3514
      %v3604 = vunpack.c.l.b16 %v3515
      %v3605 = vunpack.c.l.b16 %v3516
      %v3606 = vunpack.c.l.b16 %v3517
      %v3607 = vunpack.c.l.b16 %v3518
      %v3608 = vunpack.c.l.b16 %v3519
      %v3609 = vunpack.c.l.b16 %v3520
      %v3610 = vpack.c.b16 %v3586, %v3585
      %v3611 = vpack.c.b16 %v3588, %v3587
      %v3612 = vpack.c.b16 %v3590, %v3589
      %v3613 = vpack.c.b16 %v3592, %v3591
      %v3614 = vpack.c.b16 %v3594, %v3593
      %v3615 = vpack.c.b16 %v3596, %v3595
      %v3616 = vpack.c.b16 %v3598, %v3597
      %v3617 = vpack.c.b16 %v3600, %v3599
      %v3618 = vpack.c.b16 %v3602, %v3601
      %v3619 = vpack.c.b16 %v3604, %v3603
      %v3620 = vpack.c.b16 %v3606, %v3605
      %v3621 = vpack.c.b16 %v3608, %v3607
      %v3622 = vpack.c.b16 %v3609, %v3609
      %v3624 = vshrl.u32 %v3610, 16
      %v3626 = vshll.u32 %v3610, 16
      %v3628 = vrot.slane %v3626, 1
      %v3629 = vor.u32 %v3624, %v3628
      %v3631 = vshll.u32 %v3611, 16
      %v3633 = vrot.slane %v3631, 1
      %v3634 = vsel %vm448, %v3629, %v3633
      %v3635 = vshrl.u32 %v3611, 16
      %v3637 = vor.u32 %v3635, %v3633
      %v3639 = vshll.u32 %v3612, 16
      %v3641 = vrot.slane %v3639, 1
      %v3642 = vsel %vm448, %v3637, %v3641
      %v3643 = vshrl.u32 %v3612, 16
      %v3645 = vor.u32 %v3643, %v3641
      %v3647 = vshll.u32 %v3613, 16
      %v3649 = vrot.slane %v3647, 1
      %v3650 = vsel %vm448, %v3645, %v3649
      %v3651 = vshrl.u32 %v3613, 16
      %v3653 = vor.u32 %v3651, %v3649
      %v3655 = vshll.u32 %v3614, 16
      %v3657 = vrot.slane %v3655, 1
      %v3658 = vsel %vm448, %v3653, %v3657
      %v3659 = vshrl.u32 %v3614, 16
      %v3661 = vor.u32 %v3659, %v3657
      %v3663 = vshll.u32 %v3615, 16
      %v3665 = vrot.slane %v3663, 1
      %v3666 = vsel %vm448, %v3661, %v3665
      %v3667 = vshrl.u32 %v3615, 16
      %v3669 = vor.u32 %v3667, %v3665
      %v3671 = vshll.u32 %v3616, 16
      %v3673 = vrot.slane %v3671, 1
      %v3674 = vsel %vm448, %v3669, %v3673
      %v3675 = vshrl.u32 %v3616, 16
      %v3677 = vor.u32 %v3675, %v3673
      %v3679 = vshll.u32 %v3617, 16
      %v3681 = vrot.slane %v3679, 1
      %v3682 = vsel %vm448, %v3677, %v3681
      %v3683 = vshrl.u32 %v3617, 16
      %v3685 = vor.u32 %v3683, %v3681
      %v3687 = vshll.u32 %v3618, 16
      %v3689 = vrot.slane %v3687, 1
      %v3690 = vsel %vm448, %v3685, %v3689
      %v3691 = vshrl.u32 %v3618, 16
      %v3693 = vor.u32 %v3691, %v3689
      %v3695 = vshll.u32 %v3619, 16
      %v3697 = vrot.slane %v3695, 1
      %v3698 = vsel %vm448, %v3693, %v3697
      %v3699 = vshrl.u32 %v3619, 16
      %v3701 = vor.u32 %v3699, %v3697
      %v3703 = vshll.u32 %v3620, 16
      %v3705 = vrot.slane %v3703, 1
      %v3706 = vsel %vm448, %v3701, %v3705
      %v3707 = vshrl.u32 %v3620, 16
      %v3709 = vor.u32 %v3707, %v3705
      %v3711 = vshll.u32 %v3621, 16
      %v3713 = vrot.slane %v3711, 1
      %v3714 = vsel %vm448, %v3709, %v3713
      %v3715 = vshrl.u32 %v3621, 16
      %v3717 = vor.u32 %v3715, %v3713
      %v3719 = vshll.u32 %v3622, 16
      %v3721 = vrot.slane %v3719, 1
      %v3722 = vsel %vm448, %v3717, %v3721
      %v3751 = vunpack.c.l.b16 %v3544
      %v3752 = vunpack.c.l.b16 %v3545
      %v3753 = vunpack.c.l.b16 %v3546
      %v3754 = vunpack.c.l.b16 %v3547
      %v3755 = vunpack.c.l.b16 %v3548
      %v3756 = vunpack.c.l.b16 %v3549
      %v3757 = vunpack.c.l.b16 %v3550
      %v3758 = vunpack.c.l.b16 %v3551
      %v3759 = vunpack.c.l.b16 %v3552
      %v3760 = vunpack.c.l.b16 %v3553
      %v3761 = vunpack.c.l.b16 %v3554
      %v3762 = vunpack.c.l.b16 %v3555
      %v3763 = vunpack.c.l.b16 %v3556
      %v3764 = vunpack.c.l.b16 %v3557
      %v3765 = vunpack.c.l.b16 %v3558
      %v3766 = vunpack.c.l.b16 %v3559
      %v3767 = vpack.c.b16 %v3752, %v3751
      %v3768 = vpack.c.b16 %v3754, %v3753
      %v3769 = vpack.c.b16 %v3756, %v3755
      %v3770 = vpack.c.b16 %v3758, %v3757
      %v3771 = vpack.c.b16 %v3760, %v3759
      %v3772 = vpack.c.b16 %v3762, %v3761
      %v3773 = vpack.c.b16 %v3764, %v3763
      %v3774 = vpack.c.b16 %v3766, %v3765
      %3783 = vmatprep.subr.bf16.mxu0 0
      %3784 = vmatpush1.bf16.msra.mxu0 %v3774
      %3785 = vmatprep.subr.bf16.mxu0 0
      %3786 = vmatpush1.bf16.msra.mxu0 %v3773
      %3787 = vmatprep.subr.bf16.mxu0 0
      %3788 = vmatpush1.bf16.msra.mxu0 %v3772
      %3789 = vmatprep.subr.bf16.mxu0 0
      %3790 = vmatpush1.bf16.msra.mxu0 %v3771
      %3791 = vmatprep.subr.bf16.mxu0 0
      %3792 = vmatpush1.bf16.msra.mxu0 %v3770
      %3793 = vmatprep.subr.bf16.mxu0 0
      %3794 = vmatpush1.bf16.msra.mxu0 %v3769
      %3795 = vmatprep.subr.bf16.mxu0 0
      %3796 = vmatpush1.bf16.msra.mxu0 %v3768
      %3797 = vmatprep.subr.bf16.mxu0 0
      %3798 = vmatpush1.bf16.msra.mxu0 %v3767
      %3799 = vmatprep.subr.bf16.mxu0 0
      %3800 = vmatpush2.bf16.msra.mxu0 0
      %3801 = vmatprep.subr.bf16.mxu0 0
      %3802 = vmatpush2.bf16.msra.mxu0 0
      %3803 = vmatprep.subr.bf16.mxu0 0
      %3804 = vmatpush2.bf16.msra.mxu0 0
      %3805 = vmatprep.subr.bf16.mxu0 0
      %3806 = vmatpush2.bf16.msra.mxu0 0
      %3807 = vmatprep.subr.bf16.mxu0 0
      %3808 = vmatpush2.bf16.msra.mxu0 0
      %3809 = vmatprep.subr.bf16.mxu0 0
      %3810 = vmatpush2.bf16.msra.mxu0 0
      %3811 = vmatprep.subr.bf16.mxu0 0
      %3812 = vmatpush2.bf16.msra.mxu0 0
      %3813 = vmatprep.subr.bf16.mxu0 0
      %3814 = vmatpush2.bf16.msra.mxu0 0
      %3815 = vmatprep.mubr.bf16.mxu0 0
      %3816 = vmatmul.mubr.bf16.gmra.mxu0 %v3634
      %v3817 = vpop.f32.mrf.mxu0
      %v3818 = vadd.f32 0.0, %v3817
      %v3819 = vpop.f32.mrf.mxu0
      %v3820 = vpop.f32.mrf.mxu0
      %v3821 = vadd.f32 0.0, %v3820
      %v3822 = vpop.f32.mrf.mxu0
      %3823 = vmatprep.mubr.bf16.mxu0 0
      %3824 = vmatmul.mubr.bf16.gmra.mxu0 %v3642
      %v3825 = vpop.f32.mrf.mxu0
      %v3826 = vadd.f32 0.0, %v3825
      %v3827 = vpop.f32.mrf.mxu0
      %v3828 = vpop.f32.mrf.mxu0
      %v3829 = vadd.f32 0.0, %v3828
      %v3830 = vpop.f32.mrf.mxu0
      %3831 = vmatprep.mubr.bf16.mxu0 0
      %3832 = vmatmul.mubr.bf16.gmra.mxu0 %v3650
      %v3833 = vpop.f32.mrf.mxu0
      %v3834 = vadd.f32 0.0, %v3833
      %v3835 = vpop.f32.mrf.mxu0
      %v3836 = vpop.f32.mrf.mxu0
      %v3837 = vadd.f32 0.0, %v3836
      %v3838 = vpop.f32.mrf.mxu0
      %3839 = vmatprep.mubr.bf16.mxu0 0
      %3840 = vmatmul.mubr.bf16.gmra.mxu0 %v3658
      %v3841 = vpop.f32.mrf.mxu0
      %v3842 = vadd.f32 0.0, %v3841
      %v3843 = vpop.f32.mrf.mxu0
      %v3844 = vpop.f32.mrf.mxu0
      %v3845 = vadd.f32 0.0, %v3844
      %v3846 = vpop.f32.mrf.mxu0
      %3847 = vmatprep.mubr.bf16.mxu0 0
      %3848 = vmatmul.mubr.bf16.gmra.mxu0 %v3666
      %v3849 = vpop.f32.mrf.mxu0
      %v3850 = vadd.f32 0.0, %v3849
      %v3851 = vpop.f32.mrf.mxu0
      %v3852 = vpop.f32.mrf.mxu0
      %v3853 = vadd.f32 0.0, %v3852
      %v3854 = vpop.f32.mrf.mxu0
      %3855 = vmatprep.mubr.bf16.mxu0 0
      %3856 = vmatmul.mubr.bf16.gmra.mxu0 %v3674
      %v3857 = vpop.f32.mrf.mxu0
      %v3858 = vadd.f32 0.0, %v3857
      %v3859 = vpop.f32.mrf.mxu0
      %v3860 = vpop.f32.mrf.mxu0
      %v3861 = vadd.f32 0.0, %v3860
      %v3862 = vpop.f32.mrf.mxu0
      %3863 = vmatprep.mubr.bf16.mxu0 0
      %3864 = vmatmul.mubr.bf16.gmra.mxu0 %v3682
      %v3865 = vpop.f32.mrf.mxu0
      %v3866 = vadd.f32 0.0, %v3865
      %v3867 = vpop.f32.mrf.mxu0
      %v3868 = vpop.f32.mrf.mxu0
      %v3869 = vadd.f32 0.0, %v3868
      %v3870 = vpop.f32.mrf.mxu0
      %3871 = vmatprep.mubr.bf16.mxu0 0
      %3872 = vmatmul.mubr.bf16.gmra.mxu0 %v3690
      %v3873 = vpop.f32.mrf.mxu0
      %v3874 = vadd.f32 0.0, %v3873
      %v3875 = vpop.f32.mrf.mxu0
      %v3876 = vpop.f32.mrf.mxu0
      %v3877 = vadd.f32 0.0, %v3876
      %v3878 = vpop.f32.mrf.mxu0
      %3879 = vmatprep.mubr.bf16.mxu0 0
      %3880 = vmatmul.mubr.bf16.gmra.mxu0 %v3698
      %v3881 = vpop.f32.mrf.mxu0
      %v3882 = vadd.f32 0.0, %v3881
      %v3883 = vpop.f32.mrf.mxu0
      %v3884 = vpop.f32.mrf.mxu0
      %v3885 = vadd.f32 0.0, %v3884
      %v3886 = vpop.f32.mrf.mxu0
      %3887 = vmatprep.mubr.bf16.mxu0 0
      %3888 = vmatmul.mubr.bf16.gmra.mxu0 %v3706
      %v3889 = vpop.f32.mrf.mxu0
      %v3890 = vadd.f32 0.0, %v3889
      %v3891 = vpop.f32.mrf.mxu0
      %v3892 = vpop.f32.mrf.mxu0
      %v3893 = vadd.f32 0.0, %v3892
      %v3894 = vpop.f32.mrf.mxu0
      %3895 = vmatprep.mubr.bf16.mxu0 0
      %3896 = vmatmul.mubr.bf16.gmra.mxu0 %v3714
      %v3897 = vpop.f32.mrf.mxu0
      %v3898 = vadd.f32 0.0, %v3897
      %v3899 = vpop.f32.mrf.mxu0
      %v3900 = vpop.f32.mrf.mxu0
      %v3901 = vadd.f32 0.0, %v3900
      %v3902 = vpop.f32.mrf.mxu0
      %3903 = vmatprep.mubr.bf16.mxu0 0
      %3904 = vmatmul.mubr.bf16.gmra.mxu0 %v3722
      %v3905 = vpop.f32.mrf.mxu0
      %v3906 = vadd.f32 0.0, %v3905
      %v3907 = vpop.f32.mrf.mxu0
      %v3908 = vpop.f32.mrf.mxu0
      %v3909 = vadd.f32 0.0, %v3908
      %v3910 = vpop.f32.mrf.mxu0
      %3911 = vdwg.mxu0
      %v3940 = vunpack.c.l.b16 %v3527
      %v3941 = vunpack.c.l.b16 %v3528
      %v3942 = vunpack.c.l.b16 %v3529
      %v3943 = vunpack.c.l.b16 %v3530
      %v3944 = vunpack.c.l.b16 %v3531
      %v3945 = vunpack.c.l.b16 %v3532
      %v3946 = vunpack.c.l.b16 %v3533
      %v3947 = vunpack.c.l.b16 %v3534
      %v3948 = vunpack.c.l.b16 %v3535
      %v3949 = vunpack.c.l.b16 %v3536
      %v3950 = vunpack.c.l.b16 %v3537
      %v3951 = vunpack.c.l.b16 %v3538
      %v3952 = vunpack.c.l.b16 %v3539
      %v3953 = vunpack.c.l.b16 %v3540
      %v3954 = vunpack.c.l.b16 %v3541
      %v3955 = vunpack.c.l.b16 %v3542
      %v3956 = vpack.c.b16 %v3941, %v3940
      %v3957 = vpack.c.b16 %v3943, %v3942
      %v3958 = vpack.c.b16 %v3945, %v3944
      %v3959 = vpack.c.b16 %v3947, %v3946
      %v3960 = vpack.c.b16 %v3949, %v3948
      %v3961 = vpack.c.b16 %v3951, %v3950
      %v3962 = vpack.c.b16 %v3953, %v3952
      %v3963 = vpack.c.b16 %v3955, %v3954
      %3972 = vmatprep.subr.bf16.mxu0 0
      %3973 = vmatpush1.bf16.msra.mxu0 %v3963
      %3974 = vmatprep.subr.bf16.mxu0 0
      %3975 = vmatpush1.bf16.msra.mxu0 %v3962
      %3976 = vmatprep.subr.bf16.mxu0 0
      %3977 = vmatpush1.bf16.msra.mxu0 %v3961
      %3978 = vmatprep.subr.bf16.mxu0 0
      %3979 = vmatpush1.bf16.msra.mxu0 %v3960
      %3980 = vmatprep.subr.bf16.mxu0 0
      %3981 = vmatpush1.bf16.msra.mxu0 %v3959
      %3982 = vmatprep.subr.bf16.mxu0 0
      %3983 = vmatpush1.bf16.msra.mxu0 %v3958
      %3984 = vmatprep.subr.bf16.mxu0 0
      %3985 = vmatpush1.bf16.msra.mxu0 %v3957
      %3986 = vmatprep.subr.bf16.mxu0 0
      %3987 = vmatpush1.bf16.msra.mxu0 %v3956
      %3988 = vmatprep.subr.bf16.mxu0 0
      %3989 = vmatpush2.bf16.msra.mxu0 0
      %3990 = vmatprep.subr.bf16.mxu0 0
      %3991 = vmatpush2.bf16.msra.mxu0 0
      %3992 = vmatprep.subr.bf16.mxu0 0
      %3993 = vmatpush2.bf16.msra.mxu0 0
      %3994 = vmatprep.subr.bf16.mxu0 0
      %3995 = vmatpush2.bf16.msra.mxu0 0
      %3996 = vmatprep.subr.bf16.mxu0 0
      %3997 = vmatpush2.bf16.msra.mxu0 0
      %3998 = vmatprep.subr.bf16.mxu0 0
      %3999 = vmatpush2.bf16.msra.mxu0 0
      %4000 = vmatprep.subr.bf16.mxu0 0
      %4001 = vmatpush2.bf16.msra.mxu0 0
      %4002 = vmatprep.subr.bf16.mxu0 0
      %4003 = vmatpush2.bf16.msra.mxu0 0
      %4004 = vmatprep.mubr.bf16.mxu0 0
      %4005 = vmatmul.mubr.bf16.gmra.mxu0 %v3610
      %v4006 = vpop.f32.mrf.mxu0
      %v4007 = vadd.f32 %v3818, %v4006
      %v4008 = vpop.f32.mrf.mxu0
      %v4009 = vpop.f32.mrf.mxu0
      %v4010 = vadd.f32 %v3821, %v4009
      %v4011 = vpop.f32.mrf.mxu0
      %4012 = vmatprep.mubr.bf16.mxu0 0
      %4013 = vmatmul.mubr.bf16.gmra.mxu0 %v3611
      %v4014 = vpop.f32.mrf.mxu0
      %v4015 = vadd.f32 %v3826, %v4014
      %v4016 = vpop.f32.mrf.mxu0
      %v4017 = vpop.f32.mrf.mxu0
      %v4018 = vadd.f32 %v3829, %v4017
      %v4019 = vpop.f32.mrf.mxu0
      %4020 = vmatprep.mubr.bf16.mxu0 0
      %4021 = vmatmul.mubr.bf16.gmra.mxu0 %v3612
      %v4022 = vpop.f32.mrf.mxu0
      %v4023 = vadd.f32 %v3834, %v4022
      %v4024 = vpop.f32.mrf.mxu0
      %v4025 = vpop.f32.mrf.mxu0
      %v4026 = vadd.f32 %v3837, %v4025
      %v4027 = vpop.f32.mrf.mxu0
      %4028 = vmatprep.mubr.bf16.mxu0 0
      %4029 = vmatmul.mubr.bf16.gmra.mxu0 %v3613
      %v4030 = vpop.f32.mrf.mxu0
      %v4031 = vadd.f32 %v3842, %v4030
      %v4032 = vpop.f32.mrf.mxu0
      %v4033 = vpop.f32.mrf.mxu0
      %v4034 = vadd.f32 %v3845, %v4033
      %v4035 = vpop.f32.mrf.mxu0
      %4036 = vmatprep.mubr.bf16.mxu0 0
      %4037 = vmatmul.mubr.bf16.gmra.mxu0 %v3614
      %v4038 = vpop.f32.mrf.mxu0
      %v4039 = vadd.f32 %v3850, %v4038
      %v4040 = vpop.f32.mrf.mxu0
      %v4041 = vpop.f32.mrf.mxu0
      %v4042 = vadd.f32 %v3853, %v4041
      %v4043 = vpop.f32.mrf.mxu0
      %4044 = vmatprep.mubr.bf16.mxu0 0
      %4045 = vmatmul.mubr.bf16.gmra.mxu0 %v3615
      %v4046 = vpop.f32.mrf.mxu0
      %v4047 = vadd.f32 %v3858, %v4046
      %v4048 = vpop.f32.mrf.mxu0
      %v4049 = vpop.f32.mrf.mxu0
      %v4050 = vadd.f32 %v3861, %v4049
      %v4051 = vpop.f32.mrf.mxu0
      %4052 = vmatprep.mubr.bf16.mxu0 0
      %4053 = vmatmul.mubr.bf16.gmra.mxu0 %v3616
      %v4054 = vpop.f32.mrf.mxu0
      %v4055 = vadd.f32 %v3866, %v4054
      %v4056 = vpop.f32.mrf.mxu0
      %v4057 = vpop.f32.mrf.mxu0
      %v4058 = vadd.f32 %v3869, %v4057
      %v4059 = vpop.f32.mrf.mxu0
      %4060 = vmatprep.mubr.bf16.mxu0 0
      %4061 = vmatmul.mubr.bf16.gmra.mxu0 %v3617
      %v4062 = vpop.f32.mrf.mxu0
      %v4063 = vadd.f32 %v3874, %v4062
      %v4064 = vpop.f32.mrf.mxu0
      %v4065 = vpop.f32.mrf.mxu0
      %v4066 = vadd.f32 %v3877, %v4065
      %v4067 = vpop.f32.mrf.mxu0
      %4068 = vmatprep.mubr.bf16.mxu0 0
      %4069 = vmatmul.mubr.bf16.gmra.mxu0 %v3618
      %v4070 = vpop.f32.mrf.mxu0
      %v4071 = vadd.f32 %v3882, %v4070
      %v4072 = vpop.f32.mrf.mxu0
      %v4073 = vpop.f32.mrf.mxu0
      %v4074 = vadd.f32 %v3885, %v4073
      %v4075 = vpop.f32.mrf.mxu0
      %4076 = vmatprep.mubr.bf16.mxu0 0
      %4077 = vmatmul.mubr.bf16.gmra.mxu0 %v3619
      %v4078 = vpop.f32.mrf.mxu0
      %v4079 = vadd.f32 %v3890, %v4078
      %v4080 = vpop.f32.mrf.mxu0
      %v4081 = vpop.f32.mrf.mxu0
      %v4082 = vadd.f32 %v3893, %v4081
      %v4083 = vpop.f32.mrf.mxu0
      %4084 = vmatprep.mubr.bf16.mxu0 0
      %4085 = vmatmul.mubr.bf16.gmra.mxu0 %v3620
      %v4086 = vpop.f32.mrf.mxu0
      %v4087 = vadd.f32 %v3898, %v4086
      %v4088 = vpop.f32.mrf.mxu0
      %v4089 = vpop.f32.mrf.mxu0
      %v4090 = vadd.f32 %v3901, %v4089
      %v4091 = vpop.f32.mrf.mxu0
      %4092 = vmatprep.mubr.bf16.mxu0 0
      %4093 = vmatmul.mubr.bf16.gmra.mxu0 %v3621
      %v4094 = vpop.f32.mrf.mxu0
      %v4095 = vadd.f32 %v3906, %v4094
      %v4096 = vpop.f32.mrf.mxu0
      %v4097 = vpop.f32.mrf.mxu0
      %v4098 = vadd.f32 %v3909, %v4097
      %v4099 = vpop.f32.mrf.mxu0
      %4100 = vdwg.mxu0
      %s4101 = scalar_lea.vmem %s3, 128
      %v4102 = vld [vmem:[%s4101] sm:$0xf]
      %v4103 = vld [vmem:[%s4101 + $0x4] sm:$0xf]
      %v4104 = vld [vmem:[%s4101 + $0x8] sm:$0xf]
      %v4105 = vld [vmem:[%s4101 + $0xc] sm:$0xf]
      %v4106 = vld [vmem:[%s4101 + $0x10] sm:$0xf]
      %v4107 = vld [vmem:[%s4101 + $0x14] sm:$0xf]
      %v4108 = vld [vmem:[%s4101 + $0x18] sm:$0xf]
      %v4109 = vld [vmem:[%s4101 + $0x1c] sm:$0xf]
      %v4110 = vld [vmem:[%s4101 + $0x20] sm:$0xf]
      %v4111 = vld [vmem:[%s4101 + $0x24] sm:$0xf]
      %v4112 = vld [vmem:[%s4101 + $0x28] sm:$0xf]
      %v4113 = vld [vmem:[%s4101 + $0x2c] sm:$0xf]
      %v4114 = vld [vmem:[%s4101 + $0x30] sm:$0xf]
      %v4115 = vld [vmem:[%s4101 + $0x34] sm:$0xf]
      %v4116 = vld [vmem:[%s4101 + $0x38] sm:$0xf]
      %v4117 = vld [vmem:[%s4101 + $0x3c] sm:$0xf]
      %v4118 = vrot.slane %v3610, 1
      %v4119 = vrot.slane %v3611, 1
      %v4120 = vsel %vm1022, %v4118, %v4119
      %v4121 = vrot.slane %v3612, 1
      %v4122 = vsel %vm1022, %v4119, %v4121
      %v4123 = vrot.slane %v3613, 1
      %v4124 = vsel %vm1022, %v4121, %v4123
      %v4125 = vrot.slane %v3614, 1
      %v4126 = vsel %vm1022, %v4123, %v4125
      %v4127 = vrot.slane %v3615, 1
      %v4128 = vsel %vm1022, %v4125, %v4127
      %v4129 = vrot.slane %v3616, 1
      %v4130 = vsel %vm1022, %v4127, %v4129
      %v4131 = vrot.slane %v3617, 1
      %v4132 = vsel %vm1022, %v4129, %v4131
      %v4133 = vrot.slane %v3618, 1
      %v4134 = vsel %vm1022, %v4131, %v4133
      %v4135 = vrot.slane %v3619, 1
      %v4136 = vsel %vm1022, %v4133, %v4135
      %v4137 = vrot.slane %v3620, 1
      %v4138 = vsel %vm1022, %v4135, %v4137
      %v4139 = vrot.slane %v3621, 1
      %v4140 = vsel %vm1022, %v4137, %v4139
      %v4141 = vrot.slane %v3622, 1
      %v4142 = vsel %vm1022, %v4139, %v4141
      %v4171 = vunpack.c.l.b16 %v4102
      %v4172 = vunpack.c.l.b16 %v4103
      %v4173 = vunpack.c.l.b16 %v4104
      %v4174 = vunpack.c.l.b16 %v4105
      %v4175 = vunpack.c.l.b16 %v4106
      %v4176 = vunpack.c.l.b16 %v4107
      %v4177 = vunpack.c.l.b16 %v4108
      %v4178 = vunpack.c.l.b16 %v4109
      %v4179 = vunpack.c.l.b16 %v4110
      %v4180 = vunpack.c.l.b16 %v4111
      %v4181 = vunpack.c.l.b16 %v4112
      %v4182 = vunpack.c.l.b16 %v4113
      %v4183 = vunpack.c.l.b16 %v4114
      %v4184 = vunpack.c.l.b16 %v4115
      %v4185 = vunpack.c.l.b16 %v4116
      %v4186 = vunpack.c.l.b16 %v4117
      %v4187 = vpack.c.b16 %v4172, %v4171
      %v4188 = vpack.c.b16 %v4174, %v4173
      %v4189 = vpack.c.b16 %v4176, %v4175
      %v4190 = vpack.c.b16 %v4178, %v4177
      %v4191 = vpack.c.b16 %v4180, %v4179
      %v4192 = vpack.c.b16 %v4182, %v4181
      %v4193 = vpack.c.b16 %v4184, %v4183
      %v4194 = vpack.c.b16 %v4186, %v4185
      %4203 = vmatprep.subr.bf16.mxu0 0
      %4204 = vmatpush1.bf16.msra.mxu0 %v4194
      %4205 = vmatprep.subr.bf16.mxu0 0
      %4206 = vmatpush1.bf16.msra.mxu0 %v4193
      %4207 = vmatprep.subr.bf16.mxu0 0
      %4208 = vmatpush1.bf16.msra.mxu0 %v4192
      %4209 = vmatprep.subr.bf16.mxu0 0
      %4210 = vmatpush1.bf16.msra.mxu0 %v4191
      %4211 = vmatprep.subr.bf16.mxu0 0
      %4212 = vmatpush1.bf16.msra.mxu0 %v4190
      %4213 = vmatprep.subr.bf16.mxu0 0
      %4214 = vmatpush1.bf16.msra.mxu0 %v4189
      %4215 = vmatprep.subr.bf16.mxu0 0
      %4216 = vmatpush1.bf16.msra.mxu0 %v4188
      %4217 = vmatprep.subr.bf16.mxu0 0
      %4218 = vmatpush1.bf16.msra.mxu0 %v4187
      %4219 = vmatprep.subr.bf16.mxu0 0
      %4220 = vmatpush2.bf16.msra.mxu0 0
      %4221 = vmatprep.subr.bf16.mxu0 0
      %4222 = vmatpush2.bf16.msra.mxu0 0
      %4223 = vmatprep.subr.bf16.mxu0 0
      %4224 = vmatpush2.bf16.msra.mxu0 0
      %4225 = vmatprep.subr.bf16.mxu0 0
      %4226 = vmatpush2.bf16.msra.mxu0 0
      %4227 = vmatprep.subr.bf16.mxu0 0
      %4228 = vmatpush2.bf16.msra.mxu0 0
      %4229 = vmatprep.subr.bf16.mxu0 0
      %4230 = vmatpush2.bf16.msra.mxu0 0
      %4231 = vmatprep.subr.bf16.mxu0 0
      %4232 = vmatpush2.bf16.msra.mxu0 0
      %4233 = vmatprep.subr.bf16.mxu0 0
      %4234 = vmatpush2.bf16.msra.mxu0 0
      %4235 = vmatprep.mubr.bf16.mxu0 0
      %4236 = vmatmul.mubr.bf16.gmra.mxu0 %v4120
      %v4237 = vpop.f32.mrf.mxu0
      %v4238 = vadd.f32 0.0, %v4237
      %v4239 = vpop.f32.mrf.mxu0
      %v4240 = vpop.f32.mrf.mxu0
      %v4241 = vadd.f32 0.0, %v4240
      %v4242 = vpop.f32.mrf.mxu0
      %4243 = vmatprep.mubr.bf16.mxu0 0
      %4244 = vmatmul.mubr.bf16.gmra.mxu0 %v4122
      %v4245 = vpop.f32.mrf.mxu0
      %v4246 = vadd.f32 0.0, %v4245
      %v4247 = vpop.f32.mrf.mxu0
      %v4248 = vpop.f32.mrf.mxu0
      %v4249 = vadd.f32 0.0, %v4248
      %v4250 = vpop.f32.mrf.mxu0
      %4251 = vmatprep.mubr.bf16.mxu0 0
      %4252 = vmatmul.mubr.bf16.gmra.mxu0 %v4124
      %v4253 = vpop.f32.mrf.mxu0
      %v4254 = vadd.f32 0.0, %v4253
      %v4255 = vpop.f32.mrf.mxu0
      %v4256 = vpop.f32.mrf.mxu0
      %v4257 = vadd.f32 0.0, %v4256
      %v4258 = vpop.f32.mrf.mxu0
      %4259 = vmatprep.mubr.bf16.mxu0 0
      %4260 = vmatmul.mubr.bf16.gmra.mxu0 %v4126
      %v4261 = vpop.f32.mrf.mxu0
      %v4262 = vadd.f32 0.0, %v4261
      %v4263 = vpop.f32.mrf.mxu0
      %v4264 = vpop.f32.mrf.mxu0
      %v4265 = vadd.f32 0.0, %v4264
      %v4266 = vpop.f32.mrf.mxu0
      %4267 = vmatprep.mubr.bf16.mxu0 0
      %4268 = vmatmul.mubr.bf16.gmra.mxu0 %v4128
      %v4269 = vpop.f32.mrf.mxu0
      %v4270 = vadd.f32 0.0, %v4269
      %v4271 = vpop.f32.mrf.mxu0
      %v4272 = vpop.f32.mrf.mxu0
      %v4273 = vadd.f32 0.0, %v4272
      %v4274 = vpop.f32.mrf.mxu0
      %4275 = vmatprep.mubr.bf16.mxu0 0
      %4276 = vmatmul.mubr.bf16.gmra.mxu0 %v4130
      %v4277 = vpop.f32.mrf.mxu0
      %v4278 = vadd.f32 0.0, %v4277
      %v4279 = vpop.f32.mrf.mxu0
      %v4280 = vpop.f32.mrf.mxu0
      %v4281 = vadd.f32 0.0, %v4280
      %v4282 = vpop.f32.mrf.mxu0
      %4283 = vmatprep.mubr.bf16.mxu0 0
      %4284 = vmatmul.mubr.bf16.gmra.mxu0 %v4132
      %v4285 = vpop.f32.mrf.mxu0
      %v4286 = vadd.f32 0.0, %v4285
      %v4287 = vpop.f32.mrf.mxu0
      %v4288 = vpop.f32.mrf.mxu0
      %v4289 = vadd.f32 0.0, %v4288
      %v4290 = vpop.f32.mrf.mxu0
      %4291 = vmatprep.mubr.bf16.mxu0 0
      %4292 = vmatmul.mubr.bf16.gmra.mxu0 %v4134
      %v4293 = vpop.f32.mrf.mxu0
      %v4294 = vadd.f32 0.0, %v4293
      %v4295 = vpop.f32.mrf.mxu0
      %v4296 = vpop.f32.mrf.mxu0
      %v4297 = vadd.f32 0.0, %v4296
      %v4298 = vpop.f32.mrf.mxu0
      %4299 = vmatprep.mubr.bf16.mxu0 0
      %4300 = vmatmul.mubr.bf16.gmra.mxu0 %v4136
      %v4301 = vpop.f32.mrf.mxu0
      %v4302 = vadd.f32 0.0, %v4301
      %v4303 = vpop.f32.mrf.mxu0
      %v4304 = vpop.f32.mrf.mxu0
      %v4305 = vadd.f32 0.0, %v4304
      %v4306 = vpop.f32.mrf.mxu0
      %4307 = vmatprep.mubr.bf16.mxu0 0
      %4308 = vmatmul.mubr.bf16.gmra.mxu0 %v4138
      %v4309 = vpop.f32.mrf.mxu0
      %v4310 = vadd.f32 0.0, %v4309
      %v4311 = vpop.f32.mrf.mxu0
      %v4312 = vpop.f32.mrf.mxu0
      %v4313 = vadd.f32 0.0, %v4312
      %v4314 = vpop.f32.mrf.mxu0
      %4315 = vmatprep.mubr.bf16.mxu0 0
      %4316 = vmatmul.mubr.bf16.gmra.mxu0 %v4140
      %v4317 = vpop.f32.mrf.mxu0
      %v4318 = vadd.f32 0.0, %v4317
      %v4319 = vpop.f32.mrf.mxu0
      %v4320 = vpop.f32.mrf.mxu0
      %v4321 = vadd.f32 0.0, %v4320
      %v4322 = vpop.f32.mrf.mxu0
      %4323 = vmatprep.mubr.bf16.mxu0 0
      %4324 = vmatmul.mubr.bf16.gmra.mxu0 %v4142
      %v4325 = vpop.f32.mrf.mxu0
      %v4326 = vadd.f32 0.0, %v4325
      %v4327 = vpop.f32.mrf.mxu0
      %v4328 = vpop.f32.mrf.mxu0
      %v4329 = vadd.f32 0.0, %v4328
      %v4330 = vpop.f32.mrf.mxu0
      %4331 = vdwg.mxu0
      %v4332 = vadd.f32 %v4007, %v4238
      %v4333 = vadd.f32 %v4010, %v4241
      %v4334 = vadd.f32 %v4015, %v4246
      %v4335 = vadd.f32 %v4018, %v4249
      %v4336 = vadd.f32 %v4023, %v4254
      %v4337 = vadd.f32 %v4026, %v4257
      %v4338 = vadd.f32 %v4031, %v4262
      %v4339 = vadd.f32 %v4034, %v4265
      %v4340 = vadd.f32 %v4039, %v4270
      %v4341 = vadd.f32 %v4042, %v4273
      %v4342 = vadd.f32 %v4047, %v4278
      %v4343 = vadd.f32 %v4050, %v4281
      %v4344 = vadd.f32 %v4055, %v4286
      %v4345 = vadd.f32 %v4058, %v4289
      %v4346 = vadd.f32 %v4063, %v4294
      %v4347 = vadd.f32 %v4066, %v4297
      %v4348 = vadd.f32 %v4071, %v4302
      %v4349 = vadd.f32 %v4074, %v4305
      %v4350 = vadd.f32 %v4079, %v4310
      %v4351 = vadd.f32 %v4082, %v4313
      %v4352 = vadd.f32 %v4087, %v4318
      %v4353 = vadd.f32 %v4090, %v4321
      %v4354 = vadd.f32 %v4095, %v4326
      %v4355 = vadd.f32 %v4098, %v4329
      %s4356 = scalar_lea.vmem %s3, 192
      %v4357 = vld [vmem:[%s4356] sm:$0xf]
      %v4358 = vld [vmem:[%s4356 + $0x4] sm:$0xf]
      %v4359 = vld [vmem:[%s4356 + $0x8] sm:$0xf]
      %v4360 = vld [vmem:[%s4356 + $0xc] sm:$0xf]
      %v4361 = vld [vmem:[%s4356 + $0x10] sm:$0xf]
      %v4362 = vld [vmem:[%s4356 + $0x14] sm:$0xf]
      %v4363 = vld [vmem:[%s4356 + $0x18] sm:$0xf]
      %v4364 = vld [vmem:[%s4356 + $0x1c] sm:$0xf]
      %v4365 = vld [vmem:[%s4356 + $0x20] sm:$0xf]
      %v4366 = vld [vmem:[%s4356 + $0x24] sm:$0xf]
      %v4367 = vld [vmem:[%s4356 + $0x28] sm:$0xf]
      %v4368 = vld [vmem:[%s4356 + $0x2c] sm:$0xf]
      %v4369 = vld [vmem:[%s4356 + $0x30] sm:$0xf]
      %v4370 = vld [vmem:[%s4356 + $0x34] sm:$0xf]
      %v4371 = vld [vmem:[%s4356 + $0x38] sm:$0xf]
      %v4372 = vld [vmem:[%s4356 + $0x3c] sm:$0xf]
      %v4375 = vunpack.c.l.b16 %v3521
      %v4376 = vunpack.c.l.b16 %v3522
      %v4377 = vpack.c.b16 %v3589, %v3588
      %v4378 = vpack.c.b16 %v3591, %v3590
      %v4379 = vpack.c.b16 %v3593, %v3592
      %v4380 = vpack.c.b16 %v3595, %v3594
      %v4381 = vpack.c.b16 %v3597, %v3596
      %v4382 = vpack.c.b16 %v3599, %v3598
      %v4383 = vpack.c.b16 %v3601, %v3600
      %v4384 = vpack.c.b16 %v3603, %v3602
      %v4385 = vpack.c.b16 %v3605, %v3604
      %v4386 = vpack.c.b16 %v3607, %v3606
      %v4387 = vpack.c.b16 %v3609, %v3608
      %v4388 = vpack.c.b16 %v4376, %v4375
      %v4417 = vunpack.c.l.b16 %v4357
      %v4418 = vunpack.c.l.b16 %v4358
      %v4419 = vunpack.c.l.b16 %v4359
      %v4420 = vunpack.c.l.b16 %v4360
      %v4421 = vunpack.c.l.b16 %v4361
      %v4422 = vunpack.c.l.b16 %v4362
      %v4423 = vunpack.c.l.b16 %v4363
      %v4424 = vunpack.c.l.b16 %v4364
      %v4425 = vunpack.c.l.b16 %v4365
      %v4426 = vunpack.c.l.b16 %v4366
      %v4427 = vunpack.c.l.b16 %v4367
      %v4428 = vunpack.c.l.b16 %v4368
      %v4429 = vunpack.c.l.b16 %v4369
      %v4430 = vunpack.c.l.b16 %v4370
      %v4431 = vunpack.c.l.b16 %v4371
      %v4432 = vunpack.c.l.b16 %v4372
      %v4433 = vpack.c.b16 %v4418, %v4417
      %v4434 = vpack.c.b16 %v4420, %v4419
      %v4435 = vpack.c.b16 %v4422, %v4421
      %v4436 = vpack.c.b16 %v4424, %v4423
      %v4437 = vpack.c.b16 %v4426, %v4425
      %v4438 = vpack.c.b16 %v4428, %v4427
      %v4439 = vpack.c.b16 %v4430, %v4429
      %v4440 = vpack.c.b16 %v4432, %v4431
      %4449 = vmatprep.subr.bf16.mxu0 0
      %4450 = vmatpush1.bf16.msra.mxu0 %v4440
      %4451 = vmatprep.subr.bf16.mxu0 0
      %4452 = vmatpush1.bf16.msra.mxu0 %v4439
      %4453 = vmatprep.subr.bf16.mxu0 0
      %4454 = vmatpush1.bf16.msra.mxu0 %v4438
      %4455 = vmatprep.subr.bf16.mxu0 0
      %4456 = vmatpush1.bf16.msra.mxu0 %v4437
      %4457 = vmatprep.subr.bf16.mxu0 0
      %4458 = vmatpush1.bf16.msra.mxu0 %v4436
      %4459 = vmatprep.subr.bf16.mxu0 0
      %4460 = vmatpush1.bf16.msra.mxu0 %v4435
      %4461 = vmatprep.subr.bf16.mxu0 0
      %4462 = vmatpush1.bf16.msra.mxu0 %v4434
      %4463 = vmatprep.subr.bf16.mxu0 0
      %4464 = vmatpush1.bf16.msra.mxu0 %v4433
      %4465 = vmatprep.subr.bf16.mxu0 0
      %4466 = vmatpush2.bf16.msra.mxu0 0
      %4467 = vmatprep.subr.bf16.mxu0 0
      %4468 = vmatpush2.bf16.msra.mxu0 0
      %4469 = vmatprep.subr.bf16.mxu0 0
      %4470 = vmatpush2.bf16.msra.mxu0 0
      %4471 = vmatprep.subr.bf16.mxu0 0
      %4472 = vmatpush2.bf16.msra.mxu0 0
      %4473 = vmatprep.subr.bf16.mxu0 0
      %4474 = vmatpush2.bf16.msra.mxu0 0
      %4475 = vmatprep.subr.bf16.mxu0 0
      %4476 = vmatpush2.bf16.msra.mxu0 0
      %4477 = vmatprep.subr.bf16.mxu0 0
      %4478 = vmatpush2.bf16.msra.mxu0 0
      %4479 = vmatprep.subr.bf16.mxu0 0
      %4480 = vmatpush2.bf16.msra.mxu0 0
      %4481 = vmatprep.mubr.bf16.mxu0 0
      %4482 = vmatmul.mubr.bf16.gmra.mxu0 %v4377
      %v4483 = vpop.f32.mrf.mxu0
      %v4484 = vadd.f32 0.0, %v4483
      %v4485 = vpop.f32.mrf.mxu0
      %v4486 = vpop.f32.mrf.mxu0
      %v4487 = vadd.f32 0.0, %v4486
      %v4488 = vpop.f32.mrf.mxu0
      %4489 = vmatprep.mubr.bf16.mxu0 0
      %4490 = vmatmul.mubr.bf16.gmra.mxu0 %v4378
      %v4491 = vpop.f32.mrf.mxu0
      %v4492 = vadd.f32 0.0, %v4491
      %v4493 = vpop.f32.mrf.mxu0
      %v4494 = vpop.f32.mrf.mxu0
      %v4495 = vadd.f32 0.0, %v4494
      %v4496 = vpop.f32.mrf.mxu0
      %4497 = vmatprep.mubr.bf16.mxu0 0
      %4498 = vmatmul.mubr.bf16.gmra.mxu0 %v4379
      %v4499 = vpop.f32.mrf.mxu0
      %v4500 = vadd.f32 0.0, %v4499
      %v4501 = vpop.f32.mrf.mxu0
      %v4502 = vpop.f32.mrf.mxu0
      %v4503 = vadd.f32 0.0, %v4502
      %v4504 = vpop.f32.mrf.mxu0
      %4505 = vmatprep.mubr.bf16.mxu0 0
      %4506 = vmatmul.mubr.bf16.gmra.mxu0 %v4380
      %v4507 = vpop.f32.mrf.mxu0
      %v4508 = vadd.f32 0.0, %v4507
      %v4509 = vpop.f32.mrf.mxu0
      %v4510 = vpop.f32.mrf.mxu0
      %v4511 = vadd.f32 0.0, %v4510
      %v4512 = vpop.f32.mrf.mxu0
      %4513 = vmatprep.mubr.bf16.mxu0 0
      %4514 = vmatmul.mubr.bf16.gmra.mxu0 %v4381
      %v4515 = vpop.f32.mrf.mxu0
      %v4516 = vadd.f32 0.0, %v4515
      %v4517 = vpop.f32.mrf.mxu0
      %v4518 = vpop.f32.mrf.mxu0
      %v4519 = vadd.f32 0.0, %v4518
      %v4520 = vpop.f32.mrf.mxu0
      %4521 = vmatprep.mubr.bf16.mxu0 0
      %4522 = vmatmul.mubr.bf16.gmra.mxu0 %v4382
      %v4523 = vpop.f32.mrf.mxu0
      %v4524 = vadd.f32 0.0, %v4523
      %v4525 = vpop.f32.mrf.mxu0
      %v4526 = vpop.f32.mrf.mxu0
      %v4527 = vadd.f32 0.0, %v4526
      %v4528 = vpop.f32.mrf.mxu0
      %4529 = vmatprep.mubr.bf16.mxu0 0
      %4530 = vmatmul.mubr.bf16.gmra.mxu0 %v4383
      %v4531 = vpop.f32.mrf.mxu0
      %v4532 = vadd.f32 0.0, %v4531
      %v4533 = vpop.f32.mrf.mxu0
      %v4534 = vpop.f32.mrf.mxu0
      %v4535 = vadd.f32 0.0, %v4534
      %v4536 = vpop.f32.mrf.mxu0
      %4537 = vmatprep.mubr.bf16.mxu0 0
      %4538 = vmatmul.mubr.bf16.gmra.mxu0 %v4384
      %v4539 = vpop.f32.mrf.mxu0
      %v4540 = vadd.f32 0.0, %v4539
      %v4541 = vpop.f32.mrf.mxu0
      %v4542 = vpop.f32.mrf.mxu0
      %v4543 = vadd.f32 0.0, %v4542
      %v4544 = vpop.f32.mrf.mxu0
      %4545 = vmatprep.mubr.bf16.mxu0 0
      %4546 = vmatmul.mubr.bf16.gmra.mxu0 %v4385
      %v4547 = vpop.f32.mrf.mxu0
      %v4548 = vadd.f32 0.0, %v4547
      %v4549 = vpop.f32.mrf.mxu0
      %v4550 = vpop.f32.mrf.mxu0
      %v4551 = vadd.f32 0.0, %v4550
      %v4552 = vpop.f32.mrf.mxu0
      %4553 = vmatprep.mubr.bf16.mxu0 0
      %4554 = vmatmul.mubr.bf16.gmra.mxu0 %v4386
      %v4555 = vpop.f32.mrf.mxu0
      %v4556 = vadd.f32 0.0, %v4555
      %v4557 = vpop.f32.mrf.mxu0
      %v4558 = vpop.f32.mrf.mxu0
      %v4559 = vadd.f32 0.0, %v4558
      %v4560 = vpop.f32.mrf.mxu0
      %4561 = vmatprep.mubr.bf16.mxu0 0
      %4562 = vmatmul.mubr.bf16.gmra.mxu0 %v4387
      %v4563 = vpop.f32.mrf.mxu0
      %v4564 = vadd.f32 0.0, %v4563
      %v4565 = vpop.f32.mrf.mxu0
      %v4566 = vpop.f32.mrf.mxu0
      %v4567 = vadd.f32 0.0, %v4566
      %v4568 = vpop.f32.mrf.mxu0
      %4569 = vmatprep.mubr.bf16.mxu0 0
      %4570 = vmatmul.mubr.bf16.gmra.mxu0 %v4388
      %v4571 = vpop.f32.mrf.mxu0
      %v4572 = vadd.f32 0.0, %v4571
      %v4573 = vpop.f32.mrf.mxu0
      %v4574 = vpop.f32.mrf.mxu0
      %v4575 = vadd.f32 0.0, %v4574
      %v4576 = vpop.f32.mrf.mxu0
      %4577 = vdwg.mxu0
      %v4578 = vadd.f32 %v4332, %v4484
      %v4579 = vadd.f32 %v4333, %v4487
      %v4580 = vadd.f32 %v4334, %v4492
      %v4581 = vadd.f32 %v4335, %v4495
      %v4582 = vadd.f32 %v4336, %v4500
      %v4583 = vadd.f32 %v4337, %v4503
      %v4584 = vadd.f32 %v4338, %v4508
      %v4585 = vadd.f32 %v4339, %v4511
      %v4586 = vadd.f32 %v4340, %v4516
      %v4587 = vadd.f32 %v4341, %v4519
      %v4588 = vadd.f32 %v4342, %v4524
      %v4589 = vadd.f32 %v4343, %v4527
      %v4590 = vadd.f32 %v4344, %v4532
      %v4591 = vadd.f32 %v4345, %v4535
      %v4592 = vadd.f32 %v4346, %v4540
      %v4593 = vadd.f32 %v4347, %v4543
      %v4594 = vadd.f32 %v4348, %v4548
      %v4595 = vadd.f32 %v4349, %v4551
      %v4596 = vadd.f32 %v4350, %v4556
      %v4597 = vadd.f32 %v4351, %v4559
      %v4598 = vadd.f32 %v4352, %v4564
      %v4599 = vadd.f32 %v4353, %v4567
      %v4600 = vadd.f32 %v4354, %v4572
      %v4601 = vadd.f32 %v4355, %v4575
      %s4602 = scalar_lea.vmem %s3, 256
      %v4603 = vld [vmem:[%s4602] sm:$0xf]
      %v4604 = vld [vmem:[%s4602 + $0x4] sm:$0xf]
      %v4605 = vld [vmem:[%s4602 + $0x8] sm:$0xf]
      %v4606 = vld [vmem:[%s4602 + $0xc] sm:$0xf]
      %v4607 = vld [vmem:[%s4602 + $0x10] sm:$0xf]
      %v4608 = vld [vmem:[%s4602 + $0x14] sm:$0xf]
      %v4609 = vld [vmem:[%s4602 + $0x18] sm:$0xf]
      %v4610 = vld [vmem:[%s4602 + $0x1c] sm:$0xf]
      %v4611 = vld [vmem:[%s4602 + $0x20] sm:$0xf]
      %v4612 = vld [vmem:[%s4602 + $0x24] sm:$0xf]
      %v4613 = vld [vmem:[%s4602 + $0x28] sm:$0xf]
      %v4614 = vld [vmem:[%s4602 + $0x2c] sm:$0xf]
      %v4615 = vld [vmem:[%s4602 + $0x30] sm:$0xf]
      %v4616 = vld [vmem:[%s4602 + $0x34] sm:$0xf]
      %v4617 = vld [vmem:[%s4602 + $0x38] sm:$0xf]
      %v4618 = vld [vmem:[%s4602 + $0x3c] sm:$0xf]
      %v4620 = vunpack.c.l.b16 %v3523
      %v4621 = vpack.c.b16 %v4620, %v4620
      %v4623 = vshrl.u32 %v4377, 16
      %v4625 = vshll.u32 %v4377, 16
      %v4627 = vrot.slane %v4625, 1
      %v4628 = vor.u32 %v4623, %v4627
      %v4630 = vshll.u32 %v4378, 16
      %v4632 = vrot.slane %v4630, 1
      %v4633 = vsel %vm448, %v4628, %v4632
      %v4634 = vshrl.u32 %v4378, 16
      %v4636 = vor.u32 %v4634, %v4632
      %v4638 = vshll.u32 %v4379, 16
      %v4640 = vrot.slane %v4638, 1
      %v4641 = vsel %vm448, %v4636, %v4640
      %v4642 = vshrl.u32 %v4379, 16
      %v4644 = vor.u32 %v4642, %v4640
      %v4646 = vshll.u32 %v4380, 16
      %v4648 = vrot.slane %v4646, 1
      %v4649 = vsel %vm448, %v4644, %v4648
      %v4650 = vshrl.u32 %v4380, 16
      %v4652 = vor.u32 %v4650, %v4648
      %v4654 = vshll.u32 %v4381, 16
      %v4656 = vrot.slane %v4654, 1
      %v4657 = vsel %vm448, %v4652, %v4656
      %v4658 = vshrl.u32 %v4381, 16
      %v4660 = vor.u32 %v4658, %v4656
      %v4662 = vshll.u32 %v4382, 16
      %v4664 = vrot.slane %v4662, 1
      %v4665 = vsel %vm448, %v4660, %v4664
      %v4666 = vshrl.u32 %v4382, 16
      %v4668 = vor.u32 %v4666, %v4664
      %v4670 = vshll.u32 %v4383, 16
      %v4672 = vrot.slane %v4670, 1
      %v4673 = vsel %vm448, %v4668, %v4672
      %v4674 = vshrl.u32 %v4383, 16
      %v4676 = vor.u32 %v4674, %v4672
      %v4678 = vshll.u32 %v4384, 16
      %v4680 = vrot.slane %v4678, 1
      %v4681 = vsel %vm448, %v4676, %v4680
      %v4682 = vshrl.u32 %v4384, 16
      %v4684 = vor.u32 %v4682, %v4680
      %v4686 = vshll.u32 %v4385, 16
      %v4688 = vrot.slane %v4686, 1
      %v4689 = vsel %vm448, %v4684, %v4688
      %v4690 = vshrl.u32 %v4385, 16
      %v4692 = vor.u32 %v4690, %v4688
      %v4694 = vshll.u32 %v4386, 16
      %v4696 = vrot.slane %v4694, 1
      %v4697 = vsel %vm448, %v4692, %v4696
      %v4698 = vshrl.u32 %v4386, 16
      %v4700 = vor.u32 %v4698, %v4696
      %v4702 = vshll.u32 %v4387, 16
      %v4704 = vrot.slane %v4702, 1
      %v4705 = vsel %vm448, %v4700, %v4704
      %v4706 = vshrl.u32 %v4387, 16
      %v4708 = vor.u32 %v4706, %v4704
      %v4710 = vshll.u32 %v4388, 16
      %v4712 = vrot.slane %v4710, 1
      %v4713 = vsel %vm448, %v4708, %v4712
      %v4714 = vshrl.u32 %v4388, 16
      %v4716 = vor.u32 %v4714, %v4712
      %v4718 = vshll.u32 %v4621, 16
      %v4720 = vrot.slane %v4718, 1
      %v4721 = vsel %vm448, %v4716, %v4720
      %v4750 = vunpack.c.l.b16 %v4603
      %v4751 = vunpack.c.l.b16 %v4604
      %v4752 = vunpack.c.l.b16 %v4605
      %v4753 = vunpack.c.l.b16 %v4606
      %v4754 = vunpack.c.l.b16 %v4607
      %v4755 = vunpack.c.l.b16 %v4608
      %v4756 = vunpack.c.l.b16 %v4609
      %v4757 = vunpack.c.l.b16 %v4610
      %v4758 = vunpack.c.l.b16 %v4611
      %v4759 = vunpack.c.l.b16 %v4612
      %v4760 = vunpack.c.l.b16 %v4613
      %v4761 = vunpack.c.l.b16 %v4614
      %v4762 = vunpack.c.l.b16 %v4615
      %v4763 = vunpack.c.l.b16 %v4616
      %v4764 = vunpack.c.l.b16 %v4617
      %v4765 = vunpack.c.l.b16 %v4618
      %v4766 = vpack.c.b16 %v4751, %v4750
      %v4767 = vpack.c.b16 %v4753, %v4752
      %v4768 = vpack.c.b16 %v4755, %v4754
      %v4769 = vpack.c.b16 %v4757, %v4756
      %v4770 = vpack.c.b16 %v4759, %v4758
      %v4771 = vpack.c.b16 %v4761, %v4760
      %v4772 = vpack.c.b16 %v4763, %v4762
      %v4773 = vpack.c.b16 %v4765, %v4764
      %4782 = vmatprep.subr.bf16.mxu0 0
      %4783 = vmatpush1.bf16.msra.mxu0 %v4773
      %4784 = vmatprep.subr.bf16.mxu0 0
      %4785 = vmatpush1.bf16.msra.mxu0 %v4772
      %4786 = vmatprep.subr.bf16.mxu0 0
      %4787 = vmatpush1.bf16.msra.mxu0 %v4771
      %4788 = vmatprep.subr.bf16.mxu0 0
      %4789 = vmatpush1.bf16.msra.mxu0 %v4770
      %4790 = vmatprep.subr.bf16.mxu0 0
      %4791 = vmatpush1.bf16.msra.mxu0 %v4769
      %4792 = vmatprep.subr.bf16.mxu0 0
      %4793 = vmatpush1.bf16.msra.mxu0 %v4768
      %4794 = vmatprep.subr.bf16.mxu0 0
      %4795 = vmatpush1.bf16.msra.mxu0 %v4767
      %4796 = vmatprep.subr.bf16.mxu0 0
      %4797 = vmatpush1.bf16.msra.mxu0 %v4766
      %4798 = vmatprep.subr.bf16.mxu0 0
      %4799 = vmatpush2.bf16.msra.mxu0 0
      %4800 = vmatprep.subr.bf16.mxu0 0
      %4801 = vmatpush2.bf16.msra.mxu0 0
      %4802 = vmatprep.subr.bf16.mxu0 0
      %4803 = vmatpush2.bf16.msra.mxu0 0
      %4804 = vmatprep.subr.bf16.mxu0 0
      %4805 = vmatpush2.bf16.msra.mxu0 0
      %4806 = vmatprep.subr.bf16.mxu0 0
      %4807 = vmatpush2.bf16.msra.mxu0 0
      %4808 = vmatprep.subr.bf16.mxu0 0
      %4809 = vmatpush2.bf16.msra.mxu0 0
      %4810 = vmatprep.subr.bf16.mxu0 0
      %4811 = vmatpush2.bf16.msra.mxu0 0
      %4812 = vmatprep.subr.bf16.mxu0 0
      %4813 = vmatpush2.bf16.msra.mxu0 0
      %4814 = vmatprep.mubr.bf16.mxu0 0
      %4815 = vmatmul.mubr.bf16.gmra.mxu0 %v4633
      %v4816 = vpop.f32.mrf.mxu0
      %v4817 = vadd.f32 0.0, %v4816
      %v4818 = vpop.f32.mrf.mxu0
      %v4819 = vpop.f32.mrf.mxu0
      %v4820 = vadd.f32 0.0, %v4819
      %v4821 = vpop.f32.mrf.mxu0
      %4822 = vmatprep.mubr.bf16.mxu0 0
      %4823 = vmatmul.mubr.bf16.gmra.mxu0 %v4641
      %v4824 = vpop.f32.mrf.mxu0
      %v4825 = vadd.f32 0.0, %v4824
      %v4826 = vpop.f32.mrf.mxu0
      %v4827 = vpop.f32.mrf.mxu0
      %v4828 = vadd.f32 0.0, %v4827
      %v4829 = vpop.f32.mrf.mxu0
      %4830 = vmatprep.mubr.bf16.mxu0 0
      %4831 = vmatmul.mubr.bf16.gmra.mxu0 %v4649
      %v4832 = vpop.f32.mrf.mxu0
      %v4833 = vadd.f32 0.0, %v4832
      %v4834 = vpop.f32.mrf.mxu0
      %v4835 = vpop.f32.mrf.mxu0
      %v4836 = vadd.f32 0.0, %v4835
      %v4837 = vpop.f32.mrf.mxu0
      %4838 = vmatprep.mubr.bf16.mxu0 0
      %4839 = vmatmul.mubr.bf16.gmra.mxu0 %v4657
      %v4840 = vpop.f32.mrf.mxu0
      %v4841 = vadd.f32 0.0, %v4840
      %v4842 = vpop.f32.mrf.mxu0
      %v4843 = vpop.f32.mrf.mxu0
      %v4844 = vadd.f32 0.0, %v4843
      %v4845 = vpop.f32.mrf.mxu0
      %4846 = vmatprep.mubr.bf16.mxu0 0
      %4847 = vmatmul.mubr.bf16.gmra.mxu0 %v4665
      %v4848 = vpop.f32.mrf.mxu0
      %v4849 = vadd.f32 0.0, %v4848
      %v4850 = vpop.f32.mrf.mxu0
      %v4851 = vpop.f32.mrf.mxu0
      %v4852 = vadd.f32 0.0, %v4851
      %v4853 = vpop.f32.mrf.mxu0
      %4854 = vmatprep.mubr.bf16.mxu0 0
      %4855 = vmatmul.mubr.bf16.gmra.mxu0 %v4673
      %v4856 = vpop.f32.mrf.mxu0
      %v4857 = vadd.f32 0.0, %v4856
      %v4858 = vpop.f32.mrf.mxu0
      %v4859 = vpop.f32.mrf.mxu0
      %v4860 = vadd.f32 0.0, %v4859
      %v4861 = vpop.f32.mrf.mxu0
      %4862 = vmatprep.mubr.bf16.mxu0 0
      %4863 = vmatmul.mubr.bf16.gmra.mxu0 %v4681
      %v4864 = vpop.f32.mrf.mxu0
      %v4865 = vadd.f32 0.0, %v4864
      %v4866 = vpop.f32.mrf.mxu0
      %v4867 = vpop.f32.mrf.mxu0
      %v4868 = vadd.f32 0.0, %v4867
      %v4869 = vpop.f32.mrf.mxu0
      %4870 = vmatprep.mubr.bf16.mxu0 0
      %4871 = vmatmul.mubr.bf16.gmra.mxu0 %v4689
      %v4872 = vpop.f32.mrf.mxu0
      %v4873 = vadd.f32 0.0, %v4872
      %v4874 = vpop.f32.mrf.mxu0
      %v4875 = vpop.f32.mrf.mxu0
      %v4876 = vadd.f32 0.0, %v4875
      %v4877 = vpop.f32.mrf.mxu0
      %4878 = vmatprep.mubr.bf16.mxu0 0
      %4879 = vmatmul.mubr.bf16.gmra.mxu0 %v4697
      %v4880 = vpop.f32.mrf.mxu0
      %v4881 = vadd.f32 0.0, %v4880
      %v4882 = vpop.f32.mrf.mxu0
      %v4883 = vpop.f32.mrf.mxu0
      %v4884 = vadd.f32 0.0, %v4883
      %v4885 = vpop.f32.mrf.mxu0
      %4886 = vmatprep.mubr.bf16.mxu0 0
      %4887 = vmatmul.mubr.bf16.gmra.mxu0 %v4705
      %v4888 = vpop.f32.mrf.mxu0
      %v4889 = vadd.f32 0.0, %v4888
      %v4890 = vpop.f32.mrf.mxu0
      %v4891 = vpop.f32.mrf.mxu0
      %v4892 = vadd.f32 0.0, %v4891
      %v4893 = vpop.f32.mrf.mxu0
      %4894 = vmatprep.mubr.bf16.mxu0 0
      %4895 = vmatmul.mubr.bf16.gmra.mxu0 %v4713
      %v4896 = vpop.f32.mrf.mxu0
      %v4897 = vadd.f32 0.0, %v4896
      %v4898 = vpop.f32.mrf.mxu0
      %v4899 = vpop.f32.mrf.mxu0
      %v4900 = vadd.f32 0.0, %v4899
      %v4901 = vpop.f32.mrf.mxu0
      %4902 = vmatprep.mubr.bf16.mxu0 0
      %4903 = vmatmul.mubr.bf16.gmra.mxu0 %v4721
      %v4904 = vpop.f32.mrf.mxu0
      %v4905 = vadd.f32 0.0, %v4904
      %v4906 = vpop.f32.mrf.mxu0
      %v4907 = vpop.f32.mrf.mxu0
      %v4908 = vadd.f32 0.0, %v4907
      %v4909 = vpop.f32.mrf.mxu0
      %4910 = vdwg.mxu0
      %v4911 = vadd.f32 %v4578, %v4817
      %v4912 = vadd.f32 %v4579, %v4820
      %v4913 = vadd.f32 %v4580, %v4825
      %v4914 = vadd.f32 %v4581, %v4828
      %v4915 = vadd.f32 %v4582, %v4833
      %v4916 = vadd.f32 %v4583, %v4836
      %v4917 = vadd.f32 %v4584, %v4841
      %v4918 = vadd.f32 %v4585, %v4844
      %v4919 = vadd.f32 %v4586, %v4849
      %v4920 = vadd.f32 %v4587, %v4852
      %v4921 = vadd.f32 %v4588, %v4857
      %v4922 = vadd.f32 %v4589, %v4860
      %v4923 = vadd.f32 %v4590, %v4865
      %v4924 = vadd.f32 %v4591, %v4868
      %v4925 = vadd.f32 %v4592, %v4873
      %v4926 = vadd.f32 %v4593, %v4876
      %v4927 = vadd.f32 %v4594, %v4881
      %v4928 = vadd.f32 %v4595, %v4884
      %v4929 = vadd.f32 %v4596, %v4889
      %v4930 = vadd.f32 %v4597, %v4892
      %v4931 = vadd.f32 %v4598, %v4897
      %v4932 = vadd.f32 %v4599, %v4900
      %v4933 = vadd.f32 %v4600, %v4905
      %v4934 = vadd.f32 %v4601, %v4908
      %s4935 = scalar_lea.vmem %s3, 320
      %v4936 = vld [vmem:[%s4935] sm:$0xf]
      %v4937 = vld [vmem:[%s4935 + $0x4] sm:$0xf]
      %v4938 = vld [vmem:[%s4935 + $0x8] sm:$0xf]
      %v4939 = vld [vmem:[%s4935 + $0xc] sm:$0xf]
      %v4940 = vld [vmem:[%s4935 + $0x10] sm:$0xf]
      %v4941 = vld [vmem:[%s4935 + $0x14] sm:$0xf]
      %v4942 = vld [vmem:[%s4935 + $0x18] sm:$0xf]
      %v4943 = vld [vmem:[%s4935 + $0x1c] sm:$0xf]
      %v4944 = vld [vmem:[%s4935 + $0x20] sm:$0xf]
      %v4945 = vld [vmem:[%s4935 + $0x24] sm:$0xf]
      %v4946 = vld [vmem:[%s4935 + $0x28] sm:$0xf]
      %v4947 = vld [vmem:[%s4935 + $0x2c] sm:$0xf]
      %v4948 = vld [vmem:[%s4935 + $0x30] sm:$0xf]
      %v4949 = vld [vmem:[%s4935 + $0x34] sm:$0xf]
      %v4950 = vld [vmem:[%s4935 + $0x38] sm:$0xf]
      %v4951 = vld [vmem:[%s4935 + $0x3c] sm:$0xf]
      %v4952 = vrot.slane %v4377, 1
      %v4953 = vrot.slane %v4378, 1
      %v4954 = vsel %vm1022, %v4952, %v4953
      %v4955 = vrot.slane %v4379, 1
      %v4956 = vsel %vm1022, %v4953, %v4955
      %v4957 = vrot.slane %v4380, 1
      %v4958 = vsel %vm1022, %v4955, %v4957
      %v4959 = vrot.slane %v4381, 1
      %v4960 = vsel %vm1022, %v4957, %v4959
      %v4961 = vrot.slane %v4382, 1
      %v4962 = vsel %vm1022, %v4959, %v4961
      %v4963 = vrot.slane %v4383, 1
      %v4964 = vsel %vm1022, %v4961, %v4963
      %v4965 = vrot.slane %v4384, 1
      %v4966 = vsel %vm1022, %v4963, %v4965
      %v4967 = vrot.slane %v4385, 1
      %v4968 = vsel %vm1022, %v4965, %v4967
      %v4969 = vrot.slane %v4386, 1
      %v4970 = vsel %vm1022, %v4967, %v4969
      %v4971 = vrot.slane %v4387, 1
      %v4972 = vsel %vm1022, %v4969, %v4971
      %v4973 = vrot.slane %v4388, 1
      %v4974 = vsel %vm1022, %v4971, %v4973
      %v4975 = vrot.slane %v4621, 1
      %v4976 = vsel %vm1022, %v4973, %v4975
      %v5005 = vunpack.c.l.b16 %v4936
      %v5006 = vunpack.c.l.b16 %v4937
      %v5007 = vunpack.c.l.b16 %v4938
      %v5008 = vunpack.c.l.b16 %v4939
      %v5009 = vunpack.c.l.b16 %v4940
      %v5010 = vunpack.c.l.b16 %v4941
      %v5011 = vunpack.c.l.b16 %v4942
      %v5012 = vunpack.c.l.b16 %v4943
      %v5013 = vunpack.c.l.b16 %v4944
      %v5014 = vunpack.c.l.b16 %v4945
      %v5015 = vunpack.c.l.b16 %v4946
      %v5016 = vunpack.c.l.b16 %v4947
      %v5017 = vunpack.c.l.b16 %v4948
      %v5018 = vunpack.c.l.b16 %v4949
      %v5019 = vunpack.c.l.b16 %v4950
      %v5020 = vunpack.c.l.b16 %v4951
      %v5021 = vpack.c.b16 %v5006, %v5005
      %v5022 = vpack.c.b16 %v5008, %v5007
      %v5023 = vpack.c.b16 %v5010, %v5009
      %v5024 = vpack.c.b16 %v5012, %v5011
      %v5025 = vpack.c.b16 %v5014, %v5013
      %v5026 = vpack.c.b16 %v5016, %v5015
      %v5027 = vpack.c.b16 %v5018, %v5017
      %v5028 = vpack.c.b16 %v5020, %v5019
      %5037 = vmatprep.subr.bf16.mxu0 0
      %5038 = vmatpush1.bf16.msra.mxu0 %v5028
      %5039 = vmatprep.subr.bf16.mxu0 0
      %5040 = vmatpush1.bf16.msra.mxu0 %v5027
      %5041 = vmatprep.subr.bf16.mxu0 0
      %5042 = vmatpush1.bf16.msra.mxu0 %v5026
      %5043 = vmatprep.subr.bf16.mxu0 0
      %5044 = vmatpush1.bf16.msra.mxu0 %v5025
      %5045 = vmatprep.subr.bf16.mxu0 0
      %5046 = vmatpush1.bf16.msra.mxu0 %v5024
      %5047 = vmatprep.subr.bf16.mxu0 0
      %5048 = vmatpush1.bf16.msra.mxu0 %v5023
      %5049 = vmatprep.subr.bf16.mxu0 0
      %5050 = vmatpush1.bf16.msra.mxu0 %v5022
      %5051 = vmatprep.subr.bf16.mxu0 0
      %5052 = vmatpush1.bf16.msra.mxu0 %v5021
      %5053 = vmatprep.subr.bf16.mxu0 0
      %5054 = vmatpush2.bf16.msra.mxu0 0
      %5055 = vmatprep.subr.bf16.mxu0 0
      %5056 = vmatpush2.bf16.msra.mxu0 0
      %5057 = vmatprep.subr.bf16.mxu0 0
      %5058 = vmatpush2.bf16.msra.mxu0 0
      %5059 = vmatprep.subr.bf16.mxu0 0
      %5060 = vmatpush2.bf16.msra.mxu0 0
      %5061 = vmatprep.subr.bf16.mxu0 0
      %5062 = vmatpush2.bf16.msra.mxu0 0
      %5063 = vmatprep.subr.bf16.mxu0 0
      %5064 = vmatpush2.bf16.msra.mxu0 0
      %5065 = vmatprep.subr.bf16.mxu0 0
      %5066 = vmatpush2.bf16.msra.mxu0 0
      %5067 = vmatprep.subr.bf16.mxu0 0
      %5068 = vmatpush2.bf16.msra.mxu0 0
      %5069 = vmatprep.mubr.bf16.mxu0 0
      %5070 = vmatmul.mubr.bf16.gmra.mxu0 %v4954
      %v5071 = vpop.f32.mrf.mxu0
      %v5072 = vadd.f32 0.0, %v5071
      %v5073 = vpop.f32.mrf.mxu0
      %v5074 = vpop.f32.mrf.mxu0
      %v5075 = vadd.f32 0.0, %v5074
      %v5076 = vpop.f32.mrf.mxu0
      %5077 = vmatprep.mubr.bf16.mxu0 0
      %5078 = vmatmul.mubr.bf16.gmra.mxu0 %v4956
      %v5079 = vpop.f32.mrf.mxu0
      %v5080 = vadd.f32 0.0, %v5079
      %v5081 = vpop.f32.mrf.mxu0
      %v5082 = vpop.f32.mrf.mxu0
      %v5083 = vadd.f32 0.0, %v5082
      %v5084 = vpop.f32.mrf.mxu0
      %5085 = vmatprep.mubr.bf16.mxu0 0
      %5086 = vmatmul.mubr.bf16.gmra.mxu0 %v4958
      %v5087 = vpop.f32.mrf.mxu0
      %v5088 = vadd.f32 0.0, %v5087
      %v5089 = vpop.f32.mrf.mxu0
      %v5090 = vpop.f32.mrf.mxu0
      %v5091 = vadd.f32 0.0, %v5090
      %v5092 = vpop.f32.mrf.mxu0
      %5093 = vmatprep.mubr.bf16.mxu0 0
      %5094 = vmatmul.mubr.bf16.gmra.mxu0 %v4960
      %v5095 = vpop.f32.mrf.mxu0
      %v5096 = vadd.f32 0.0, %v5095
      %v5097 = vpop.f32.mrf.mxu0
      %v5098 = vpop.f32.mrf.mxu0
      %v5099 = vadd.f32 0.0, %v5098
      %v5100 = vpop.f32.mrf.mxu0
      %5101 = vmatprep.mubr.bf16.mxu0 0
      %5102 = vmatmul.mubr.bf16.gmra.mxu0 %v4962
      %v5103 = vpop.f32.mrf.mxu0
      %v5104 = vadd.f32 0.0, %v5103
      %v5105 = vpop.f32.mrf.mxu0
      %v5106 = vpop.f32.mrf.mxu0
      %v5107 = vadd.f32 0.0, %v5106
      %v5108 = vpop.f32.mrf.mxu0
      %5109 = vmatprep.mubr.bf16.mxu0 0
      %5110 = vmatmul.mubr.bf16.gmra.mxu0 %v4964
      %v5111 = vpop.f32.mrf.mxu0
      %v5112 = vadd.f32 0.0, %v5111
      %v5113 = vpop.f32.mrf.mxu0
      %v5114 = vpop.f32.mrf.mxu0
      %v5115 = vadd.f32 0.0, %v5114
      %v5116 = vpop.f32.mrf.mxu0
      %5117 = vmatprep.mubr.bf16.mxu0 0
      %5118 = vmatmul.mubr.bf16.gmra.mxu0 %v4966
      %v5119 = vpop.f32.mrf.mxu0
      %v5120 = vadd.f32 0.0, %v5119
      %v5121 = vpop.f32.mrf.mxu0
      %v5122 = vpop.f32.mrf.mxu0
      %v5123 = vadd.f32 0.0, %v5122
      %v5124 = vpop.f32.mrf.mxu0
      %5125 = vmatprep.mubr.bf16.mxu0 0
      %5126 = vmatmul.mubr.bf16.gmra.mxu0 %v4968
      %v5127 = vpop.f32.mrf.mxu0
      %v5128 = vadd.f32 0.0, %v5127
      %v5129 = vpop.f32.mrf.mxu0
      %v5130 = vpop.f32.mrf.mxu0
      %v5131 = vadd.f32 0.0, %v5130
      %v5132 = vpop.f32.mrf.mxu0
      %5133 = vmatprep.mubr.bf16.mxu0 0
      %5134 = vmatmul.mubr.bf16.gmra.mxu0 %v4970
      %v5135 = vpop.f32.mrf.mxu0
      %v5136 = vadd.f32 0.0, %v5135
      %v5137 = vpop.f32.mrf.mxu0
      %v5138 = vpop.f32.mrf.mxu0
      %v5139 = vadd.f32 0.0, %v5138
      %v5140 = vpop.f32.mrf.mxu0
      %5141 = vmatprep.mubr.bf16.mxu0 0
      %5142 = vmatmul.mubr.bf16.gmra.mxu0 %v4972
      %v5143 = vpop.f32.mrf.mxu0
      %v5144 = vadd.f32 0.0, %v5143
      %v5145 = vpop.f32.mrf.mxu0
      %v5146 = vpop.f32.mrf.mxu0
      %v5147 = vadd.f32 0.0, %v5146
      %v5148 = vpop.f32.mrf.mxu0
      %5149 = vmatprep.mubr.bf16.mxu0 0
      %5150 = vmatmul.mubr.bf16.gmra.mxu0 %v4974
      %v5151 = vpop.f32.mrf.mxu0
      %v5152 = vadd.f32 0.0, %v5151
      %v5153 = vpop.f32.mrf.mxu0
      %v5154 = vpop.f32.mrf.mxu0
      %v5155 = vadd.f32 0.0, %v5154
      %v5156 = vpop.f32.mrf.mxu0
      %5157 = vmatprep.mubr.bf16.mxu0 0
      %5158 = vmatmul.mubr.bf16.gmra.mxu0 %v4976
      %v5159 = vpop.f32.mrf.mxu0
      %v5160 = vadd.f32 0.0, %v5159
      %v5161 = vpop.f32.mrf.mxu0
      %v5162 = vpop.f32.mrf.mxu0
      %v5163 = vadd.f32 0.0, %v5162
      %v5164 = vpop.f32.mrf.mxu0
      %5165 = vdwg.mxu0
      %v5166 = vadd.f32 %v4911, %v5072
      %v5167 = vadd.f32 %v4912, %v5075
      %v5168 = vadd.f32 %v4913, %v5080
      %v5169 = vadd.f32 %v4914, %v5083
      %v5170 = vadd.f32 %v4915, %v5088
      %v5171 = vadd.f32 %v4916, %v5091
      %v5172 = vadd.f32 %v4917, %v5096
      %v5173 = vadd.f32 %v4918, %v5099
      %v5174 = vadd.f32 %v4919, %v5104
      %v5175 = vadd.f32 %v4920, %v5107
      %v5176 = vadd.f32 %v4921, %v5112
      %v5177 = vadd.f32 %v4922, %v5115
      %v5178 = vadd.f32 %v4923, %v5120
      %v5179 = vadd.f32 %v4924, %v5123
      %v5180 = vadd.f32 %v4925, %v5128
      %v5181 = vadd.f32 %v4926, %v5131
      %v5182 = vadd.f32 %v4927, %v5136
      %v5183 = vadd.f32 %v4928, %v5139
      %v5184 = vadd.f32 %v4929, %v5144
      %v5185 = vadd.f32 %v4930, %v5147
      %v5186 = vadd.f32 %v4931, %v5152
      %v5187 = vadd.f32 %v4932, %v5155
      %v5188 = vadd.f32 %v4933, %v5160
      %v5189 = vadd.f32 %v4934, %v5163
      %s5190 = scalar_lea.vmem %s3, 384
      %v5191 = vld [vmem:[%s5190] sm:$0xf]
      %v5192 = vld [vmem:[%s5190 + $0x4] sm:$0xf]
      %v5193 = vld [vmem:[%s5190 + $0x8] sm:$0xf]
      %v5194 = vld [vmem:[%s5190 + $0xc] sm:$0xf]
      %v5195 = vld [vmem:[%s5190 + $0x10] sm:$0xf]
      %v5196 = vld [vmem:[%s5190 + $0x14] sm:$0xf]
      %v5197 = vld [vmem:[%s5190 + $0x18] sm:$0xf]
      %v5198 = vld [vmem:[%s5190 + $0x1c] sm:$0xf]
      %v5199 = vld [vmem:[%s5190 + $0x20] sm:$0xf]
      %v5200 = vld [vmem:[%s5190 + $0x24] sm:$0xf]
      %v5201 = vld [vmem:[%s5190 + $0x28] sm:$0xf]
      %v5202 = vld [vmem:[%s5190 + $0x2c] sm:$0xf]
      %v5203 = vld [vmem:[%s5190 + $0x30] sm:$0xf]
      %v5204 = vld [vmem:[%s5190 + $0x34] sm:$0xf]
      %v5205 = vld [vmem:[%s5190 + $0x38] sm:$0xf]
      %v5206 = vld [vmem:[%s5190 + $0x3c] sm:$0xf]
      %v5209 = vunpack.c.l.b16 %v3524
      %v5210 = vunpack.c.l.b16 %v3525
      %v5211 = vpack.c.b16 %v4375, %v3609
      %v5212 = vpack.c.b16 %v4620, %v4376
      %v5213 = vpack.c.b16 %v5210, %v5209
      %v5233 = vunpack.c.l.b16 %v5191
      %v5234 = vunpack.c.l.b16 %v5192
      %v5235 = vunpack.c.l.b16 %v5193
      %v5236 = vunpack.c.l.b16 %v5194
      %v5237 = vunpack.c.l.b16 %v5195
      %v5238 = vunpack.c.l.b16 %v5196
      %v5239 = vunpack.c.l.b16 %v5197
      %v5240 = vunpack.c.l.b16 %v5198
      %v5241 = vunpack.c.l.b16 %v5199
      %v5242 = vunpack.c.l.b16 %v5200
      %v5243 = vunpack.c.l.b16 %v5201
      %v5244 = vunpack.c.l.b16 %v5202
      %v5245 = vunpack.c.l.b16 %v5203
      %v5246 = vunpack.c.l.b16 %v5204
      %v5247 = vunpack.c.l.b16 %v5205
      %v5248 = vunpack.c.l.b16 %v5206
      %v5249 = vpack.c.b16 %v5234, %v5233
      %v5250 = vpack.c.b16 %v5236, %v5235
      %v5251 = vpack.c.b16 %v5238, %v5237
      %v5252 = vpack.c.b16 %v5240, %v5239
      %v5253 = vpack.c.b16 %v5242, %v5241
      %v5254 = vpack.c.b16 %v5244, %v5243
      %v5255 = vpack.c.b16 %v5246, %v5245
      %v5256 = vpack.c.b16 %v5248, %v5247
      %5265 = vmatprep.subr.bf16.mxu0 0
      %5266 = vmatpush1.bf16.msra.mxu0 %v5256
      %5267 = vmatprep.subr.bf16.mxu0 0
      %5268 = vmatpush1.bf16.msra.mxu0 %v5255
      %5269 = vmatprep.subr.bf16.mxu0 0
      %5270 = vmatpush1.bf16.msra.mxu0 %v5254
      %5271 = vmatprep.subr.bf16.mxu0 0
      %5272 = vmatpush1.bf16.msra.mxu0 %v5253
      %5273 = vmatprep.subr.bf16.mxu0 0
      %5274 = vmatpush1.bf16.msra.mxu0 %v5252
      %5275 = vmatprep.subr.bf16.mxu0 0
      %5276 = vmatpush1.bf16.msra.mxu0 %v5251
      %5277 = vmatprep.subr.bf16.mxu0 0
      %5278 = vmatpush1.bf16.msra.mxu0 %v5250
      %5279 = vmatprep.subr.bf16.mxu0 0
      %5280 = vmatpush1.bf16.msra.mxu0 %v5249
      %5281 = vmatprep.subr.bf16.mxu0 0
      %5282 = vmatpush2.bf16.msra.mxu0 0
      %5283 = vmatprep.subr.bf16.mxu0 0
      %5284 = vmatpush2.bf16.msra.mxu0 0
      %5285 = vmatprep.subr.bf16.mxu0 0
      %5286 = vmatpush2.bf16.msra.mxu0 0
      %5287 = vmatprep.subr.bf16.mxu0 0
      %5288 = vmatpush2.bf16.msra.mxu0 0
      %5289 = vmatprep.subr.bf16.mxu0 0
      %5290 = vmatpush2.bf16.msra.mxu0 0
      %5291 = vmatprep.subr.bf16.mxu0 0
      %5292 = vmatpush2.bf16.msra.mxu0 0
      %5293 = vmatprep.subr.bf16.mxu0 0
      %5294 = vmatpush2.bf16.msra.mxu0 0
      %5295 = vmatprep.subr.bf16.mxu0 0
      %5296 = vmatpush2.bf16.msra.mxu0 0
      %5297 = vmatprep.mubr.bf16.mxu0 0
      %5298 = vmatmul.mubr.bf16.gmra.mxu0 %v3613
      %v5299 = vpop.f32.mrf.mxu0
      %v5300 = vadd.f32 0.0, %v5299
      %v5301 = vpop.f32.mrf.mxu0
      %v5302 = vpop.f32.mrf.mxu0
      %v5303 = vadd.f32 0.0, %v5302
      %v5304 = vpop.f32.mrf.mxu0
      %5305 = vmatprep.mubr.bf16.mxu0 0
      %5306 = vmatmul.mubr.bf16.gmra.mxu0 %v3614
      %v5307 = vpop.f32.mrf.mxu0
      %v5308 = vadd.f32 0.0, %v5307
      %v5309 = vpop.f32.mrf.mxu0
      %v5310 = vpop.f32.mrf.mxu0
      %v5311 = vadd.f32 0.0, %v5310
      %v5312 = vpop.f32.mrf.mxu0
      %5313 = vmatprep.mubr.bf16.mxu0 0
      %5314 = vmatmul.mubr.bf16.gmra.mxu0 %v3615
      %v5315 = vpop.f32.mrf.mxu0
      %v5316 = vadd.f32 0.0, %v5315
      %v5317 = vpop.f32.mrf.mxu0
      %v5318 = vpop.f32.mrf.mxu0
      %v5319 = vadd.f32 0.0, %v5318
      %v5320 = vpop.f32.mrf.mxu0
      %5321 = vmatprep.mubr.bf16.mxu0 0
      %5322 = vmatmul.mubr.bf16.gmra.mxu0 %v3616
      %v5323 = vpop.f32.mrf.mxu0
      %v5324 = vadd.f32 0.0, %v5323
      %v5325 = vpop.f32.mrf.mxu0
      %v5326 = vpop.f32.mrf.mxu0
      %v5327 = vadd.f32 0.0, %v5326
      %v5328 = vpop.f32.mrf.mxu0
      %5329 = vmatprep.mubr.bf16.mxu0 0
      %5330 = vmatmul.mubr.bf16.gmra.mxu0 %v3617
      %v5331 = vpop.f32.mrf.mxu0
      %v5332 = vadd.f32 0.0, %v5331
      %v5333 = vpop.f32.mrf.mxu0
      %v5334 = vpop.f32.mrf.mxu0
      %v5335 = vadd.f32 0.0, %v5334
      %v5336 = vpop.f32.mrf.mxu0
      %5337 = vmatprep.mubr.bf16.mxu0 0
      %5338 = vmatmul.mubr.bf16.gmra.mxu0 %v3618
      %v5339 = vpop.f32.mrf.mxu0
      %v5340 = vadd.f32 0.0, %v5339
      %v5341 = vpop.f32.mrf.mxu0
      %v5342 = vpop.f32.mrf.mxu0
      %v5343 = vadd.f32 0.0, %v5342
      %v5344 = vpop.f32.mrf.mxu0
      %5345 = vmatprep.mubr.bf16.mxu0 0
      %5346 = vmatmul.mubr.bf16.gmra.mxu0 %v3619
      %v5347 = vpop.f32.mrf.mxu0
      %v5348 = vadd.f32 0.0, %v5347
      %v5349 = vpop.f32.mrf.mxu0
      %v5350 = vpop.f32.mrf.mxu0
      %v5351 = vadd.f32 0.0, %v5350
      %v5352 = vpop.f32.mrf.mxu0
      %5353 = vmatprep.mubr.bf16.mxu0 0
      %5354 = vmatmul.mubr.bf16.gmra.mxu0 %v3620
      %v5355 = vpop.f32.mrf.mxu0
      %v5356 = vadd.f32 0.0, %v5355
      %v5357 = vpop.f32.mrf.mxu0
      %v5358 = vpop.f32.mrf.mxu0
      %v5359 = vadd.f32 0.0, %v5358
      %v5360 = vpop.f32.mrf.mxu0
      %5361 = vmatprep.mubr.bf16.mxu0 0
      %5362 = vmatmul.mubr.bf16.gmra.mxu0 %v3621
      %v5363 = vpop.f32.mrf.mxu0
      %v5364 = vadd.f32 0.0, %v5363
      %v5365 = vpop.f32.mrf.mxu0
      %v5366 = vpop.f32.mrf.mxu0
      %v5367 = vadd.f32 0.0, %v5366
      %v5368 = vpop.f32.mrf.mxu0
      %5369 = vmatprep.mubr.bf16.mxu0 0
      %5370 = vmatmul.mubr.bf16.gmra.mxu0 %v5211
      %v5371 = vpop.f32.mrf.mxu0
      %v5372 = vadd.f32 0.0, %v5371
      %v5373 = vpop.f32.mrf.mxu0
      %v5374 = vpop.f32.mrf.mxu0
      %v5375 = vadd.f32 0.0, %v5374
      %v5376 = vpop.f32.mrf.mxu0
      %5377 = vmatprep.mubr.bf16.mxu0 0
      %5378 = vmatmul.mubr.bf16.gmra.mxu0 %v5212
      %v5379 = vpop.f32.mrf.mxu0
      %v5380 = vadd.f32 0.0, %v5379
      %v5381 = vpop.f32.mrf.mxu0
      %v5382 = vpop.f32.mrf.mxu0
      %v5383 = vadd.f32 0.0, %v5382
      %v5384 = vpop.f32.mrf.mxu0
      %5385 = vmatprep.mubr.bf16.mxu0 0
      %5386 = vmatmul.mubr.bf16.gmra.mxu0 %v5213
      %v5387 = vpop.f32.mrf.mxu0
      %v5388 = vadd.f32 0.0, %v5387
      %v5389 = vpop.f32.mrf.mxu0
      %v5390 = vpop.f32.mrf.mxu0
      %v5391 = vadd.f32 0.0, %v5390
      %v5392 = vpop.f32.mrf.mxu0
      %5393 = vdwg.mxu0
      %v5394 = vadd.f32 %v5166, %v5300
      %v5395 = vadd.f32 %v5167, %v5303
      %v5396 = vadd.f32 %v5168, %v5308
      %v5397 = vadd.f32 %v5169, %v5311
      %v5398 = vadd.f32 %v5170, %v5316
      %v5399 = vadd.f32 %v5171, %v5319
      %v5400 = vadd.f32 %v5172, %v5324
      %v5401 = vadd.f32 %v5173, %v5327
      %v5402 = vadd.f32 %v5174, %v5332
      %v5403 = vadd.f32 %v5175, %v5335
      %v5404 = vadd.f32 %v5176, %v5340
      %v5405 = vadd.f32 %v5177, %v5343
      %v5406 = vadd.f32 %v5178, %v5348
      %v5407 = vadd.f32 %v5179, %v5351
      %v5408 = vadd.f32 %v5180, %v5356
      %v5409 = vadd.f32 %v5181, %v5359
      %v5410 = vadd.f32 %v5182, %v5364
      %v5411 = vadd.f32 %v5183, %v5367
      %v5412 = vadd.f32 %v5184, %v5372
      %v5413 = vadd.f32 %v5185, %v5375
      %v5414 = vadd.f32 %v5186, %v5380
      %v5415 = vadd.f32 %v5187, %v5383
      %v5416 = vadd.f32 %v5188, %v5388
      %v5417 = vadd.f32 %v5189, %v5391
      %s5418 = scalar_lea.vmem %s3, 448
      %v5419 = vld [vmem:[%s5418] sm:$0xf]
      %v5420 = vld [vmem:[%s5418 + $0x4] sm:$0xf]
      %v5421 = vld [vmem:[%s5418 + $0x8] sm:$0xf]
      %v5422 = vld [vmem:[%s5418 + $0xc] sm:$0xf]
      %v5423 = vld [vmem:[%s5418 + $0x10] sm:$0xf]
      %v5424 = vld [vmem:[%s5418 + $0x14] sm:$0xf]
      %v5425 = vld [vmem:[%s5418 + $0x18] sm:$0xf]
      %v5426 = vld [vmem:[%s5418 + $0x1c] sm:$0xf]
      %v5427 = vld [vmem:[%s5418 + $0x20] sm:$0xf]
      %v5428 = vld [vmem:[%s5418 + $0x24] sm:$0xf]
      %v5429 = vld [vmem:[%s5418 + $0x28] sm:$0xf]
      %v5430 = vld [vmem:[%s5418 + $0x2c] sm:$0xf]
      %v5431 = vld [vmem:[%s5418 + $0x30] sm:$0xf]
      %v5432 = vld [vmem:[%s5418 + $0x34] sm:$0xf]
      %v5433 = vld [vmem:[%s5418 + $0x38] sm:$0xf]
      %v5434 = vld [vmem:[%s5418 + $0x3c] sm:$0xf]
      %v5436 = vunpack.c.l.b16 %v3526
      %v5437 = vpack.c.b16 %v5436, %v5436
      %v5439 = vshll.u32 %v5211, 16
      %v5441 = vrot.slane %v5439, 1
      %v5442 = vsel %vm448, %v3717, %v5441
      %v5443 = vshrl.u32 %v5211, 16
      %v5445 = vor.u32 %v5443, %v5441
      %v5447 = vshll.u32 %v5212, 16
      %v5449 = vrot.slane %v5447, 1
      %v5450 = vsel %vm448, %v5445, %v5449
      %v5451 = vshrl.u32 %v5212, 16
      %v5453 = vor.u32 %v5451, %v5449
      %v5455 = vshll.u32 %v5213, 16
      %v5457 = vrot.slane %v5455, 1
      %v5458 = vsel %vm448, %v5453, %v5457
      %v5459 = vshrl.u32 %v5213, 16
      %v5461 = vor.u32 %v5459, %v5457
      %v5463 = vshll.u32 %v5437, 16
      %v5465 = vrot.slane %v5463, 1
      %v5466 = vsel %vm448, %v5461, %v5465
      %v5487 = vunpack.c.l.b16 %v5419
      %v5488 = vunpack.c.l.b16 %v5420
      %v5489 = vunpack.c.l.b16 %v5421
      %v5490 = vunpack.c.l.b16 %v5422
      %v5491 = vunpack.c.l.b16 %v5423
      %v5492 = vunpack.c.l.b16 %v5424
      %v5493 = vunpack.c.l.b16 %v5425
      %v5494 = vunpack.c.l.b16 %v5426
      %v5495 = vunpack.c.l.b16 %v5427
      %v5496 = vunpack.c.l.b16 %v5428
      %v5497 = vunpack.c.l.b16 %v5429
      %v5498 = vunpack.c.l.b16 %v5430
      %v5499 = vunpack.c.l.b16 %v5431
      %v5500 = vunpack.c.l.b16 %v5432
      %v5501 = vunpack.c.l.b16 %v5433
      %v5502 = vunpack.c.l.b16 %v5434
      %v5503 = vpack.c.b16 %v5488, %v5487
      %v5504 = vpack.c.b16 %v5490, %v5489
      %v5505 = vpack.c.b16 %v5492, %v5491
      %v5506 = vpack.c.b16 %v5494, %v5493
      %v5507 = vpack.c.b16 %v5496, %v5495
      %v5508 = vpack.c.b16 %v5498, %v5497
      %v5509 = vpack.c.b16 %v5500, %v5499
      %v5510 = vpack.c.b16 %v5502, %v5501
      %5519 = vmatprep.subr.bf16.mxu0 0
      %5520 = vmatpush1.bf16.msra.mxu0 %v5510
      %5521 = vmatprep.subr.bf16.mxu0 0
      %5522 = vmatpush1.bf16.msra.mxu0 %v5509
      %5523 = vmatprep.subr.bf16.mxu0 0
      %5524 = vmatpush1.bf16.msra.mxu0 %v5508
      %5525 = vmatprep.subr.bf16.mxu0 0
      %5526 = vmatpush1.bf16.msra.mxu0 %v5507
      %5527 = vmatprep.subr.bf16.mxu0 0
      %5528 = vmatpush1.bf16.msra.mxu0 %v5506
      %5529 = vmatprep.subr.bf16.mxu0 0
      %5530 = vmatpush1.bf16.msra.mxu0 %v5505
      %5531 = vmatprep.subr.bf16.mxu0 0
      %5532 = vmatpush1.bf16.msra.mxu0 %v5504
      %5533 = vmatprep.subr.bf16.mxu0 0
      %5534 = vmatpush1.bf16.msra.mxu0 %v5503
      %5535 = vmatprep.subr.bf16.mxu0 0
      %5536 = vmatpush2.bf16.msra.mxu0 0
      %5537 = vmatprep.subr.bf16.mxu0 0
      %5538 = vmatpush2.bf16.msra.mxu0 0
      %5539 = vmatprep.subr.bf16.mxu0 0
      %5540 = vmatpush2.bf16.msra.mxu0 0
      %5541 = vmatprep.subr.bf16.mxu0 0
      %5542 = vmatpush2.bf16.msra.mxu0 0
      %5543 = vmatprep.subr.bf16.mxu0 0
      %5544 = vmatpush2.bf16.msra.mxu0 0
      %5545 = vmatprep.subr.bf16.mxu0 0
      %5546 = vmatpush2.bf16.msra.mxu0 0
      %5547 = vmatprep.subr.bf16.mxu0 0
      %5548 = vmatpush2.bf16.msra.mxu0 0
      %5549 = vmatprep.subr.bf16.mxu0 0
      %5550 = vmatpush2.bf16.msra.mxu0 0
      %5551 = vmatprep.mubr.bf16.mxu0 0
      %5552 = vmatmul.mubr.bf16.gmra.mxu0 %v3658
      %v5553 = vpop.f32.mrf.mxu0
      %v5554 = vadd.f32 0.0, %v5553
      %v5555 = vpop.f32.mrf.mxu0
      %v5556 = vpop.f32.mrf.mxu0
      %v5557 = vadd.f32 0.0, %v5556
      %v5558 = vpop.f32.mrf.mxu0
      %5559 = vmatprep.mubr.bf16.mxu0 0
      %5560 = vmatmul.mubr.bf16.gmra.mxu0 %v3666
      %v5561 = vpop.f32.mrf.mxu0
      %v5562 = vadd.f32 0.0, %v5561
      %v5563 = vpop.f32.mrf.mxu0
      %v5564 = vpop.f32.mrf.mxu0
      %v5565 = vadd.f32 0.0, %v5564
      %v5566 = vpop.f32.mrf.mxu0
      %5567 = vmatprep.mubr.bf16.mxu0 0
      %5568 = vmatmul.mubr.bf16.gmra.mxu0 %v3674
      %v5569 = vpop.f32.mrf.mxu0
      %v5570 = vadd.f32 0.0, %v5569
      %v5571 = vpop.f32.mrf.mxu0
      %v5572 = vpop.f32.mrf.mxu0
      %v5573 = vadd.f32 0.0, %v5572
      %v5574 = vpop.f32.mrf.mxu0
      %5575 = vmatprep.mubr.bf16.mxu0 0
      %5576 = vmatmul.mubr.bf16.gmra.mxu0 %v3682
      %v5577 = vpop.f32.mrf.mxu0
      %v5578 = vadd.f32 0.0, %v5577
      %v5579 = vpop.f32.mrf.mxu0
      %v5580 = vpop.f32.mrf.mxu0
      %v5581 = vadd.f32 0.0, %v5580
      %v5582 = vpop.f32.mrf.mxu0
      %5583 = vmatprep.mubr.bf16.mxu0 0
      %5584 = vmatmul.mubr.bf16.gmra.mxu0 %v3690
      %v5585 = vpop.f32.mrf.mxu0
      %v5586 = vadd.f32 0.0, %v5585
      %v5587 = vpop.f32.mrf.mxu0
      %v5588 = vpop.f32.mrf.mxu0
      %v5589 = vadd.f32 0.0, %v5588
      %v5590 = vpop.f32.mrf.mxu0
      %5591 = vmatprep.mubr.bf16.mxu0 0
      %5592 = vmatmul.mubr.bf16.gmra.mxu0 %v3698
      %v5593 = vpop.f32.mrf.mxu0
      %v5594 = vadd.f32 0.0, %v5593
      %v5595 = vpop.f32.mrf.mxu0
      %v5596 = vpop.f32.mrf.mxu0
      %v5597 = vadd.f32 0.0, %v5596
      %v5598 = vpop.f32.mrf.mxu0
      %5599 = vmatprep.mubr.bf16.mxu0 0
      %5600 = vmatmul.mubr.bf16.gmra.mxu0 %v3706
      %v5601 = vpop.f32.mrf.mxu0
      %v5602 = vadd.f32 0.0, %v5601
      %v5603 = vpop.f32.mrf.mxu0
      %v5604 = vpop.f32.mrf.mxu0
      %v5605 = vadd.f32 0.0, %v5604
      %v5606 = vpop.f32.mrf.mxu0
      %5607 = vmatprep.mubr.bf16.mxu0 0
      %5608 = vmatmul.mubr.bf16.gmra.mxu0 %v3714
      %v5609 = vpop.f32.mrf.mxu0
      %v5610 = vadd.f32 0.0, %v5609
      %v5611 = vpop.f32.mrf.mxu0
      %v5612 = vpop.f32.mrf.mxu0
      %v5613 = vadd.f32 0.0, %v5612
      %v5614 = vpop.f32.mrf.mxu0
      %5615 = vmatprep.mubr.bf16.mxu0 0
      %5616 = vmatmul.mubr.bf16.gmra.mxu0 %v5442
      %v5617 = vpop.f32.mrf.mxu0
      %v5618 = vadd.f32 0.0, %v5617
      %v5619 = vpop.f32.mrf.mxu0
      %v5620 = vpop.f32.mrf.mxu0
      %v5621 = vadd.f32 0.0, %v5620
      %v5622 = vpop.f32.mrf.mxu0
      %5623 = vmatprep.mubr.bf16.mxu0 0
      %5624 = vmatmul.mubr.bf16.gmra.mxu0 %v5450
      %v5625 = vpop.f32.mrf.mxu0
      %v5626 = vadd.f32 0.0, %v5625
      %v5627 = vpop.f32.mrf.mxu0
      %v5628 = vpop.f32.mrf.mxu0
      %v5629 = vadd.f32 0.0, %v5628
      %v5630 = vpop.f32.mrf.mxu0
      %5631 = vmatprep.mubr.bf16.mxu0 0
      %5632 = vmatmul.mubr.bf16.gmra.mxu0 %v5458
      %v5633 = vpop.f32.mrf.mxu0
      %v5634 = vadd.f32 0.0, %v5633
      %v5635 = vpop.f32.mrf.mxu0
      %v5636 = vpop.f32.mrf.mxu0
      %v5637 = vadd.f32 0.0, %v5636
      %v5638 = vpop.f32.mrf.mxu0
      %5639 = vmatprep.mubr.bf16.mxu0 0
      %5640 = vmatmul.mubr.bf16.gmra.mxu0 %v5466
      %v5641 = vpop.f32.mrf.mxu0
      %v5642 = vadd.f32 0.0, %v5641
      %v5643 = vpop.f32.mrf.mxu0
      %v5644 = vpop.f32.mrf.mxu0
      %v5645 = vadd.f32 0.0, %v5644
      %v5646 = vpop.f32.mrf.mxu0
      %5647 = vdwg.mxu0
      %v5648 = vadd.f32 %v5394, %v5554
      %v5649 = vadd.f32 %v5395, %v5557
      %v5650 = vadd.f32 %v5396, %v5562
      %v5651 = vadd.f32 %v5397, %v5565
      %v5652 = vadd.f32 %v5398, %v5570
      %v5653 = vadd.f32 %v5399, %v5573
      %v5654 = vadd.f32 %v5400, %v5578
      %v5655 = vadd.f32 %v5401, %v5581
      %v5656 = vadd.f32 %v5402, %v5586
      %v5657 = vadd.f32 %v5403, %v5589
      %v5658 = vadd.f32 %v5404, %v5594
      %v5659 = vadd.f32 %v5405, %v5597
      %v5660 = vadd.f32 %v5406, %v5602
      %v5661 = vadd.f32 %v5407, %v5605
      %v5662 = vadd.f32 %v5408, %v5610
      %v5663 = vadd.f32 %v5409, %v5613
      %v5664 = vadd.f32 %v5410, %v5618
      %v5665 = vadd.f32 %v5411, %v5621
      %v5666 = vadd.f32 %v5412, %v5626
      %v5667 = vadd.f32 %v5413, %v5629
      %v5668 = vadd.f32 %v5414, %v5634
      %v5669 = vadd.f32 %v5415, %v5637
      %v5670 = vadd.f32 %v5416, %v5642
      %v5671 = vadd.f32 %v5417, %v5645
      %s5672 = scalar_lea.vmem %s3, 512
      %v5673 = vld [vmem:[%s5672] sm:$0xf]
      %v5674 = vld [vmem:[%s5672 + $0x4] sm:$0xf]
      %v5675 = vld [vmem:[%s5672 + $0x8] sm:$0xf]
      %v5676 = vld [vmem:[%s5672 + $0xc] sm:$0xf]
      %v5677 = vld [vmem:[%s5672 + $0x10] sm:$0xf]
      %v5678 = vld [vmem:[%s5672 + $0x14] sm:$0xf]
      %v5679 = vld [vmem:[%s5672 + $0x18] sm:$0xf]
      %v5680 = vld [vmem:[%s5672 + $0x1c] sm:$0xf]
      %v5681 = vld [vmem:[%s5672 + $0x20] sm:$0xf]
      %v5682 = vld [vmem:[%s5672 + $0x24] sm:$0xf]
      %v5683 = vld [vmem:[%s5672 + $0x28] sm:$0xf]
      %v5684 = vld [vmem:[%s5672 + $0x2c] sm:$0xf]
      %v5685 = vld [vmem:[%s5672 + $0x30] sm:$0xf]
      %v5686 = vld [vmem:[%s5672 + $0x34] sm:$0xf]
      %v5687 = vld [vmem:[%s5672 + $0x38] sm:$0xf]
      %v5688 = vld [vmem:[%s5672 + $0x3c] sm:$0xf]
      %v5689 = vrot.slane %v5211, 1
      %v5690 = vsel %vm1022, %v4139, %v5689
      %v5691 = vrot.slane %v5212, 1
      %v5692 = vsel %vm1022, %v5689, %v5691
      %v5693 = vrot.slane %v5213, 1
      %v5694 = vsel %vm1022, %v5691, %v5693
      %v5695 = vrot.slane %v5437, 1
      %v5696 = vsel %vm1022, %v5693, %v5695
      %v5717 = vunpack.c.l.b16 %v5673
      %v5718 = vunpack.c.l.b16 %v5674
      %v5719 = vunpack.c.l.b16 %v5675
      %v5720 = vunpack.c.l.b16 %v5676
      %v5721 = vunpack.c.l.b16 %v5677
      %v5722 = vunpack.c.l.b16 %v5678
      %v5723 = vunpack.c.l.b16 %v5679
      %v5724 = vunpack.c.l.b16 %v5680
      %v5725 = vunpack.c.l.b16 %v5681
      %v5726 = vunpack.c.l.b16 %v5682
      %v5727 = vunpack.c.l.b16 %v5683
      %v5728 = vunpack.c.l.b16 %v5684
      %v5729 = vunpack.c.l.b16 %v5685
      %v5730 = vunpack.c.l.b16 %v5686
      %v5731 = vunpack.c.l.b16 %v5687
      %v5732 = vunpack.c.l.b16 %v5688
      %v5733 = vpack.c.b16 %v5718, %v5717
      %v5734 = vpack.c.b16 %v5720, %v5719
      %v5735 = vpack.c.b16 %v5722, %v5721
      %v5736 = vpack.c.b16 %v5724, %v5723
      %v5737 = vpack.c.b16 %v5726, %v5725
      %v5738 = vpack.c.b16 %v5728, %v5727
      %v5739 = vpack.c.b16 %v5730, %v5729
      %v5740 = vpack.c.b16 %v5732, %v5731
      %5749 = vmatprep.subr.bf16.mxu0 0
      %5750 = vmatpush1.bf16.msra.mxu0 %v5740
      %5751 = vmatprep.subr.bf16.mxu0 0
      %5752 = vmatpush1.bf16.msra.mxu0 %v5739
      %5753 = vmatprep.subr.bf16.mxu0 0
      %5754 = vmatpush1.bf16.msra.mxu0 %v5738
      %5755 = vmatprep.subr.bf16.mxu0 0
      %5756 = vmatpush1.bf16.msra.mxu0 %v5737
      %5757 = vmatprep.subr.bf16.mxu0 0
      %5758 = vmatpush1.bf16.msra.mxu0 %v5736
      %5759 = vmatprep.subr.bf16.mxu0 0
      %5760 = vmatpush1.bf16.msra.mxu0 %v5735
      %5761 = vmatprep.subr.bf16.mxu0 0
      %5762 = vmatpush1.bf16.msra.mxu0 %v5734
      %5763 = vmatprep.subr.bf16.mxu0 0
      %5764 = vmatpush1.bf16.msra.mxu0 %v5733
      %5765 = vmatprep.subr.bf16.mxu0 0
      %5766 = vmatpush2.bf16.msra.mxu0 0
      %5767 = vmatprep.subr.bf16.mxu0 0
      %5768 = vmatpush2.bf16.msra.mxu0 0
      %5769 = vmatprep.subr.bf16.mxu0 0
      %5770 = vmatpush2.bf16.msra.mxu0 0
      %5771 = vmatprep.subr.bf16.mxu0 0
      %5772 = vmatpush2.bf16.msra.mxu0 0
      %5773 = vmatprep.subr.bf16.mxu0 0
      %5774 = vmatpush2.bf16.msra.mxu0 0
      %5775 = vmatprep.subr.bf16.mxu0 0
      %5776 = vmatpush2.bf16.msra.mxu0 0
      %5777 = vmatprep.subr.bf16.mxu0 0
      %5778 = vmatpush2.bf16.msra.mxu0 0
      %5779 = vmatprep.subr.bf16.mxu0 0
      %5780 = vmatpush2.bf16.msra.mxu0 0
      %5781 = vmatprep.mubr.bf16.mxu0 0
      %5782 = vmatmul.mubr.bf16.gmra.mxu0 %v4126
      %v5783 = vpop.f32.mrf.mxu0
      %v5784 = vadd.f32 0.0, %v5783
      %v5785 = vpop.f32.mrf.mxu0
      %v5786 = vpop.f32.mrf.mxu0
      %v5787 = vadd.f32 0.0, %v5786
      %v5788 = vpop.f32.mrf.mxu0
      %5789 = vmatprep.mubr.bf16.mxu0 0
      %5790 = vmatmul.mubr.bf16.gmra.mxu0 %v4128
      %v5791 = vpop.f32.mrf.mxu0
      %v5792 = vadd.f32 0.0, %v5791
      %v5793 = vpop.f32.mrf.mxu0
      %v5794 = vpop.f32.mrf.mxu0
      %v5795 = vadd.f32 0.0, %v5794
      %v5796 = vpop.f32.mrf.mxu0
      %5797 = vmatprep.mubr.bf16.mxu0 0
      %5798 = vmatmul.mubr.bf16.gmra.mxu0 %v4130
      %v5799 = vpop.f32.mrf.mxu0
      %v5800 = vadd.f32 0.0, %v5799
      %v5801 = vpop.f32.mrf.mxu0
      %v5802 = vpop.f32.mrf.mxu0
      %v5803 = vadd.f32 0.0, %v5802
      %v5804 = vpop.f32.mrf.mxu0
      %5805 = vmatprep.mubr.bf16.mxu0 0
      %5806 = vmatmul.mubr.bf16.gmra.mxu0 %v4132
      %v5807 = vpop.f32.mrf.mxu0
      %v5808 = vadd.f32 0.0, %v5807
      %v5809 = vpop.f32.mrf.mxu0
      %v5810 = vpop.f32.mrf.mxu0
      %v5811 = vadd.f32 0.0, %v5810
      %v5812 = vpop.f32.mrf.mxu0
      %5813 = vmatprep.mubr.bf16.mxu0 0
      %5814 = vmatmul.mubr.bf16.gmra.mxu0 %v4134
      %v5815 = vpop.f32.mrf.mxu0
      %v5816 = vadd.f32 0.0, %v5815
      %v5817 = vpop.f32.mrf.mxu0
      %v5818 = vpop.f32.mrf.mxu0
      %v5819 = vadd.f32 0.0, %v5818
      %v5820 = vpop.f32.mrf.mxu0
      %5821 = vmatprep.mubr.bf16.mxu0 0
      %5822 = vmatmul.mubr.bf16.gmra.mxu0 %v4136
      %v5823 = vpop.f32.mrf.mxu0
      %v5824 = vadd.f32 0.0, %v5823
      %v5825 = vpop.f32.mrf.mxu0
      %v5826 = vpop.f32.mrf.mxu0
      %v5827 = vadd.f32 0.0, %v5826
      %v5828 = vpop.f32.mrf.mxu0
      %5829 = vmatprep.mubr.bf16.mxu0 0
      %5830 = vmatmul.mubr.bf16.gmra.mxu0 %v4138
      %v5831 = vpop.f32.mrf.mxu0
      %v5832 = vadd.f32 0.0, %v5831
      %v5833 = vpop.f32.mrf.mxu0
      %v5834 = vpop.f32.mrf.mxu0
      %v5835 = vadd.f32 0.0, %v5834
      %v5836 = vpop.f32.mrf.mxu0
      %5837 = vmatprep.mubr.bf16.mxu0 0
      %5838 = vmatmul.mubr.bf16.gmra.mxu0 %v4140
      %v5839 = vpop.f32.mrf.mxu0
      %v5840 = vadd.f32 0.0, %v5839
      %v5841 = vpop.f32.mrf.mxu0
      %v5842 = vpop.f32.mrf.mxu0
      %v5843 = vadd.f32 0.0, %v5842
      %v5844 = vpop.f32.mrf.mxu0
      %5845 = vmatprep.mubr.bf16.mxu0 0
      %5846 = vmatmul.mubr.bf16.gmra.mxu0 %v5690
      %v5847 = vpop.f32.mrf.mxu0
      %v5848 = vadd.f32 0.0, %v5847
      %v5849 = vpop.f32.mrf.mxu0
      %v5850 = vpop.f32.mrf.mxu0
      %v5851 = vadd.f32 0.0, %v5850
      %v5852 = vpop.f32.mrf.mxu0
      %5853 = vmatprep.mubr.bf16.mxu0 0
      %5854 = vmatmul.mubr.bf16.gmra.mxu0 %v5692
      %v5855 = vpop.f32.mrf.mxu0
      %v5856 = vadd.f32 0.0, %v5855
      %v5857 = vpop.f32.mrf.mxu0
      %v5858 = vpop.f32.mrf.mxu0
      %v5859 = vadd.f32 0.0, %v5858
      %v5860 = vpop.f32.mrf.mxu0
      %5861 = vmatprep.mubr.bf16.mxu0 0
      %5862 = vmatmul.mubr.bf16.gmra.mxu0 %v5694
      %v5863 = vpop.f32.mrf.mxu0
      %v5864 = vadd.f32 0.0, %v5863
      %v5865 = vpop.f32.mrf.mxu0
      %v5866 = vpop.f32.mrf.mxu0
      %v5867 = vadd.f32 0.0, %v5866
      %v5868 = vpop.f32.mrf.mxu0
      %5869 = vmatprep.mubr.bf16.mxu0 0
      %5870 = vmatmul.mubr.bf16.gmra.mxu0 %v5696
      %v5871 = vpop.f32.mrf.mxu0
      %v5872 = vadd.f32 0.0, %v5871
      %v5873 = vpop.f32.mrf.mxu0
      %v5874 = vpop.f32.mrf.mxu0
      %v5875 = vadd.f32 0.0, %v5874
      %v5876 = vpop.f32.mrf.mxu0
      %5877 = vdwg.mxu0
      %v5878 = vadd.f32 %v5648, %v5784
      %v5879 = vadd.f32 %v5649, %v5787
      %v5880 = vadd.f32 %v5650, %v5792
      %v5881 = vadd.f32 %v5651, %v5795
      %v5882 = vadd.f32 %v5652, %v5800
      %v5883 = vadd.f32 %v5653, %v5803
      %v5884 = vadd.f32 %v5654, %v5808
      %v5885 = vadd.f32 %v5655, %v5811
      %v5886 = vadd.f32 %v5656, %v5816
      %v5887 = vadd.f32 %v5657, %v5819
      %v5888 = vadd.f32 %v5658, %v5824
      %v5889 = vadd.f32 %v5659, %v5827
      %v5890 = vadd.f32 %v5660, %v5832
      %v5891 = vadd.f32 %v5661, %v5835
      %v5892 = vadd.f32 %v5662, %v5840
      %v5893 = vadd.f32 %v5663, %v5843
      %v5894 = vadd.f32 %v5664, %v5848
      %v5895 = vadd.f32 %v5665, %v5851
      %v5896 = vadd.f32 %v5666, %v5856
      %v5897 = vadd.f32 %v5667, %v5859
      %v5898 = vadd.f32 %v5668, %v5864
      %v5899 = vadd.f32 %v5669, %v5867
      %v5900 = vadd.f32 %v5670, %v5872
      %v5901 = vadd.f32 %v5671, %v5875
      %v5902 = vld [vmem:[%s4] sm:$0x1]
      %v5904 = vlaneseq
      %v5905 = vshrl.u32 %v5904, 7
      %v5906 = vsub.s32 0, %v5905
      %v5907 = vrot.slane %v5902, %v5906
      %v5909 = vadd.f32 %v5878, %v5907
      %v5910 = vadd.f32 %v5879, %v5907
      %v5911 = vadd.f32 %v5880, %v5907
      %v5912 = vadd.f32 %v5881, %v5907
      %v5913 = vadd.f32 %v5882, %v5907
      %v5914 = vadd.f32 %v5883, %v5907
      %v5915 = vadd.f32 %v5884, %v5907
      %v5916 = vadd.f32 %v5885, %v5907
      %v5917 = vadd.f32 %v5886, %v5907
      %v5918 = vadd.f32 %v5887, %v5907
      %v5919 = vadd.f32 %v5888, %v5907
      %v5920 = vadd.f32 %v5889, %v5907
      %v5921 = vadd.f32 %v5890, %v5907
      %v5922 = vadd.f32 %v5891, %v5907
      %v5923 = vadd.f32 %v5892, %v5907
      %v5924 = vadd.f32 %v5893, %v5907
      %v5925 = vadd.f32 %v5894, %v5907
      %v5926 = vadd.f32 %v5895, %v5907
      %v5927 = vadd.f32 %v5896, %v5907
      %v5928 = vadd.f32 %v5897, %v5907
      %v5929 = vadd.f32 %v5898, %v5907
      %v5930 = vadd.f32 %v5899, %v5907
      %v5931 = vadd.f32 %v5900, %v5907
      %v5932 = vadd.f32 %v5901, %v5907
      %v5933 = vmax.f32 %v5909, 0.0
      %v5934 = vmax.f32 %v5910, 0.0
      %v5935 = vmax.f32 %v5911, 0.0
      %v5936 = vmax.f32 %v5912, 0.0
      %v5937 = vmax.f32 %v5913, 0.0
      %v5938 = vmax.f32 %v5914, 0.0
      %v5939 = vmax.f32 %v5915, 0.0
      %v5940 = vmax.f32 %v5916, 0.0
      %v5941 = vmax.f32 %v5917, 0.0
      %v5942 = vmax.f32 %v5918, 0.0
      %v5943 = vmax.f32 %v5919, 0.0
      %v5944 = vmax.f32 %v5920, 0.0
      %v5945 = vmax.f32 %v5921, 0.0
      %v5946 = vmax.f32 %v5922, 0.0
      %v5947 = vmax.f32 %v5923, 0.0
      %v5948 = vmax.f32 %v5924, 0.0
      %v5949 = vmax.f32 %v5925, 0.0
      %v5950 = vmax.f32 %v5926, 0.0
      %v5951 = vmax.f32 %v5927, 0.0
      %v5952 = vmax.f32 %v5928, 0.0
      %v5953 = vmax.f32 %v5929, 0.0
      %v5954 = vmax.f32 %v5930, 0.0
      %v5955 = vmax.f32 %v5931, 0.0
      %v5956 = vmax.f32 %v5932, 0.0
      %5957 = vst [vmem:[%s293] sm:$0xff] %v5933
      %5958 = vst [vmem:[%s293 + $0x8] sm:$0xff] %v5934
      %5959 = vst [vmem:[%s293 + $0x10] sm:$0xff] %v5935
      %5960 = vst [vmem:[%s293 + $0x18] sm:$0xff] %v5936
      %5961 = vst [vmem:[%s293 + $0x20] sm:$0xff] %v5937
      %5962 = vst [vmem:[%s293 + $0x28] sm:$0xff] %v5938
      %5963 = vst [vmem:[%s293 + $0x30] sm:$0xff] %v5939
      %5964 = vst [vmem:[%s293 + $0x38] sm:$0xff] %v5940
      %5965 = vst [vmem:[%s293 + $0x40] sm:$0xff] %v5941
      %5966 = vst [vmem:[%s293 + $0x48] sm:$0xff] %v5942
      %5967 = vst [vmem:[%s293 + $0x50] sm:$0xff] %v5943
      %5968 = vst [vmem:[%s293 + $0x58] sm:$0xff] %v5944
      %5969 = vst [vmem:[%s293 + $0x60] sm:$0xff] %v5945
      %5970 = vst [vmem:[%s293 + $0x68] sm:$0xff] %v5946
      %5971 = vst [vmem:[%s293 + $0x70] sm:$0xff] %v5947
      %5972 = vst [vmem:[%s293 + $0x78] sm:$0xff] %v5948
      %5973 = vst [vmem:[%s293 + $0x80] sm:$0xff] %v5949
      %5974 = vst [vmem:[%s293 + $0x88] sm:$0xff] %v5950
      %5975 = vst [vmem:[%s293 + $0x90] sm:$0xff] %v5951
      %5976 = vst [vmem:[%s293 + $0x98] sm:$0xff] %v5952
      %5977 = vst [vmem:[%s293 + $0xa0] sm:$0xff] %v5953
      %5978 = vst [vmem:[%s293 + $0xa8] sm:$0xff] %v5954
      %5979 = vst [vmem:[%s293 + $0xb0] sm:$0xff] %v5955
      %5980 = vst [vmem:[%s293 + $0xb8] sm:$0xff] %v5956
      %p5981 = scmp.lt.s32.totalorder %s21, 1
      %s5982 = scalar_select %p5981, %s21, 1
      %p5983 = scmp.lt.s32.totalorder %s22, 1
      %s5984 = scalar_select %p5983, %s22, 1
      %s5985 = smul.addr %s5984, 24
      %s5986 = smul.addr %s5982, 48
      %s5987 = sadd.s32 %s5985, %s5986
      %s5988 = smul.addr %s5987, 8
      %s5989 = scalar_lea.vmem %s6, %s5988
      // Predicated region
      $region45: #{double_conv.1} parent=43 // pred_check
        %p5990 = pneg %p185
      $region46: #{double_conv.1} parent=43 // pred_check_branch
        %5992 = sbr.rel (%p5990) target = $region48
      $region47: #{double_conv.1} parent=43 // pred_region
        _
      $region48: #{double_conv.1} parent=43 // pred_fallthru
        _
    $region44: #{double_conv.1} parent=5 // pred_fallthru
      _
    %p5993 = scmp.le.s32.totalorder 2, %s12
    // Predicated region
    $region49: #{double_conv.1} parent=5 // pred_check
      %p5994 = pneg %p5993
    $region50: #{double_conv.1} parent=5 // pred_check_branch
      %5996 = sbr.rel (%p5994) target = $region52
    $region51: #{double_conv.1} parent=5 // pred_region
      %s5997 = ssub.s32 %s12, 2
      // Predicated region
      $region53: #{double_conv.1} parent=51 // pred_check
        %p5998 = pneg %p191
      $region54: #{double_conv.1} parent=51 // pred_check_branch
        %6000 = sbr.rel (%p5998) target = $region56
      $region55: #{double_conv.1} parent=51 // pred_region
        %p6001 = scmp.lt.s32.totalorder %s23, 1
        %s6002 = scalar_select %p6001, %s23, 1
        %p6003 = scmp.lt.s32.totalorder %s24, 1
        %s6004 = scalar_select %p6003, %s24, 1
        %s6005 = smul.addr %s6004, 24
        %s6006 = smul.addr %s6002, 48
        %s6007 = sadd.s32 %s6005, %s6006
        %s6008 = smul.addr %s6007, 8
        %s6009 = scalar_lea.vmem %s6, %s6008
      $region56: #{double_conv.1} parent=51 // pred_fallthru
        _
    $region52: #{double_conv.1} parent=5 // pred_fallthru
      _
  $region6: #{double_conv.1} parent=0 // loop_footer
    %s16 = sadd.s32 1, %s12
  $region7: #{double_conv.1} parent=0 // loop_footer_branch
    %11 = sbr.rel target = $region3
  $region8: #{double_conv.1} parent=0 // loop_exit
    _

</llo_original>
